<compile_context>
chip_gen: v5e
topology: v5e:2x2
jax: 0.10.0
libtpu: 0.0.40
codegen_flags: <defaults>
</compile_context>

<pallas_src>
import functools

import jax
import jax.numpy as jnp
from jax.experimental import pallas as pl
from jax.experimental.pallas import tpu as pltpu

_COMPUTE_DTYPE = jnp.bfloat16  # MXU-native; f32 accumulation keeps the loss stable.


def _round_up(x, m):
    return (x + m - 1) // m * m


def _pick_tm(m):
    """Lane tile over M = B*H*W: multiple of 128 (lane-dense stores), biggest
    tile that still leaves >= 2 grid steps so the DMA pipeline has work to
    hide.  Double-buffered bf16 tiles at 2048 stay well under 32 MiB VMEM."""
    for cand in (2048, 1024, 512, 256, 128):
        if m >= 2 * cand:
            return cand
    return 128


# ----------------------------------------------------------------------------
# Fused Pallas kernel: one encoder block, prediction + target + SSE together.
# ----------------------------------------------------------------------------
def _fused_block_kernel(pp_ref, tp_ref, w_ref, b_ref, *refs, emit_features):
    """One encoder block for both inputs.

    pp_ref : (KKC, TM) im2col patches of the prediction activation (bf16)
    tp_ref : (KKC, TM) im2col patches of the target activation (bf16)
    w_ref  : (Cout, KKC) conv weight, (kh,kw,cin)-major contraction dim (bf16)
    b_ref  : (Cout, 1)  bias (f32)
    outputs: [op_ref, ot_ref] (Cout, TM) bf16 relu'd features (if emit_features)
             sse_ref (1, 1) f32 in SMEM = sum((conv(pred)-conv(targ))^2)
    scratch: acc_ref (1, TM) f32 per-lane partial SSE, resident across the grid.
    """
    if emit_features:
        op_ref, ot_ref, sse_ref, acc_ref = refs
    else:
        sse_ref, acc_ref = refs

    @pl.when(pl.program_id(0) == 0)
    def _init():
        acc_ref[...] = jnp.zeros_like(acc_ref)

    w = w_ref[...]                                   # (Cout, KKC) bf16
    b = b_ref[...]                                   # (Cout, 1)   f32
    zp = jnp.dot(w, pp_ref[...], preferred_element_type=jnp.float32) + b
    zt = jnp.dot(w, tp_ref[...], preferred_element_type=jnp.float32) + b

    d = zp - zt                                      # pre-activation difference
    acc_ref[...] += jnp.sum(d * d, axis=0, keepdims=True)   # per-lane partials

    if emit_features:
        op_ref[...] = jnp.maximum(zp, 0.0).astype(op_ref.dtype)
        ot_ref[...] = jnp.maximum(zt, 0.0).astype(ot_ref.dtype)

    @pl.when(pl.program_id(0) == pl.num_programs(0) - 1)
    def _finalize():
        sse_ref[0, 0] = jnp.sum(acc_ref[...])


def _fused_block(pred_pat, targ_pat, w_t, b_col, *, emit_features):
    """pallas_call wrapper for one encoder block (both inputs fused)."""
    kkc, m = pred_pat.shape
    cout = w_t.shape[0]
    tm = _pick_tm(m)
    m_pad = _round_up(m, tm)
    if m_pad != m:
        # Zero patch columns give conv == bias for BOTH inputs -> zero SSE.
        pad = ((0, 0), (0, m_pad - m))
        pred_pat = jnp.pad(pred_pat, pad)
        targ_pat = jnp.pad(targ_pat, pad)
    grid = (m_pad // tm,)

    in_specs = [
        pl.BlockSpec((kkc, tm), lambda i: (0, i)),
        pl.BlockSpec((kkc, tm), lambda i: (0, i)),
        pl.BlockSpec((cout, kkc), lambda i: (0, 0)),   # weights stay resident
        pl.BlockSpec((cout, 1), lambda i: (0, 0)),
    ]
    sse_spec = pl.BlockSpec((1, 1), lambda i: (0, 0),
                            memory_space=pltpu.MemorySpace.SMEM)
    sse_shape = jax.ShapeDtypeStruct((1, 1), jnp.float32)
    if emit_features:
        out_specs = (
            pl.BlockSpec((cout, tm), lambda i: (0, i)),
            pl.BlockSpec((cout, tm), lambda i: (0, i)),
            sse_spec,
        )
        out_shape = (
            jax.ShapeDtypeStruct((cout, m_pad), _COMPUTE_DTYPE),
            jax.ShapeDtypeStruct((cout, m_pad), _COMPUTE_DTYPE),
            sse_shape,
        )
    else:
        out_specs = (sse_spec,)
        out_shape = (sse_shape,)

    flops = 2 * (2 * m_pad * kkc * cout)                       # two matmuls
    bytes_accessed = ((pred_pat.size + targ_pat.size + w_t.size) * 2
                      + b_col.size * 4 + 4
                      + (2 * cout * m_pad * 2 if emit_features else 0))

    results = pl.pallas_call(
        functools.partial(_fused_block_kernel, emit_features=emit_features),
        grid=grid,
        in_specs=in_specs,
        out_specs=out_specs,
        out_shape=out_shape,
        scratch_shapes=[pltpu.VMEM((1, tm), jnp.float32)],
        compiler_params=pltpu.CompilerParams(
            # The SSE accumulator is resident across the M axis -> "arbitrary".
            # (Per-core partial SSEs would be needed to mark it "parallel".)
            dimension_semantics=("arbitrary",),
            vmem_limit_bytes=32 * 1024 * 1024,
        ),
        cost_estimate=pl.CostEstimate(
            flops=flops, transcendentals=0, bytes_accessed=bytes_accessed),
    )(pred_pat, targ_pat, w_t, b_col)

    if emit_features:
        relu_p, relu_t, sse = results
        return relu_p[:, :m], relu_t[:, :m], sse[0, 0]
    (sse,) = results
    return None, None, sse[0, 0]


# ----------------------------------------------------------------------------
# Glue: channels-major im2col + weight prep
# ----------------------------------------------------------------------------
def _im2col_cmajor(x_cbhw, k=3, pad=1):
    """(C, B, H, W) -> (k*k*C, B*H*W) stride-1 'same' patches.

    Row ordering is (kh, kw, cin)-major, matching the weight flattening below.
    # TODO(synk): replace this XLA-side im2col (9x activation-read inflation)
    # with in-kernel patch construction from a halo-tiled (C, rows, W) block.
    """
    c, b, h, w = x_cbhw.shape
    xp = jnp.pad(x_cbhw, ((0, 0), (0, 0), (pad, pad), (pad, pad)))
    cols = []
    for di in range(k):
        for dj in range(k):
            cols.append(xp[:, :, di:di + h, dj:dj + w].reshape(c, b * h * w))
    return jnp.concatenate(cols, axis=0)


# Synthetic DAE encoder (deterministic stand-in for the pretrained checkpoint).
_ENCODER_CHANNELS = [(1, 8), (8, 8), (8, 16), (16, 16), (16, 32)]


def make_encoder_params(key):
    params = []
    for i, (cin, cout) in enumerate(_ENCODER_CHANNELS):
        kw_, kb_ = jax.random.split(jax.random.fold_in(key, i))
        fan_in = cin * 9
        w = jax.random.normal(kw_, (cout, cin, 3, 3), jnp.float32) / jnp.sqrt(fan_in)
        b = 0.01 * jax.random.normal(kb_, (cout,), jnp.float32)
        params.append((w, b))
    return params


def _prepare_mats(params):
    """Hoisted once per loss call; shared by prediction and target."""
    mats = []
    for w, b in params:
        cout, cin, kh, kw = w.shape
        w_t = jnp.transpose(w, (0, 2, 3, 1)).reshape(cout, kh * kw * cin)
        mats.append((w_t.astype(_COMPUTE_DTYPE),
                     b.reshape(cout, 1).astype(jnp.float32)))
    return mats


# ----------------------------------------------------------------------------
# Loss (equivalent of FeatureReconstructionLoss.forward)
# ----------------------------------------------------------------------------
def feature_reconstruction_loss(prediction_nchw, target_nchw, params,
                                layers=(0, 1, 2, 3, 4)):
    """Returns shape (1,) float32 (nn.MSELoss mean reduction per sub-net)."""
    b, c, h, w = prediction_nchw.shape
    m = b * h * w
    mats = _prepare_mats(params)

    # channels-major layout (C, B, H, W): the big B*H*W axis stays the lane
    # axis of every Pallas tile for the whole chain.
    pred = jnp.transpose(prediction_nchw, (1, 0, 2, 3)).astype(_COMPUTE_DTYPE)
    targ = jnp.transpose(target_nchw, (1, 0, 2, 3)).astype(_COMPUTE_DTYPE)

    max_layer = max(layers)
    layer_set = frozenset(layers)
    total = jnp.float32(0.0)
    for l in range(max_layer + 1):
        w_t, b_col = mats[l]
        cout = w_t.shape[0]
        pp = _im2col_cmajor(pred)
        tp = _im2col_cmajor(targ)
        emit = l < max_layer                    # last block's relu is never used
        relu_p, relu_t, sse = _fused_block(pp, tp, w_t, b_col, emit_features=emit)
        if l in layer_set:
            total = total + sse / jnp.float32(cout * m)   # MSE mean reduction
        if emit:
            pred = relu_p.reshape(cout, b, h, w)
            targ = relu_t.reshape(cout, b, h, w)
    return total.reshape(1)


# ----------------------------------------------------------------------------
if __name__ == "__main__":
    key = jax.random.PRNGKey(0)
    k_pred, k_targ, k_par = jax.random.split(key, 3)

    B, C, H, W = 2, 1, 16, 16           # Hi-C contact maps: 1 channel, NCHW
    prediction = jax.random.normal(k_pred, (B, C, H, W), jnp.float32)
    target = jax.random.normal(k_targ, (B, C, H, W), jnp.float32)
    params = make_encoder_params(k_par)

    loss_fn = jax.jit(feature_reconstruction_loss)
    loss = loss_fn(prediction, target, params)
    jax.block_until_ready(loss)
    assert loss.shape == (1,) and bool(jnp.isfinite(loss[0]))
    print("KERNEL_OK")
</pallas_src>

<mosaic_0001>
module attributes {stable_mosaic.version = 11 : i64} {
  func.func @_fused_block_kernel(%arg0: i32, %arg1: memref<9x256xbf16, #tpu.memory_space<vmem>>, %arg2: memref<9x256xbf16, #tpu.memory_space<vmem>>, %arg3: memref<8x9xbf16, #tpu.memory_space<vmem>>, %arg4: memref<8x1xf32, #tpu.memory_space<vmem>>, %arg5: memref<8x256xbf16, #tpu.memory_space<vmem>>, %arg6: memref<8x256xbf16, #tpu.memory_space<vmem>>, %arg7: memref<1x1xf32, #tpu.memory_space<smem>>, %arg8: memref<1x256xf32, #tpu.memory_space<vmem>>) attributes {dimension_semantics = [#tpu.dimension_semantics<arbitrary>], iteration_bounds = array<i64: 2>, scalar_prefetch = 0 : i64, scratch_operands = 1 : i64, tpu.core_type = #tpu.core_type<tc>, window_params = [{transform_indices = @transform_0, window_bounds = array<i64: 9, 256>}, {transform_indices = @transform_1, window_bounds = array<i64: 9, 256>}, {pipeline_mode = #tpu.pipeline_mode<synchronous>, transform_indices = @transform_2, window_bounds = array<i64: 8, 9>}, {pipeline_mode = #tpu.pipeline_mode<synchronous>, transform_indices = @transform_3, window_bounds = array<i64: 8, 1>}, {transform_indices = @transform_4, window_bounds = array<i64: 8, 256>}, {transform_indices = @transform_5, window_bounds = array<i64: 8, 256>}, {transform_indices = @transform_6, window_bounds = array<i64: 1, 1>}]} {
    %c0_i32 = arith.constant 0 : i32
    %0 = arith.cmpi eq, %arg0, %c0_i32 : i32
    %1 = arith.extui %0 : i1 to i32
    %c0_i32_0 = arith.constant 0 : i32
    %2 = arith.cmpi ne, %1, %c0_i32_0 : i32
    scf.if %2 {
      %cst_21 = arith.constant 0.000000e+00 : f32
      %31 = vector.broadcast %cst_21 : f32 to vector<1x256xf32>
      %c0_22 = arith.constant 0 : index
      %c0_23 = arith.constant 0 : index
      %32 = vector.load %arg8[%c0_22, %c0_23] : memref<1x256xf32, #tpu.memory_space<vmem>>, vector<1x256xf32>
      tpu.vector_store %arg8[%c0_22, %c0_23], %31 {strides = array<i32>} : memref<1x256xf32, #tpu.memory_space<vmem>>, vector<1x256xf32>,
    } else {
    }
    %c0 = arith.constant 0 : index
    %c0_1 = arith.constant 0 : index
    %3 = vector.load %arg3[%c0, %c0_1] : memref<8x9xbf16, #tpu.memory_space<vmem>>, vector<8x9xbf16>
    %c0_2 = arith.constant 0 : index
    %c0_3 = arith.constant 0 : index
    %4 = vector.load %arg4[%c0_2, %c0_3] : memref<8x1xf32, #tpu.memory_space<vmem>>, vector<8x1xf32>
    %c0_4 = arith.constant 0 : index
    %c0_5 = arith.constant 0 : index
    %5 = vector.load %arg1[%c0_4, %c0_5] : memref<9x256xbf16, #tpu.memory_space<vmem>>, vector<9x256xbf16>
    %cst = arith.constant dense<0.000000e+00> : vector<8x256xf32>
    %6 = tpu.matmul %3, %5, %cst {dimension_numbers = #tpu.dot_dimension_numbers<[1], [0], [0], [1], [0, 0, 1, 1], [], []>} : vector<8x9xbf16>, vector<9x256xbf16>, vector<8x256xf32> -> vector<8x256xf32>
    %7 = vector.broadcast %4 : vector<8x1xf32> to vector<8x256xf32>
    %8 = arith.addf %6, %7 : vector<8x256xf32>
    %c0_6 = arith.constant 0 : index
    %c0_7 = arith.constant 0 : index
    %9 = vector.load %arg2[%c0_6, %c0_7] : memref<9x256xbf16, #tpu.memory_space<vmem>>, vector<9x256xbf16>
    %cst_8 = arith.constant dense<0.000000e+00> : vector<8x256xf32>
    %10 = tpu.matmul %3, %9, %cst_8 {dimension_numbers = #tpu.dot_dimension_numbers<[1], [0], [0], [1], [0, 0, 1, 1], [], []>} : vector<8x9xbf16>, vector<9x256xbf16>, vector<8x256xf32> -> vector<8x256xf32>
    %11 = vector.broadcast %4 : vector<8x1xf32> to vector<8x256xf32>
    %12 = arith.addf %10, %11 : vector<8x256xf32>
    %13 = arith.subf %8, %12 : vector<8x256xf32>
    %c0_9 = arith.constant 0 : index
    %c0_10 = arith.constant 0 : index
    %14 = vector.load %arg8[%c0_9, %c0_10] : memref<1x256xf32, #tpu.memory_space<vmem>>, vector<1x256xf32>
    %15 = arith.mulf %13, %13 : vector<8x256xf32>
    %cst_11 = arith.constant dense<0.000000e+00> : vector<256xf32>
    %16 = vector.multi_reduction <add>, %15, %cst_11 [0] : vector<8x256xf32> to vector<256xf32>
    %17 = vector.shape_cast %16 : vector<256xf32> to vector<1x256xf32>
    %18 = arith.addf %14, %17 : vector<1x256xf32>
    %c0_12 = arith.constant 0 : index
    %c0_13 = arith.constant 0 : index
    %19 = vector.load %arg8[%c0_12, %c0_13] : memref<1x256xf32, #tpu.memory_space<vmem>>, vector<1x256xf32>
    tpu.vector_store %arg8[%c0_12, %c0_13], %18 {strides = array<i32>} : memref<1x256xf32, #tpu.memory_space<vmem>>, vector<1x256xf32>,
    %cst_14 = arith.constant 0.000000e+00 : f32
    %20 = vector.broadcast %cst_14 : f32 to vector<8x256xf32>
    %21 = arith.maximumf %8, %20 : vector<8x256xf32>
    %22 = arith.truncf %21 : vector<8x256xf32> to vector<8x256xbf16>
    %c0_15 = arith.constant 0 : index
    %c0_16 = arith.constant 0 : index
    %23 = vector.load %arg5[%c0_15, %c0_16] : memref<8x256xbf16, #tpu.memory_space<vmem>>, vector<8x256xbf16>
    tpu.vector_store %arg5[%c0_15, %c0_16], %22 {strides = array<i32>} : memref<8x256xbf16, #tpu.memory_space<vmem>>, vector<8x256xbf16>,
    %cst_17 = arith.constant 0.000000e+00 : f32
    %24 = vector.broadcast %cst_17 : f32 to vector<8x256xf32>
    %25 = arith.maximumf %12, %24 : vector<8x256xf32>
    %26 = arith.truncf %25 : vector<8x256xf32> to vector<8x256xbf16>
    %c0_18 = arith.constant 0 : index
    %c0_19 = arith.constant 0 : index
    %27 = vector.load %arg6[%c0_18, %c0_19] : memref<8x256xbf16, #tpu.memory_space<vmem>>, vector<8x256xbf16>
    tpu.vector_store %arg6[%c0_18, %c0_19], %26 {strides = array<i32>} : memref<8x256xbf16, #tpu.memory_space<vmem>>, vector<8x256xbf16>,
    %c1_i32 = arith.constant 1 : i32
    %28 = arith.cmpi eq, %arg0, %c1_i32 : i32
    %29 = arith.extui %28 : i1 to i32
    %c0_i32_20 = arith.constant 0 : i32
    %30 = arith.cmpi ne, %29, %c0_i32_20 : i32
    scf.if %30 {
      %c0_21 = arith.constant 0 : index
      %c0_22 = arith.constant 0 : index
      %31 = vector.load %arg8[%c0_21, %c0_22] : memref<1x256xf32, #tpu.memory_space<vmem>>, vector<1x256xf32>
      %32 = vector.shape_cast %31 : vector<1x256xf32> to vector<1x1x256xf32>
      %cst_23 = arith.constant dense<0.000000e+00> : vector<1xf32>
      %33 = vector.multi_reduction <add>, %32, %cst_23 [1, 2] : vector<1x1x256xf32> to vector<1xf32>
      %34 = vector.shape_cast %33 : vector<1xf32> to vector<1x1x1xf32>
      %35 = vector.extract %34[0, 0, 0] : f32 from vector<1x1x1xf32>
      %c0_24 = arith.constant 0 : index
      %c0_25 = arith.constant 0 : index
      %36 = memref.load %arg7[%c0_24, %c0_25] : memref<1x1xf32, #tpu.memory_space<smem>>
      memref.store %35, %arg7[%c0_24, %c0_25] : memref<1x1xf32, #tpu.memory_space<smem>>
    } else {
    }
    return
  }
  func.func @transform_0(%arg0: i32) -> (i32, i32) {
    %c0_i32 = arith.constant 0 : i32
    %c0_i32_0 = arith.constant 0 : i32
    return %c0_i32, %arg0 : i32, i32
  }
  func.func @transform_1(%arg0: i32) -> (i32, i32) {
    %c0_i32 = arith.constant 0 : i32
    %c0_i32_0 = arith.constant 0 : i32
    return %c0_i32, %arg0 : i32, i32
  }
  func.func @transform_2(%arg0: i32) -> (i32, i32) {
    %c0_i32 = arith.constant 0 : i32
    %c0_i32_0 = arith.constant 0 : i32
    %c0_i32_1 = arith.constant 0 : i32
    return %c0_i32, %c0_i32_0 : i32, i32
  }
  func.func @transform_3(%arg0: i32) -> (i32, i32) {
    %c0_i32 = arith.constant 0 : i32
    %c0_i32_0 = arith.constant 0 : i32
    %c0_i32_1 = arith.constant 0 : i32
    return %c0_i32, %c0_i32_0 : i32, i32
  }
  func.func @transform_4(%arg0: i32) -> (i32, i32) {
    %c0_i32 = arith.constant 0 : i32
    %c0_i32_0 = arith.constant 0 : i32
    return %c0_i32, %arg0 : i32, i32
  }
  func.func @transform_5(%arg0: i32) -> (i32, i32) {
    %c0_i32 = arith.constant 0 : i32
    %c0_i32_0 = arith.constant 0 : i32
    return %c0_i32, %arg0 : i32, i32
  }
  func.func @transform_6(%arg0: i32) -> (i32, i32) {
    %c0_i32 = arith.constant 0 : i32
    %c0_i32_0 = arith.constant 0 : i32
    %c0_i32_1 = arith.constant 0 : i32
    return %c0_i32, %c0_i32_0 : i32, i32
  }
}

module attributes {stable_mosaic.version = 11 : i64} {
  func.func @_fused_block_kernel(%arg0: i32, %arg1: memref<72x256xbf16, #tpu.memory_space<vmem>>, %arg2: memref<72x256xbf16, #tpu.memory_space<vmem>>, %arg3: memref<8x72xbf16, #tpu.memory_space<vmem>>, %arg4: memref<8x1xf32, #tpu.memory_space<vmem>>, %arg5: memref<8x256xbf16, #tpu.memory_space<vmem>>, %arg6: memref<8x256xbf16, #tpu.memory_space<vmem>>, %arg7: memref<1x1xf32, #tpu.memory_space<smem>>, %arg8: memref<1x256xf32, #tpu.memory_space<vmem>>) attributes {dimension_semantics = [#tpu.dimension_semantics<arbitrary>], iteration_bounds = array<i64: 2>, scalar_prefetch = 0 : i64, scratch_operands = 1 : i64, tpu.core_type = #tpu.core_type<tc>, window_params = [{transform_indices = @transform_0, window_bounds = array<i64: 72, 256>}, {transform_indices = @transform_1, window_bounds = array<i64: 72, 256>}, {pipeline_mode = #tpu.pipeline_mode<synchronous>, transform_indices = @transform_2, window_bounds = array<i64: 8, 72>}, {pipeline_mode = #tpu.pipeline_mode<synchronous>, transform_indices = @transform_3, window_bounds = array<i64: 8, 1>}, {transform_indices = @transform_4, window_bounds = array<i64: 8, 256>}, {transform_indices = @transform_5, window_bounds = array<i64: 8, 256>}, {transform_indices = @transform_6, window_bounds = array<i64: 1, 1>}]} {
    %c0_i32 = arith.constant 0 : i32
    %0 = arith.cmpi eq, %arg0, %c0_i32 : i32
    %1 = arith.extui %0 : i1 to i32
    %c0_i32_0 = arith.constant 0 : i32
    %2 = arith.cmpi ne, %1, %c0_i32_0 : i32
    scf.if %2 {
      %cst_21 = arith.constant 0.000000e+00 : f32
      %31 = vector.broadcast %cst_21 : f32 to vector<1x256xf32>
      %c0_22 = arith.constant 0 : index
      %c0_23 = arith.constant 0 : index
      %32 = vector.load %arg8[%c0_22, %c0_23] : memref<1x256xf32, #tpu.memory_space<vmem>>, vector<1x256xf32>
      tpu.vector_store %arg8[%c0_22, %c0_23], %31 {strides = array<i32>} : memref<1x256xf32, #tpu.memory_space<vmem>>, vector<1x256xf32>,
    } else {
    }
    %c0 = arith.constant 0 : index
    %c0_1 = arith.constant 0 : index
    %3 = vector.load %arg3[%c0, %c0_1] : memref<8x72xbf16, #tpu.memory_space<vmem>>, vector<8x72xbf16>
    %c0_2 = arith.constant 0 : index
    %c0_3 = arith.constant 0 : index
    %4 = vector.load %arg4[%c0_2, %c0_3] : memref<8x1xf32, #tpu.memory_space<vmem>>, vector<8x1xf32>
    %c0_4 = arith.constant 0 : index
    %c0_5 = arith.constant 0 : index
    %5 = vector.load %arg1[%c0_4, %c0_5] : memref<72x256xbf16, #tpu.memory_space<vmem>>, vector<72x256xbf16>
    %cst = arith.constant dense<0.000000e+00> : vector<8x256xf32>
    %6 = tpu.matmul %3, %5, %cst {dimension_numbers = #tpu.dot_dimension_numbers<[1], [0], [0], [1], [0, 0, 1, 1], [], []>} : vector<8x72xbf16>, vector<72x256xbf16>, vector<8x256xf32> -> vector<8x256xf32>
    %7 = vector.broadcast %4 : vector<8x1xf32> to vector<8x256xf32>
    %8 = arith.addf %6, %7 : vector<8x256xf32>
    %c0_6 = arith.constant 0 : index
    %c0_7 = arith.constant 0 : index
    %9 = vector.load %arg2[%c0_6, %c0_7] : memref<72x256xbf16, #tpu.memory_space<vmem>>, vector<72x256xbf16>
    %cst_8 = arith.constant dense<0.000000e+00> : vector<8x256xf32>
    %10 = tpu.matmul %3, %9, %cst_8 {dimension_numbers = #tpu.dot_dimension_numbers<[1], [0], [0], [1], [0, 0, 1, 1], [], []>} : vector<8x72xbf16>, vector<72x256xbf16>, vector<8x256xf32> -> vector<8x256xf32>
    %11 = vector.broadcast %4 : vector<8x1xf32> to vector<8x256xf32>
    %12 = arith.addf %10, %11 : vector<8x256xf32>
    %13 = arith.subf %8, %12 : vector<8x256xf32>
    %c0_9 = arith.constant 0 : index
    %c0_10 = arith.constant 0 : index
    %14 = vector.load %arg8[%c0_9, %c0_10] : memref<1x256xf32, #tpu.memory_space<vmem>>, vector<1x256xf32>
    %15 = arith.mulf %13, %13 : vector<8x256xf32>
    %cst_11 = arith.constant dense<0.000000e+00> : vector<256xf32>
    %16 = vector.multi_reduction <add>, %15, %cst_11 [0] : vector<8x256xf32> to vector<256xf32>
    %17 = vector.shape_cast %16 : vector<256xf32> to vector<1x256xf32>
    %18 = arith.addf %14, %17 : vector<1x256xf32>
    %c0_12 = arith.constant 0 : index
    %c0_13 = arith.constant 0 : index
    %19 = vector.load %arg8[%c0_12, %c0_13] : memref<1x256xf32, #tpu.memory_space<vmem>>, vector<1x256xf32>
    tpu.vector_store %arg8[%c0_12, %c0_13], %18 {strides = array<i32>} : memref<1x256xf32, #tpu.memory_space<vmem>>, vector<1x256xf32>,
    %cst_14 = arith.constant 0.000000e+00 : f32
    %20 = vector.broadcast %cst_14 : f32 to vector<8x256xf32>
    %21 = arith.maximumf %8, %20 : vector<8x256xf32>
    %22 = arith.truncf %21 : vector<8x256xf32> to vector<8x256xbf16>
    %c0_15 = arith.constant 0 : index
    %c0_16 = arith.constant 0 : index
    %23 = vector.load %arg5[%c0_15, %c0_16] : memref<8x256xbf16, #tpu.memory_space<vmem>>, vector<8x256xbf16>
    tpu.vector_store %arg5[%c0_15, %c0_16], %22 {strides = array<i32>} : memref<8x256xbf16, #tpu.memory_space<vmem>>, vector<8x256xbf16>,
    %cst_17 = arith.constant 0.000000e+00 : f32
    %24 = vector.broadcast %cst_17 : f32 to vector<8x256xf32>
    %25 = arith.maximumf %12, %24 : vector<8x256xf32>
    %26 = arith.truncf %25 : vector<8x256xf32> to vector<8x256xbf16>
    %c0_18 = arith.constant 0 : index
    %c0_19 = arith.constant 0 : index
    %27 = vector.load %arg6[%c0_18, %c0_19] : memref<8x256xbf16, #tpu.memory_space<vmem>>, vector<8x256xbf16>
    tpu.vector_store %arg6[%c0_18, %c0_19], %26 {strides = array<i32>} : memref<8x256xbf16, #tpu.memory_space<vmem>>, vector<8x256xbf16>,
    %c1_i32 = arith.constant 1 : i32
    %28 = arith.cmpi eq, %arg0, %c1_i32 : i32
    %29 = arith.extui %28 : i1 to i32
    %c0_i32_20 = arith.constant 0 : i32
    %30 = arith.cmpi ne, %29, %c0_i32_20 : i32
    scf.if %30 {
      %c0_21 = arith.constant 0 : index
      %c0_22 = arith.constant 0 : index
      %31 = vector.load %arg8[%c0_21, %c0_22] : memref<1x256xf32, #tpu.memory_space<vmem>>, vector<1x256xf32>
      %32 = vector.shape_cast %31 : vector<1x256xf32> to vector<1x1x256xf32>
      %cst_23 = arith.constant dense<0.000000e+00> : vector<1xf32>
      %33 = vector.multi_reduction <add>, %32, %cst_23 [1, 2] : vector<1x1x256xf32> to vector<1xf32>
      %34 = vector.shape_cast %33 : vector<1xf32> to vector<1x1x1xf32>
      %35 = vector.extract %34[0, 0, 0] : f32 from vector<1x1x1xf32>
      %c0_24 = arith.constant 0 : index
      %c0_25 = arith.constant 0 : index
      %36 = memref.load %arg7[%c0_24, %c0_25] : memref<1x1xf32, #tpu.memory_space<smem>>
      memref.store %35, %arg7[%c0_24, %c0_25] : memref<1x1xf32, #tpu.memory_space<smem>>
    } else {
    }
    return
  }
  func.func @transform_0(%arg0: i32) -> (i32, i32) {
    %c0_i32 = arith.constant 0 : i32
    %c0_i32_0 = arith.constant 0 : i32
    return %c0_i32, %arg0 : i32, i32
  }
  func.func @transform_1(%arg0: i32) -> (i32, i32) {
    %c0_i32 = arith.constant 0 : i32
    %c0_i32_0 = arith.constant 0 : i32
    return %c0_i32, %arg0 : i32, i32
  }
  func.func @transform_2(%arg0: i32) -> (i32, i32) {
    %c0_i32 = arith.constant 0 : i32
    %c0_i32_0 = arith.constant 0 : i32
    %c0_i32_1 = arith.constant 0 : i32
    return %c0_i32, %c0_i32_0 : i32, i32
  }
  func.func @transform_3(%arg0: i32) -> (i32, i32) {
    %c0_i32 = arith.constant 0 : i32
    %c0_i32_0 = arith.constant 0 : i32
    %c0_i32_1 = arith.constant 0 : i32
    return %c0_i32, %c0_i32_0 : i32, i32
  }
  func.func @transform_4(%arg0: i32) -> (i32, i32) {
    %c0_i32 = arith.constant 0 : i32
    %c0_i32_0 = arith.constant 0 : i32
    return %c0_i32, %arg0 : i32, i32
  }
  func.func @transform_5(%arg0: i32) -> (i32, i32) {
    %c0_i32 = arith.constant 0 : i32
    %c0_i32_0 = arith.constant 0 : i32
    return %c0_i32, %arg0 : i32, i32
  }
  func.func @transform_6(%arg0: i32) -> (i32, i32) {
    %c0_i32 = arith.constant 0 : i32
    %c0_i32_0 = arith.constant 0 : i32
    %c0_i32_1 = arith.constant 0 : i32
    return %c0_i32, %c0_i32_0 : i32, i32
  }
}

module attributes {stable_mosaic.version = 11 : i64} {
  func.func @_fused_block_kernel(%arg0: i32, %arg1: memref<72x256xbf16, #tpu.memory_space<vmem>>, %arg2: memref<72x256xbf16, #tpu.memory_space<vmem>>, %arg3: memref<16x72xbf16, #tpu.memory_space<vmem>>, %arg4: memref<16x1xf32, #tpu.memory_space<vmem>>, %arg5: memref<16x256xbf16, #tpu.memory_space<vmem>>, %arg6: memref<16x256xbf16, #tpu.memory_space<vmem>>, %arg7: memref<1x1xf32, #tpu.memory_space<smem>>, %arg8: memref<1x256xf32, #tpu.memory_space<vmem>>) attributes {dimension_semantics = [#tpu.dimension_semantics<arbitrary>], iteration_bounds = array<i64: 2>, scalar_prefetch = 0 : i64, scratch_operands = 1 : i64, tpu.core_type = #tpu.core_type<tc>, window_params = [{transform_indices = @transform_0, window_bounds = array<i64: 72, 256>}, {transform_indices = @transform_1, window_bounds = array<i64: 72, 256>}, {pipeline_mode = #tpu.pipeline_mode<synchronous>, transform_indices = @transform_2, window_bounds = array<i64: 16, 72>}, {pipeline_mode = #tpu.pipeline_mode<synchronous>, transform_indices = @transform_3, window_bounds = array<i64: 16, 1>}, {transform_indices = @transform_4, window_bounds = array<i64: 16, 256>}, {transform_indices = @transform_5, window_bounds = array<i64: 16, 256>}, {transform_indices = @transform_6, window_bounds = array<i64: 1, 1>}]} {
    %c0_i32 = arith.constant 0 : i32
    %0 = arith.cmpi eq, %arg0, %c0_i32 : i32
    %1 = arith.extui %0 : i1 to i32
    %c0_i32_0 = arith.constant 0 : i32
    %2 = arith.cmpi ne, %1, %c0_i32_0 : i32
    scf.if %2 {
      %cst_21 = arith.constant 0.000000e+00 : f32
      %31 = vector.broadcast %cst_21 : f32 to vector<1x256xf32>
      %c0_22 = arith.constant 0 : index
      %c0_23 = arith.constant 0 : index
      %32 = vector.load %arg8[%c0_22, %c0_23] : memref<1x256xf32, #tpu.memory_space<vmem>>, vector<1x256xf32>
      tpu.vector_store %arg8[%c0_22, %c0_23], %31 {strides = array<i32>} : memref<1x256xf32, #tpu.memory_space<vmem>>, vector<1x256xf32>,
    } else {
    }
    %c0 = arith.constant 0 : index
    %c0_1 = arith.constant 0 : index
    %3 = vector.load %arg3[%c0, %c0_1] : memref<16x72xbf16, #tpu.memory_space<vmem>>, vector<16x72xbf16>
    %c0_2 = arith.constant 0 : index
    %c0_3 = arith.constant 0 : index
    %4 = vector.load %arg4[%c0_2, %c0_3] : memref<16x1xf32, #tpu.memory_space<vmem>>, vector<16x1xf32>
    %c0_4 = arith.constant 0 : index
    %c0_5 = arith.constant 0 : index
    %5 = vector.load %arg1[%c0_4, %c0_5] : memref<72x256xbf16, #tpu.memory_space<vmem>>, vector<72x256xbf16>
    %cst = arith.constant dense<0.000000e+00> : vector<16x256xf32>
    %6 = tpu.matmul %3, %5, %cst {dimension_numbers = #tpu.dot_dimension_numbers<[1], [0], [0], [1], [0, 0, 1, 1], [], []>} : vector<16x72xbf16>, vector<72x256xbf16>, vector<16x256xf32> -> vector<16x256xf32>
    %7 = vector.broadcast %4 : vector<16x1xf32> to vector<16x256xf32>
    %8 = arith.addf %6, %7 : vector<16x256xf32>
    %c0_6 = arith.constant 0 : index
    %c0_7 = arith.constant 0 : index
    %9 = vector.load %arg2[%c0_6, %c0_7] : memref<72x256xbf16, #tpu.memory_space<vmem>>, vector<72x256xbf16>
    %cst_8 = arith.constant dense<0.000000e+00> : vector<16x256xf32>
    %10 = tpu.matmul %3, %9, %cst_8 {dimension_numbers = #tpu.dot_dimension_numbers<[1], [0], [0], [1], [0, 0, 1, 1], [], []>} : vector<16x72xbf16>, vector<72x256xbf16>, vector<16x256xf32> -> vector<16x256xf32>
    %11 = vector.broadcast %4 : vector<16x1xf32> to vector<16x256xf32>
    %12 = arith.addf %10, %11 : vector<16x256xf32>
    %13 = arith.subf %8, %12 : vector<16x256xf32>
    %c0_9 = arith.constant 0 : index
    %c0_10 = arith.constant 0 : index
    %14 = vector.load %arg8[%c0_9, %c0_10] : memref<1x256xf32, #tpu.memory_space<vmem>>, vector<1x256xf32>
    %15 = arith.mulf %13, %13 : vector<16x256xf32>
    %cst_11 = arith.constant dense<0.000000e+00> : vector<256xf32>
    %16 = vector.multi_reduction <add>, %15, %cst_11 [0] : vector<16x256xf32> to vector<256xf32>
    %17 = vector.shape_cast %16 : vector<256xf32> to vector<1x256xf32>
    %18 = arith.addf %14, %17 : vector<1x256xf32>
    %c0_12 = arith.constant 0 : index
    %c0_13 = arith.constant 0 : index
    %19 = vector.load %arg8[%c0_12, %c0_13] : memref<1x256xf32, #tpu.memory_space<vmem>>, vector<1x256xf32>
    tpu.vector_store %arg8[%c0_12, %c0_13], %18 {strides = array<i32>} : memref<1x256xf32, #tpu.memory_space<vmem>>, vector<1x256xf32>,
    %cst_14 = arith.constant 0.000000e+00 : f32
    %20 = vector.broadcast %cst_14 : f32 to vector<16x256xf32>
    %21 = arith.maximumf %8, %20 : vector<16x256xf32>
    %22 = arith.truncf %21 : vector<16x256xf32> to vector<16x256xbf16>
    %c0_15 = arith.constant 0 : index
    %c0_16 = arith.constant 0 : index
    %23 = vector.load %arg5[%c0_15, %c0_16] : memref<16x256xbf16, #tpu.memory_space<vmem>>, vector<16x256xbf16>
    tpu.vector_store %arg5[%c0_15, %c0_16], %22 {strides = array<i32>} : memref<16x256xbf16, #tpu.memory_space<vmem>>, vector<16x256xbf16>,
    %cst_17 = arith.constant 0.000000e+00 : f32
    %24 = vector.broadcast %cst_17 : f32 to vector<16x256xf32>
    %25 = arith.maximumf %12, %24 : vector<16x256xf32>
    %26 = arith.truncf %25 : vector<16x256xf32> to vector<16x256xbf16>
    %c0_18 = arith.constant 0 : index
    %c0_19 = arith.constant 0 : index
    %27 = vector.load %arg6[%c0_18, %c0_19] : memref<16x256xbf16, #tpu.memory_space<vmem>>, vector<16x256xbf16>
    tpu.vector_store %arg6[%c0_18, %c0_19], %26 {strides = array<i32>} : memref<16x256xbf16, #tpu.memory_space<vmem>>, vector<16x256xbf16>,
    %c1_i32 = arith.constant 1 : i32
    %28 = arith.cmpi eq, %arg0, %c1_i32 : i32
    %29 = arith.extui %28 : i1 to i32
    %c0_i32_20 = arith.constant 0 : i32
    %30 = arith.cmpi ne, %29, %c0_i32_20 : i32
    scf.if %30 {
      %c0_21 = arith.constant 0 : index
      %c0_22 = arith.constant 0 : index
      %31 = vector.load %arg8[%c0_21, %c0_22] : memref<1x256xf32, #tpu.memory_space<vmem>>, vector<1x256xf32>
      %32 = vector.shape_cast %31 : vector<1x256xf32> to vector<1x1x256xf32>
      %cst_23 = arith.constant dense<0.000000e+00> : vector<1xf32>
      %33 = vector.multi_reduction <add>, %32, %cst_23 [1, 2] : vector<1x1x256xf32> to vector<1xf32>
      %34 = vector.shape_cast %33 : vector<1xf32> to vector<1x1x1xf32>
      %35 = vector.extract %34[0, 0, 0] : f32 from vector<1x1x1xf32>
      %c0_24 = arith.constant 0 : index
      %c0_25 = arith.constant 0 : index
      %36 = memref.load %arg7[%c0_24, %c0_25] : memref<1x1xf32, #tpu.memory_space<smem>>
      memref.store %35, %arg7[%c0_24, %c0_25] : memref<1x1xf32, #tpu.memory_space<smem>>
    } else {
    }
    return
  }
  func.func @transform_0(%arg0: i32) -> (i32, i32) {
    %c0_i32 = arith.constant 0 : i32
    %c0_i32_0 = arith.constant 0 : i32
    return %c0_i32, %arg0 : i32, i32
  }
  func.func @transform_1(%arg0: i32) -> (i32, i32) {
    %c0_i32 = arith.constant 0 : i32
    %c0_i32_0 = arith.constant 0 : i32
    return %c0_i32, %arg0 : i32, i32
  }
  func.func @transform_2(%arg0: i32) -> (i32, i32) {
    %c0_i32 = arith.constant 0 : i32
    %c0_i32_0 = arith.constant 0 : i32
    %c0_i32_1 = arith.constant 0 : i32
    return %c0_i32, %c0_i32_0 : i32, i32
  }
  func.func @transform_3(%arg0: i32) -> (i32, i32) {
    %c0_i32 = arith.constant 0 : i32
    %c0_i32_0 = arith.constant 0 : i32
    %c0_i32_1 = arith.constant 0 : i32
    return %c0_i32, %c0_i32_0 : i32, i32
  }
  func.func @transform_4(%arg0: i32) -> (i32, i32) {
    %c0_i32 = arith.constant 0 : i32
    %c0_i32_0 = arith.constant 0 : i32
    return %c0_i32, %arg0 : i32, i32
  }
  func.func @transform_5(%arg0: i32) -> (i32, i32) {
    %c0_i32 = arith.constant 0 : i32
    %c0_i32_0 = arith.constant 0 : i32
    return %c0_i32, %arg0 : i32, i32
  }
  func.func @transform_6(%arg0: i32) -> (i32, i32) {
    %c0_i32 = arith.constant 0 : i32
    %c0_i32_0 = arith.constant 0 : i32
    %c0_i32_1 = arith.constant 0 : i32
    return %c0_i32, %c0_i32_0 : i32, i32
  }
}

module attributes {stable_mosaic.version = 11 : i64} {
  func.func @_fused_block_kernel(%arg0: i32, %arg1: memref<144x256xbf16, #tpu.memory_space<vmem>>, %arg2: memref<144x256xbf16, #tpu.memory_space<vmem>>, %arg3: memref<16x144xbf16, #tpu.memory_space<vmem>>, %arg4: memref<16x1xf32, #tpu.memory_space<vmem>>, %arg5: memref<16x256xbf16, #tpu.memory_space<vmem>>, %arg6: memref<16x256xbf16, #tpu.memory_space<vmem>>, %arg7: memref<1x1xf32, #tpu.memory_space<smem>>, %arg8: memref<1x256xf32, #tpu.memory_space<vmem>>) attributes {dimension_semantics = [#tpu.dimension_semantics<arbitrary>], iteration_bounds = array<i64: 2>, scalar_prefetch = 0 : i64, scratch_operands = 1 : i64, tpu.core_type = #tpu.core_type<tc>, window_params = [{transform_indices = @transform_0, window_bounds = array<i64: 144, 256>}, {transform_indices = @transform_1, window_bounds = array<i64: 144, 256>}, {pipeline_mode = #tpu.pipeline_mode<synchronous>, transform_indices = @transform_2, window_bounds = array<i64: 16, 144>}, {pipeline_mode = #tpu.pipeline_mode<synchronous>, transform_indices = @transform_3, window_bounds = array<i64: 16, 1>}, {transform_indices = @transform_4, window_bounds = array<i64: 16, 256>}, {transform_indices = @transform_5, window_bounds = array<i64: 16, 256>}, {transform_indices = @transform_6, window_bounds = array<i64: 1, 1>}]} {
    %c0_i32 = arith.constant 0 : i32
    %0 = arith.cmpi eq, %arg0, %c0_i32 : i32
    %1 = arith.extui %0 : i1 to i32
    %c0_i32_0 = arith.constant 0 : i32
    %2 = arith.cmpi ne, %1, %c0_i32_0 : i32
    scf.if %2 {
      %cst_21 = arith.constant 0.000000e+00 : f32
      %31 = vector.broadcast %cst_21 : f32 to vector<1x256xf32>
      %c0_22 = arith.constant 0 : index
      %c0_23 = arith.constant 0 : index
      %32 = vector.load %arg8[%c0_22, %c0_23] : memref<1x256xf32, #tpu.memory_space<vmem>>, vector<1x256xf32>
      tpu.vector_store %arg8[%c0_22, %c0_23], %31 {strides = array<i32>} : memref<1x256xf32, #tpu.memory_space<vmem>>, vector<1x256xf32>,
    } else {
    }
    %c0 = arith.constant 0 : index
    %c0_1 = arith.constant 0 : index
    %3 = vector.load %arg3[%c0, %c0_1] : memref<16x144xbf16, #tpu.memory_space<vmem>>, vector<16x144xbf16>
    %c0_2 = arith.constant 0 : index
    %c0_3 = arith.constant 0 : index
    %4 = vector.load %arg4[%c0_2, %c0_3] : memref<16x1xf32, #tpu.memory_space<vmem>>, vector<16x1xf32>
    %c0_4 = arith.constant 0 : index
    %c0_5 = arith.constant 0 : index
    %5 = vector.load %arg1[%c0_4, %c0_5] : memref<144x256xbf16, #tpu.memory_space<vmem>>, vector<144x256xbf16>
    %cst = arith.constant dense<0.000000e+00> : vector<16x256xf32>
    %6 = tpu.matmul %3, %5, %cst {dimension_numbers = #tpu.dot_dimension_numbers<[1], [0], [0], [1], [0, 0, 1, 1], [], []>} : vector<16x144xbf16>, vector<144x256xbf16>, vector<16x256xf32> -> vector<16x256xf32>
    %7 = vector.broadcast %4 : vector<16x1xf32> to vector<16x256xf32>
    %8 = arith.addf %6, %7 : vector<16x256xf32>
    %c0_6 = arith.constant 0 : index
    %c0_7 = arith.constant 0 : index
    %9 = vector.load %arg2[%c0_6, %c0_7] : memref<144x256xbf16, #tpu.memory_space<vmem>>, vector<144x256xbf16>
    %cst_8 = arith.constant dense<0.000000e+00> : vector<16x256xf32>
    %10 = tpu.matmul %3, %9, %cst_8 {dimension_numbers = #tpu.dot_dimension_numbers<[1], [0], [0], [1], [0, 0, 1, 1], [], []>} : vector<16x144xbf16>, vector<144x256xbf16>, vector<16x256xf32> -> vector<16x256xf32>
    %11 = vector.broadcast %4 : vector<16x1xf32> to vector<16x256xf32>
    %12 = arith.addf %10, %11 : vector<16x256xf32>
    %13 = arith.subf %8, %12 : vector<16x256xf32>
    %c0_9 = arith.constant 0 : index
    %c0_10 = arith.constant 0 : index
    %14 = vector.load %arg8[%c0_9, %c0_10] : memref<1x256xf32, #tpu.memory_space<vmem>>, vector<1x256xf32>
    %15 = arith.mulf %13, %13 : vector<16x256xf32>
    %cst_11 = arith.constant dense<0.000000e+00> : vector<256xf32>
    %16 = vector.multi_reduction <add>, %15, %cst_11 [0] : vector<16x256xf32> to vector<256xf32>
    %17 = vector.shape_cast %16 : vector<256xf32> to vector<1x256xf32>
    %18 = arith.addf %14, %17 : vector<1x256xf32>
    %c0_12 = arith.constant 0 : index
    %c0_13 = arith.constant 0 : index
    %19 = vector.load %arg8[%c0_12, %c0_13] : memref<1x256xf32, #tpu.memory_space<vmem>>, vector<1x256xf32>
    tpu.vector_store %arg8[%c0_12, %c0_13], %18 {strides = array<i32>} : memref<1x256xf32, #tpu.memory_space<vmem>>, vector<1x256xf32>,
    %cst_14 = arith.constant 0.000000e+00 : f32
    %20 = vector.broadcast %cst_14 : f32 to vector<16x256xf32>
    %21 = arith.maximumf %8, %20 : vector<16x256xf32>
    %22 = arith.truncf %21 : vector<16x256xf32> to vector<16x256xbf16>
    %c0_15 = arith.constant 0 : index
    %c0_16 = arith.constant 0 : index
    %23 = vector.load %arg5[%c0_15, %c0_16] : memref<16x256xbf16, #tpu.memory_space<vmem>>, vector<16x256xbf16>
    tpu.vector_store %arg5[%c0_15, %c0_16], %22 {strides = array<i32>} : memref<16x256xbf16, #tpu.memory_space<vmem>>, vector<16x256xbf16>,
    %cst_17 = arith.constant 0.000000e+00 : f32
    %24 = vector.broadcast %cst_17 : f32 to vector<16x256xf32>
    %25 = arith.maximumf %12, %24 : vector<16x256xf32>
    %26 = arith.truncf %25 : vector<16x256xf32> to vector<16x256xbf16>
    %c0_18 = arith.constant 0 : index
    %c0_19 = arith.constant 0 : index
    %27 = vector.load %arg6[%c0_18, %c0_19] : memref<16x256xbf16, #tpu.memory_space<vmem>>, vector<16x256xbf16>
    tpu.vector_store %arg6[%c0_18, %c0_19], %26 {strides = array<i32>} : memref<16x256xbf16, #tpu.memory_space<vmem>>, vector<16x256xbf16>,
    %c1_i32 = arith.constant 1 : i32
    %28 = arith.cmpi eq, %arg0, %c1_i32 : i32
    %29 = arith.extui %28 : i1 to i32
    %c0_i32_20 = arith.constant 0 : i32
    %30 = arith.cmpi ne, %29, %c0_i32_20 : i32
    scf.if %30 {
      %c0_21 = arith.constant 0 : index
      %c0_22 = arith.constant 0 : index
      %31 = vector.load %arg8[%c0_21, %c0_22] : memref<1x256xf32, #tpu.memory_space<vmem>>, vector<1x256xf32>
      %32 = vector.shape_cast %31 : vector<1x256xf32> to vector<1x1x256xf32>
      %cst_23 = arith.constant dense<0.000000e+00> : vector<1xf32>
      %33 = vector.multi_reduction <add>, %32, %cst_23 [1, 2] : vector<1x1x256xf32> to vector<1xf32>
      %34 = vector.shape_cast %33 : vector<1xf32> to vector<1x1x1xf32>
      %35 = vector.extract %34[0, 0, 0] : f32 from vector<1x1x1xf32>
      %c0_24 = arith.constant 0 : index
      %c0_25 = arith.constant 0 : index
      %36 = memref.load %arg7[%c0_24, %c0_25] : memref<1x1xf32, #tpu.memory_space<smem>>
      memref.store %35, %arg7[%c0_24, %c0_25] : memref<1x1xf32, #tpu.memory_space<smem>>
    } else {
    }
    return
  }
  func.func @transform_0(%arg0: i32) -> (i32, i32) {
    %c0_i32 = arith.constant 0 : i32
    %c0_i32_0 = arith.constant 0 : i32
    return %c0_i32, %arg0 : i32, i32
  }
  func.func @transform_1(%arg0: i32) -> (i32, i32) {
    %c0_i32 = arith.constant 0 : i32
    %c0_i32_0 = arith.constant 0 : i32
    return %c0_i32, %arg0 : i32, i32
  }
  func.func @transform_2(%arg0: i32) -> (i32, i32) {
    %c0_i32 = arith.constant 0 : i32
    %c0_i32_0 = arith.constant 0 : i32
    %c0_i32_1 = arith.constant 0 : i32
    return %c0_i32, %c0_i32_0 : i32, i32
  }
  func.func @transform_3(%arg0: i32) -> (i32, i32) {
    %c0_i32 = arith.constant 0 : i32
    %c0_i32_0 = arith.constant 0 : i32
    %c0_i32_1 = arith.constant 0 : i32
    return %c0_i32, %c0_i32_0 : i32, i32
  }
  func.func @transform_4(%arg0: i32) -> (i32, i32) {
    %c0_i32 = arith.constant 0 : i32
    %c0_i32_0 = arith.constant 0 : i32
    return %c0_i32, %arg0 : i32, i32
  }
  func.func @transform_5(%arg0: i32) -> (i32, i32) {
    %c0_i32 = arith.constant 0 : i32
    %c0_i32_0 = arith.constant 0 : i32
    return %c0_i32, %arg0 : i32, i32
  }
  func.func @transform_6(%arg0: i32) -> (i32, i32) {
    %c0_i32 = arith.constant 0 : i32
    %c0_i32_0 = arith.constant 0 : i32
    %c0_i32_1 = arith.constant 0 : i32
    return %c0_i32, %c0_i32_0 : i32, i32
  }
}

module attributes {stable_mosaic.version = 11 : i64} {
  func.func @_fused_block_kernel(%arg0: i32, %arg1: memref<144x256xbf16, #tpu.memory_space<vmem>>, %arg2: memref<144x256xbf16, #tpu.memory_space<vmem>>, %arg3: memref<32x144xbf16, #tpu.memory_space<vmem>>, %arg4: memref<32x1xf32, #tpu.memory_space<vmem>>, %arg5: memref<1x1xf32, #tpu.memory_space<smem>>, %arg6: memref<1x256xf32, #tpu.memory_space<vmem>>) attributes {dimension_semantics = [#tpu.dimension_semantics<arbitrary>], iteration_bounds = array<i64: 2>, scalar_prefetch = 0 : i64, scratch_operands = 1 : i64, tpu.core_type = #tpu.core_type<tc>, window_params = [{transform_indices = @transform_0, window_bounds = array<i64: 144, 256>}, {transform_indices = @transform_1, window_bounds = array<i64: 144, 256>}, {pipeline_mode = #tpu.pipeline_mode<synchronous>, transform_indices = @transform_2, window_bounds = array<i64: 32, 144>}, {pipeline_mode = #tpu.pipeline_mode<synchronous>, transform_indices = @transform_3, window_bounds = array<i64: 32, 1>}, {transform_indices = @transform_4, window_bounds = array<i64: 1, 1>}]} {
    %c0_i32 = arith.constant 0 : i32
    %0 = arith.cmpi eq, %arg0, %c0_i32 : i32
    %1 = arith.extui %0 : i1 to i32
    %c0_i32_0 = arith.constant 0 : i32
    %2 = arith.cmpi ne, %1, %c0_i32_0 : i32
    scf.if %2 {
      %cst_15 = arith.constant 0.000000e+00 : f32
      %23 = vector.broadcast %cst_15 : f32 to vector<1x256xf32>
      %c0_16 = arith.constant 0 : index
      %c0_17 = arith.constant 0 : index
      %24 = vector.load %arg6[%c0_16, %c0_17] : memref<1x256xf32, #tpu.memory_space<vmem>>, vector<1x256xf32>
      tpu.vector_store %arg6[%c0_16, %c0_17], %23 {strides = array<i32>} : memref<1x256xf32, #tpu.memory_space<vmem>>, vector<1x256xf32>,
    } else {
    }
    %c0 = arith.constant 0 : index
    %c0_1 = arith.constant 0 : index
    %3 = vector.load %arg3[%c0, %c0_1] : memref<32x144xbf16, #tpu.memory_space<vmem>>, vector<32x144xbf16>
    %c0_2 = arith.constant 0 : index
    %c0_3 = arith.constant 0 : index
    %4 = vector.load %arg4[%c0_2, %c0_3] : memref<32x1xf32, #tpu.memory_space<vmem>>, vector<32x1xf32>
    %c0_4 = arith.constant 0 : index
    %c0_5 = arith.constant 0 : index
    %5 = vector.load %arg1[%c0_4, %c0_5] : memref<144x256xbf16, #tpu.memory_space<vmem>>, vector<144x256xbf16>
    %cst = arith.constant dense<0.000000e+00> : vector<32x256xf32>
    %6 = tpu.matmul %3, %5, %cst {dimension_numbers = #tpu.dot_dimension_numbers<[1], [0], [0], [1], [0, 0, 1, 1], [], []>} : vector<32x144xbf16>, vector<144x256xbf16>, vector<32x256xf32> -> vector<32x256xf32>
    %7 = vector.broadcast %4 : vector<32x1xf32> to vector<32x256xf32>
    %8 = arith.addf %6, %7 : vector<32x256xf32>
    %c0_6 = arith.constant 0 : index
    %c0_7 = arith.constant 0 : index
    %9 = vector.load %arg2[%c0_6, %c0_7] : memref<144x256xbf16, #tpu.memory_space<vmem>>, vector<144x256xbf16>
    %cst_8 = arith.constant dense<0.000000e+00> : vector<32x256xf32>
    %10 = tpu.matmul %3, %9, %cst_8 {dimension_numbers = #tpu.dot_dimension_numbers<[1], [0], [0], [1], [0, 0, 1, 1], [], []>} : vector<32x144xbf16>, vector<144x256xbf16>, vector<32x256xf32> -> vector<32x256xf32>
    %11 = vector.broadcast %4 : vector<32x1xf32> to vector<32x256xf32>
    %12 = arith.addf %10, %11 : vector<32x256xf32>
    %13 = arith.subf %8, %12 : vector<32x256xf32>
    %c0_9 = arith.constant 0 : index
    %c0_10 = arith.constant 0 : index
    %14 = vector.load %arg6[%c0_9, %c0_10] : memref<1x256xf32, #tpu.memory_space<vmem>>, vector<1x256xf32>
    %15 = arith.mulf %13, %13 : vector<32x256xf32>
    %cst_11 = arith.constant dense<0.000000e+00> : vector<256xf32>
    %16 = vector.multi_reduction <add>, %15, %cst_11 [0] : vector<32x256xf32> to vector<256xf32>
    %17 = vector.shape_cast %16 : vector<256xf32> to vector<1x256xf32>
    %18 = arith.addf %14, %17 : vector<1x256xf32>
    %c0_12 = arith.constant 0 : index
    %c0_13 = arith.constant 0 : index
    %19 = vector.load %arg6[%c0_12, %c0_13] : memref<1x256xf32, #tpu.memory_space<vmem>>, vector<1x256xf32>
    tpu.vector_store %arg6[%c0_12, %c0_13], %18 {strides = array<i32>} : memref<1x256xf32, #tpu.memory_space<vmem>>, vector<1x256xf32>,
    %c1_i32 = arith.constant 1 : i32
    %20 = arith.cmpi eq, %arg0, %c1_i32 : i32
    %21 = arith.extui %20 : i1 to i32
    %c0_i32_14 = arith.constant 0 : i32
    %22 = arith.cmpi ne, %21, %c0_i32_14 : i32
    scf.if %22 {
      %c0_15 = arith.constant 0 : index
      %c0_16 = arith.constant 0 : index
      %23 = vector.load %arg6[%c0_15, %c0_16] : memref<1x256xf32, #tpu.memory_space<vmem>>, vector<1x256xf32>
      %24 = vector.shape_cast %23 : vector<1x256xf32> to vector<1x1x256xf32>
      %cst_17 = arith.constant dense<0.000000e+00> : vector<1xf32>
      %25 = vector.multi_reduction <add>, %24, %cst_17 [1, 2] : vector<1x1x256xf32> to vector<1xf32>
      %26 = vector.shape_cast %25 : vector<1xf32> to vector<1x1x1xf32>
      %27 = vector.extract %26[0, 0, 0] : f32 from vector<1x1x1xf32>
      %c0_18 = arith.constant 0 : index
      %c0_19 = arith.constant 0 : index
      %28 = memref.load %arg5[%c0_18, %c0_19] : memref<1x1xf32, #tpu.memory_space<smem>>
      memref.store %27, %arg5[%c0_18, %c0_19] : memref<1x1xf32, #tpu.memory_space<smem>>
    } else {
    }
    return
  }
  func.func @transform_0(%arg0: i32) -> (i32, i32) {
    %c0_i32 = arith.constant 0 : i32
    %c0_i32_0 = arith.constant 0 : i32
    return %c0_i32, %arg0 : i32, i32
  }
  func.func @transform_1(%arg0: i32) -> (i32, i32) {
    %c0_i32 = arith.constant 0 : i32
    %c0_i32_0 = arith.constant 0 : i32
    return %c0_i32, %arg0 : i32, i32
  }
  func.func @transform_2(%arg0: i32) -> (i32, i32) {
    %c0_i32 = arith.constant 0 : i32
    %c0_i32_0 = arith.constant 0 : i32
    %c0_i32_1 = arith.constant 0 : i32
    return %c0_i32, %c0_i32_0 : i32, i32
  }
  func.func @transform_3(%arg0: i32) -> (i32, i32) {
    %c0_i32 = arith.constant 0 : i32
    %c0_i32_0 = arith.constant 0 : i32
    %c0_i32_1 = arith.constant 0 : i32
    return %c0_i32, %c0_i32_0 : i32, i32
  }
  func.func @transform_4(%arg0: i32) -> (i32, i32) {
    %c0_i32 = arith.constant 0 : i32
    %c0_i32_0 = arith.constant 0 : i32
    %c0_i32_1 = arith.constant 0 : i32
    return %c0_i32, %c0_i32_0 : i32, i32
  }
}

</mosaic_0001>

<llo_original>
// kernel: feature_reconstruction_loss.5
$region0: #{feature_reconstruction_loss.5}
  #allocation0 [shape = 'u32[]', space=smem, size = 0x4, offset = 0x4, fixed_abs, tag = 'smem constant byte address 0x4 - core index']
  #allocation1 [shape = 'u32[72,128]{1,0:T(1,128)}', space=vmem, size = 0x9000, scoped, tag = 'internal scratch']
  #allocation2 [shape = 'f32[1,256]{1,0:T(1,128)}', space=vmem, size = 0x400, scoped, tag = 'scratch operand']
  %s0 = inlined_call_operand.vmem [shape: bf16[9,512], index: 0, kind: input, shape index: {}]
  %s1 = inlined_call_operand.vmem [shape: bf16[9,512], index: 1, kind: input, shape index: {}]
  %s2 = inlined_call_operand.vmem [shape: bf16[8,9], index: 2, kind: input, shape index: {}]
  %s3 = inlined_call_operand.vmem [shape: f32[8,1], index: 3, kind: input, shape index: {}]
  %s4 = inlined_call_operand.vmem [shape: bf16[8,512], index: 4, kind: output, shape index: {0}]
  %s5 = inlined_call_operand.vmem [shape: bf16[8,512], index: 5, kind: output, shape index: {1}]
  %s6 = inlined_call_operand.hbm [shape: f32[1,1], index: 6, kind: output, shape index: {2}]
  %7 = xla_tuple %s4, %s5, %s6
  %s8 = sld [smem:[#allocation0]]
  $region149: #{feature_reconstruction_loss.5} parent=0
    _
  %s10 = ssub.s32 1, %s8
  %s11 = scalar_select 0, %s10, %s8
  $region1: #{feature_reconstruction_loss.5} parent=0
    #allocation3 [shape = 'u8[16384]{0}', space=vmem, size = 0x4000, scoped, tag = 'input window, operand 0']
    #allocation4 [shape = 'u8[16384]{0}', space=vmem, size = 0x4000, scoped, tag = 'input window, operand 1']
    #allocation5 [shape = 'u8[512]{0}', space=smem, size = 0x200, scoped, tag = 'output window, operand 2, single buffered']
    #allocation6 [shape = 's32[2]{0}', space=sflag, size = 0x8, scoped, tag = 'scoped memory for feature_reconstruction_loss.5']
    %12 = vsyncpa [#allocation6], 0
    loop: start=0, step=1, limit=4
    $region2: #{feature_reconstruction_loss.5} parent=1 // loop_pre_header
      _
    $region3: #{feature_reconstruction_loss.5} parent=1 // loop_header
      %s14 = sphi 0, %s18
      %p15 = scmp.ge.s32.totalorder %s14, 4
      %s24 = sphi 0, %s26
      %s27 = sphi 0, %s24
      %s28 = sphi 0, %s27
      %s44 = sphi 0, %s28
      %s50 = sphi 0, %s52
      %s53 = sphi 0, %s50
      %s54 = sphi 0, %s53
      %s70 = sphi 0, %s54
      %s74 = sphi 0, %s74
      %s76 = sphi 0, %s74
      %s77 = sphi 0, %s76
      %s91 = sphi 0, %s77
      %s95 = sphi 0, %s95
      %s97 = sphi 0, %s95
      %s98 = sphi 0, %s97
      %s112 = sphi 0, %s98
      %s118 = sphi 0, %s120
      %s121 = sphi 0, %s118
      %s122 = sphi 0, %s121
      %s138 = sphi 0, %s122
      %s144 = sphi 0, %s146
      %s147 = sphi 0, %s144
      %s148 = sphi 0, %s147
      %s164 = sphi 0, %s148
      %s168 = sphi 0, %s168
      %s170 = sphi 0, %s168
      %s171 = sphi 0, %s170
      %s185 = sphi 0, %s171
    $region4: #{feature_reconstruction_loss.5} parent=1 // loop_header_branch
      %17 = sbr.rel (%p15) target = $region8
    $region5: #{feature_reconstruction_loss.5} parent=1 // loop_body
      %s19 = ssub.s32 %s14, 1
      %s20 = ssub.s32 %s14, 2
      %s21 = sadd.s32 %s14, 1
      %s22 = ssub.s32 %s14, %s21
      %p23 = scmp.eq.s32.totalorder %s22, 0
      %s25 = sadd.s32 %s24, 1
      %s26 = scalar_select %p23, %s24, %s25
      %p29 = pneg %p23
      %p30 = scmp.eq.s32.totalorder %s14, 1
      %p31 = por %p29, %p30
      %p32 = scmp.ne.s32.totalorder %s24, %s27
      %p33 = scmp.eq.s32.totalorder %s14, 0
      %p34 = por %p32, %p33
      %p35 = scmp.ne.s32.totalorder %s24, %s27
      %p36 = scmp.eq.s32.totalorder %s19, 1
      %p37 = por %p35, %p36
      %p38 = scmp.ne.s32.totalorder %s27, %s28
      %p39 = scmp.eq.s32.totalorder %s19, 0
      %p40 = por %p38, %p39
      %p41 = scmp.ne.s32.totalorder %s27, %s28
      %p42 = scmp.eq.s32.totalorder %s20, 1
      %p43 = por %p41, %p42
      %p45 = scmp.ne.s32.totalorder %s28, %s44
      %p46 = scmp.eq.s32.totalorder %s20, 0
      %p47 = por %p45, %p46
      %s48 = ssub.s32 %s14, %s21
      %p49 = scmp.eq.s32.totalorder %s48, 0
      %s51 = sadd.s32 %s50, 1
      %s52 = scalar_select %p49, %s50, %s51
      %p55 = pneg %p49
      %p56 = scmp.eq.s32.totalorder %s14, 1
      %p57 = por %p55, %p56
      %p58 = scmp.ne.s32.totalorder %s50, %s53
      %p59 = scmp.eq.s32.totalorder %s14, 0
      %p60 = por %p58, %p59
      %p61 = scmp.ne.s32.totalorder %s50, %s53
      %p62 = scmp.eq.s32.totalorder %s19, 1
      %p63 = por %p61, %p62
      %p64 = scmp.ne.s32.totalorder %s53, %s54
      %p65 = scmp.eq.s32.totalorder %s19, 0
      %p66 = por %p64, %p65
      %p67 = scmp.ne.s32.totalorder %s53, %s54
      %p68 = scmp.eq.s32.totalorder %s20, 1
      %p69 = por %p67, %p68
      %p71 = scmp.ne.s32.totalorder %s54, %s70
      %p72 = scmp.eq.s32.totalorder %s20, 0
      %p73 = por %p71, %p72
      %s75 = sadd.s32 %s74, 1
      %p78 = scmp.eq.s32.totalorder %s14, 1
      %p79 = scmp.ne.s32.totalorder %s74, %s76
      %p80 = scmp.eq.s32.totalorder %s14, 0
      %p81 = por %p79, %p80
      %p82 = scmp.ne.s32.totalorder %s74, %s76
      %p83 = scmp.eq.s32.totalorder %s19, 1
      %p84 = por %p82, %p83
      %p85 = scmp.ne.s32.totalorder %s76, %s77
      %p86 = scmp.eq.s32.totalorder %s19, 0
      %p87 = por %p85, %p86
      %p88 = scmp.ne.s32.totalorder %s76, %s77
      %p89 = scmp.eq.s32.totalorder %s20, 1
      %p90 = por %p88, %p89
      %p92 = scmp.ne.s32.totalorder %s77, %s91
      %p93 = scmp.eq.s32.totalorder %s20, 0
      %p94 = por %p92, %p93
      %s96 = sadd.s32 %s95, 1
      %p99 = scmp.eq.s32.totalorder %s14, 1
      %p100 = scmp.ne.s32.totalorder %s95, %s97
      %p101 = scmp.eq.s32.totalorder %s14, 0
      %p102 = por %p100, %p101
      %p103 = scmp.ne.s32.totalorder %s95, %s97
      %p104 = scmp.eq.s32.totalorder %s19, 1
      %p105 = por %p103, %p104
      %p106 = scmp.ne.s32.totalorder %s97, %s98
      %p107 = scmp.eq.s32.totalorder %s19, 0
      %p108 = por %p106, %p107
      %p109 = scmp.ne.s32.totalorder %s97, %s98
      %p110 = scmp.eq.s32.totalorder %s20, 1
      %p111 = por %p109, %p110
      %p113 = scmp.ne.s32.totalorder %s98, %s112
      %p114 = scmp.eq.s32.totalorder %s20, 0
      %p115 = por %p113, %p114
      %s116 = ssub.s32 %s14, %s21
      %p117 = scmp.eq.s32.totalorder %s116, 0
      %s119 = sadd.s32 %s118, 1
      %s120 = scalar_select %p117, %s118, %s119
      %p123 = pneg %p117
      %p124 = scmp.eq.s32.totalorder %s14, 1
      %p125 = por %p123, %p124
      %p126 = scmp.ne.s32.totalorder %s118, %s121
      %p127 = scmp.eq.s32.totalorder %s14, 0
      %p128 = por %p126, %p127
      %p129 = scmp.ne.s32.totalorder %s118, %s121
      %p130 = scmp.eq.s32.totalorder %s19, 1
      %p131 = por %p129, %p130
      %p132 = scmp.ne.s32.totalorder %s121, %s122
      %p133 = scmp.eq.s32.totalorder %s19, 0
      %p134 = por %p132, %p133
      %p135 = scmp.ne.s32.totalorder %s121, %s122
      %p136 = scmp.eq.s32.totalorder %s20, 1
      %p137 = por %p135, %p136
      %p139 = scmp.ne.s32.totalorder %s122, %s138
      %p140 = scmp.eq.s32.totalorder %s20, 0
      %p141 = por %p139, %p140
      %s142 = ssub.s32 %s14, %s21
      %p143 = scmp.eq.s32.totalorder %s142, 0
      %s145 = sadd.s32 %s144, 1
      %s146 = scalar_select %p143, %s144, %s145
      %p149 = pneg %p143
      %p150 = scmp.eq.s32.totalorder %s14, 1
      %p151 = por %p149, %p150
      %p152 = scmp.ne.s32.totalorder %s144, %s147
      %p153 = scmp.eq.s32.totalorder %s14, 0
      %p154 = por %p152, %p153
      %p155 = scmp.ne.s32.totalorder %s144, %s147
      %p156 = scmp.eq.s32.totalorder %s19, 1
      %p157 = por %p155, %p156
      %p158 = scmp.ne.s32.totalorder %s147, %s148
      %p159 = scmp.eq.s32.totalorder %s19, 0
      %p160 = por %p158, %p159
      %p161 = scmp.ne.s32.totalorder %s147, %s148
      %p162 = scmp.eq.s32.totalorder %s20, 1
      %p163 = por %p161, %p162
      %p165 = scmp.ne.s32.totalorder %s148, %s164
      %p166 = scmp.eq.s32.totalorder %s20, 0
      %p167 = por %p165, %p166
      %s169 = sadd.s32 %s168, 1
      %p172 = scmp.eq.s32.totalorder %s14, 1
      %p173 = scmp.ne.s32.totalorder %s168, %s170
      %p174 = scmp.eq.s32.totalorder %s14, 0
      %p175 = por %p173, %p174
      %p176 = scmp.ne.s32.totalorder %s168, %s170
      %p177 = scmp.eq.s32.totalorder %s19, 1
      %p178 = por %p176, %p177
      %p179 = scmp.ne.s32.totalorder %s170, %s171
      %p180 = scmp.eq.s32.totalorder %s19, 0
      %p181 = por %p179, %p180
      %p182 = scmp.ne.s32.totalorder %s170, %s171
      %p183 = scmp.eq.s32.totalorder %s20, 1
      %p184 = por %p182, %p183
      %p186 = scmp.ne.s32.totalorder %s171, %s185
      %p187 = scmp.eq.s32.totalorder %s20, 0
      %p188 = por %p186, %p187
      %p189 = scmp.le.s32.totalorder 1, %s14
      %p190 = scmp.lt.s32.totalorder %s14, 3
      %p191 = pnand %p189, %p190
      %p192 = pneg %p191
      // Predicated region
      $region9: #{feature_reconstruction_loss.5} parent=5 // pred_check
        _
      $region10: #{feature_reconstruction_loss.5} parent=5 // pred_check_branch
        %194 = sbr.rel (%p191) target = $region12
      $region11: #{feature_reconstruction_loss.5} parent=5 // pred_region
        %s195 = ssub.s32 %s14, 1
        // Predicated region
        $region13: #{feature_reconstruction_loss.5} parent=11 // pred_check
          %p196 = pneg %p87
        $region14: #{feature_reconstruction_loss.5} parent=11 // pred_check_branch
          %198 = sbr.rel (%p196) target = $region16
        $region15: #{feature_reconstruction_loss.5} parent=11 // pred_region
          _
        $region16: #{feature_reconstruction_loss.5} parent=11 // pred_fallthru
          _
        // Predicated region
        $region17: #{feature_reconstruction_loss.5} parent=11 // pred_check
          %p199 = pneg %p108
        $region18: #{feature_reconstruction_loss.5} parent=11 // pred_check_branch
          %201 = sbr.rel (%p199) target = $region20
        $region19: #{feature_reconstruction_loss.5} parent=11 // pred_region
          _
        $region20: #{feature_reconstruction_loss.5} parent=11 // pred_fallthru
          _
      $region12: #{feature_reconstruction_loss.5} parent=5 // pred_fallthru
        _
      %p202 = scmp.lt.s32.totalorder %s14, 2
      // Predicated region
      $region21: #{feature_reconstruction_loss.5} parent=5 // pred_check
        %p203 = pneg %p202
      $region22: #{feature_reconstruction_loss.5} parent=5 // pred_check_branch
        %205 = sbr.rel (%p203) target = $region24
      $region23: #{feature_reconstruction_loss.5} parent=5 // pred_region
        // Predicated region
        $region25: #{feature_reconstruction_loss.5} parent=23 // pred_check
          %p206 = pneg %p34
        $region26: #{feature_reconstruction_loss.5} parent=23 // pred_check_branch
          %208 = sbr.rel (%p206) target = $region28
        $region27: #{feature_reconstruction_loss.5} parent=23 // pred_region
          %s209 = sand.u32 %s24, 1
          %s210 = sand.u32 %s24, 1
          %s211 = smul.addr %s210, 16
          %s212 = scalar_lea.vmem [#allocation3], %s211
          %s213 = smul.u32 2, %s14
          %s214 = smul.addr %s213, 4
          %s215 = scalar_lea.vmem %s0, %s214
          // Predicated region
          $region29: #{feature_reconstruction_loss.5} parent=27 // pred_check
            _
          $region30: #{feature_reconstruction_loss.5} parent=27 // pred_check_branch
            %217 = sbr.rel (0) target = $region32
          $region31: #{feature_reconstruction_loss.5} parent=27 // pred_region
            // Predicated region
            $region33: #{feature_reconstruction_loss.5} parent=31 // pred_check
              _
            $region34: #{feature_reconstruction_loss.5} parent=31 // pred_check_branch
              %219 = sbr.rel (0) target = $region36
            $region35: #{feature_reconstruction_loss.5} parent=31 // pred_region
              // Predicated region
              $region48: #{feature_reconstruction_loss.5} parent=35 // pred_check
                _
              $region49: #{feature_reconstruction_loss.5} parent=35 // pred_check_branch
                %237 = sbr.rel (0) target = $region51
              $region50: #{feature_reconstruction_loss.5} parent=35 // pred_region
                loop: start=0, step=1, limit=1
                $region52: #{feature_reconstruction_loss.5} parent=50 // loop_pre_header
                  _
                $region53: #{feature_reconstruction_loss.5} parent=50 // loop_header
                  %s239 = sphi 0, %s243
                  %p240 = scmp.ge.s32.totalorder %s239, 1
                  %s244 = sphi %s215, %s215
                  %s245 = sphi %s212, %s212
                $region54: #{feature_reconstruction_loss.5} parent=50 // loop_header_branch
                  %242 = sbr.rel (%p240) target = $region58
                $region55: #{feature_reconstruction_loss.5} parent=50 // loop_body
                  %v246 = vld [vmem:[%s244] sm:$0xff]
                  %247 = vst [vmem:[%s245] sm:$0xff] %v246
                  %v248 = vld [vmem:[%s244 + $0x10] sm:$0xff]
                  %249 = vst [vmem:[%s245 + $0x8] sm:$0xff] %v248
                $region56: #{feature_reconstruction_loss.5} parent=50 // loop_footer
                  %s243 = sadd.s32 1, %s239
                $region57: #{feature_reconstruction_loss.5} parent=50 // loop_footer_branch
                  %238 = sbr.rel target = $region53
                $region58: #{feature_reconstruction_loss.5} parent=50 // loop_exit
                  _
              $region51: #{feature_reconstruction_loss.5} parent=35 // pred_fallthru
                _
              // Predicated region
              $region59: #{feature_reconstruction_loss.5} parent=35 // pred_check
                _
              $region60: #{feature_reconstruction_loss.5} parent=35 // pred_check_branch
                %251 = sbr.rel target = $region62
              $region61: #{feature_reconstruction_loss.5} parent=35 // pred_region
                _
              $region62: #{feature_reconstruction_loss.5} parent=35 // pred_fallthru
                _
            $region36: #{feature_reconstruction_loss.5} parent=31 // pred_fallthru
              _
            // Predicated region
            $region37: #{feature_reconstruction_loss.5} parent=31 // pred_check
              _
            $region38: #{feature_reconstruction_loss.5} parent=31 // pred_check_branch
              %221 = sbr.rel target = $region40
            $region39: #{feature_reconstruction_loss.5} parent=31 // pred_region
              %s223 = ssub.s32 256, 1
              loop: start=0, step=1, limit=1
              $region41: #{feature_reconstruction_loss.5} parent=39 // loop_pre_header
                _
              $region42: #{feature_reconstruction_loss.5} parent=39 // loop_header
                %s225 = sphi 0, %s229
                %p226 = scmp.ge.s32.totalorder %s225, 1
                %s230 = sphi %s215, %s215
                %s231 = sphi %s212, %s212
              $region43: #{feature_reconstruction_loss.5} parent=39 // loop_header_branch
                %228 = sbr.rel (%p226) target = $region47
              $region44: #{feature_reconstruction_loss.5} parent=39 // loop_body
                %v232 = vld [vmem:[%s230] sm:%s223]
                %233 = vst [vmem:[%s231] sm:%s223] %v232
                %v234 = vld [vmem:[%s230 + $0x10] sm:%s223]
                %235 = vst [vmem:[%s231 + $0x8] sm:%s223] %v234
              $region45: #{feature_reconstruction_loss.5} parent=39 // loop_footer
                %s229 = sadd.s32 1, %s225
              $region46: #{feature_reconstruction_loss.5} parent=39 // loop_footer_branch
                %224 = sbr.rel target = $region42
              $region47: #{feature_reconstruction_loss.5} parent=39 // loop_exit
                _
            $region40: #{feature_reconstruction_loss.5} parent=31 // pred_fallthru
              _
          $region32: #{feature_reconstruction_loss.5} parent=27 // pred_fallthru
            _
          %252 = vnop
        $region28: #{feature_reconstruction_loss.5} parent=23 // pred_fallthru
          _
        // Predicated region
        $region63: #{feature_reconstruction_loss.5} parent=23 // pred_check
          %p253 = pneg %p60
        $region64: #{feature_reconstruction_loss.5} parent=23 // pred_check_branch
          %255 = sbr.rel (%p253) target = $region66
        $region65: #{feature_reconstruction_loss.5} parent=23 // pred_region
          %s256 = sand.u32 %s50, 1
          %s257 = sand.u32 %s50, 1
          %s258 = smul.addr %s257, 16
          %s259 = scalar_lea.vmem [#allocation4], %s258
          %s260 = smul.u32 2, %s14
          %s261 = smul.addr %s260, 4
          %s262 = scalar_lea.vmem %s1, %s261
          // Predicated region
          $region67: #{feature_reconstruction_loss.5} parent=65 // pred_check
            _
          $region68: #{feature_reconstruction_loss.5} parent=65 // pred_check_branch
            %264 = sbr.rel (0) target = $region70
          $region69: #{feature_reconstruction_loss.5} parent=65 // pred_region
            // Predicated region
            $region71: #{feature_reconstruction_loss.5} parent=69 // pred_check
              _
            $region72: #{feature_reconstruction_loss.5} parent=69 // pred_check_branch
              %266 = sbr.rel (0) target = $region74
            $region73: #{feature_reconstruction_loss.5} parent=69 // pred_region
              // Predicated region
              $region86: #{feature_reconstruction_loss.5} parent=73 // pred_check
                _
              $region87: #{feature_reconstruction_loss.5} parent=73 // pred_check_branch
                %284 = sbr.rel (0) target = $region89
              $region88: #{feature_reconstruction_loss.5} parent=73 // pred_region
                loop: start=0, step=1, limit=1
                $region90: #{feature_reconstruction_loss.5} parent=88 // loop_pre_header
                  _
                $region91: #{feature_reconstruction_loss.5} parent=88 // loop_header
                  %s286 = sphi 0, %s290
                  %p287 = scmp.ge.s32.totalorder %s286, 1
                  %s291 = sphi %s262, %s262
                  %s292 = sphi %s259, %s259
                $region92: #{feature_reconstruction_loss.5} parent=88 // loop_header_branch
                  %289 = sbr.rel (%p287) target = $region96
                $region93: #{feature_reconstruction_loss.5} parent=88 // loop_body
                  %v293 = vld [vmem:[%s291] sm:$0xff]
                  %294 = vst [vmem:[%s292] sm:$0xff] %v293
                  %v295 = vld [vmem:[%s291 + $0x10] sm:$0xff]
                  %296 = vst [vmem:[%s292 + $0x8] sm:$0xff] %v295
                $region94: #{feature_reconstruction_loss.5} parent=88 // loop_footer
                  %s290 = sadd.s32 1, %s286
                $region95: #{feature_reconstruction_loss.5} parent=88 // loop_footer_branch
                  %285 = sbr.rel target = $region91
                $region96: #{feature_reconstruction_loss.5} parent=88 // loop_exit
                  _
              $region89: #{feature_reconstruction_loss.5} parent=73 // pred_fallthru
                _
              // Predicated region
              $region97: #{feature_reconstruction_loss.5} parent=73 // pred_check
                _
              $region98: #{feature_reconstruction_loss.5} parent=73 // pred_check_branch
                %298 = sbr.rel target = $region100
              $region99: #{feature_reconstruction_loss.5} parent=73 // pred_region
                _
              $region100: #{feature_reconstruction_loss.5} parent=73 // pred_fallthru
                _
            $region74: #{feature_reconstruction_loss.5} parent=69 // pred_fallthru
              _
            // Predicated region
            $region75: #{feature_reconstruction_loss.5} parent=69 // pred_check
              _
            $region76: #{feature_reconstruction_loss.5} parent=69 // pred_check_branch
              %268 = sbr.rel target = $region78
            $region77: #{feature_reconstruction_loss.5} parent=69 // pred_region
              %s270 = ssub.s32 256, 1
              loop: start=0, step=1, limit=1
              $region79: #{feature_reconstruction_loss.5} parent=77 // loop_pre_header
                _
              $region80: #{feature_reconstruction_loss.5} parent=77 // loop_header
                %s272 = sphi 0, %s276
                %p273 = scmp.ge.s32.totalorder %s272, 1
                %s277 = sphi %s262, %s262
                %s278 = sphi %s259, %s259
              $region81: #{feature_reconstruction_loss.5} parent=77 // loop_header_branch
                %275 = sbr.rel (%p273) target = $region85
              $region82: #{feature_reconstruction_loss.5} parent=77 // loop_body
                %v279 = vld [vmem:[%s277] sm:%s270]
                %280 = vst [vmem:[%s278] sm:%s270] %v279
                %v281 = vld [vmem:[%s277 + $0x10] sm:%s270]
                %282 = vst [vmem:[%s278 + $0x8] sm:%s270] %v281
              $region83: #{feature_reconstruction_loss.5} parent=77 // loop_footer
                %s276 = sadd.s32 1, %s272
              $region84: #{feature_reconstruction_loss.5} parent=77 // loop_footer_branch
                %271 = sbr.rel target = $region80
              $region85: #{feature_reconstruction_loss.5} parent=77 // loop_exit
                _
            $region78: #{feature_reconstruction_loss.5} parent=69 // pred_fallthru
              _
          $region70: #{feature_reconstruction_loss.5} parent=65 // pred_fallthru
            _
          %299 = vnop
        $region66: #{feature_reconstruction_loss.5} parent=23 // pred_fallthru
          _
      $region24: #{feature_reconstruction_loss.5} parent=5 // pred_fallthru
        _
      %p300 = scmp.le.s32.totalorder 1, %s14
      %p301 = scmp.lt.s32.totalorder %s14, 3
      %p302 = pnand %p300, %p301
      %p303 = pneg %p302
      // Predicated region
      $region101: #{feature_reconstruction_loss.5} parent=5 // pred_check
        _
      $region102: #{feature_reconstruction_loss.5} parent=5 // pred_check_branch
        %305 = sbr.rel (%p302) target = $region104
      $region103: #{feature_reconstruction_loss.5} parent=5 // pred_region
        %s306 = ssub.s32 %s14, 1
        %s307 = sand.u32 %s27, 1
        %s308 = sand.u32 %s27, 1
        %s309 = smul.addr %s308, 16
        %s310 = scalar_lea.vmem [#allocation3], %s309
        // Predicated region
        $region105: #{feature_reconstruction_loss.5} parent=103 // pred_check
          %p311 = pneg %p40
        $region106: #{feature_reconstruction_loss.5} parent=103 // pred_check_branch
          %313 = sbr.rel (%p311) target = $region108
        $region107: #{feature_reconstruction_loss.5} parent=103 // pred_region
          _
        $region108: #{feature_reconstruction_loss.5} parent=103 // pred_fallthru
          _
        %s314 = sand.u32 %s53, 1
        %s315 = sand.u32 %s53, 1
        %s316 = smul.addr %s315, 16
        %s317 = scalar_lea.vmem [#allocation4], %s316
        // Predicated region
        $region109: #{feature_reconstruction_loss.5} parent=103 // pred_check
          %p318 = pneg %p66
        $region110: #{feature_reconstruction_loss.5} parent=103 // pred_check_branch
          %320 = sbr.rel (%p318) target = $region112
        $region111: #{feature_reconstruction_loss.5} parent=103 // pred_region
          _
        $region112: #{feature_reconstruction_loss.5} parent=103 // pred_fallthru
          _
        %s321 = sand.u32 %s27, 1
        %s322 = sand.u32 %s27, 1
        %s323 = smul.addr %s322, 16
        %s324 = scalar_lea.vmem [#allocation3], %s323
        %p325 = pneg %p40
        %p326 = pneg %p37
        %s327 = sand.u32 %s53, 1
        %s328 = sand.u32 %s53, 1
        %s329 = smul.addr %s328, 16
        %s330 = scalar_lea.vmem [#allocation4], %s329
        %p331 = pneg %p66
        %p332 = pneg %p63
        %p333 = pneg %p87
        %p334 = pneg %p84
        %p335 = pneg %p108
        %p336 = pneg %p105
        %p337 = pneg %p134
        %p338 = pneg %p131
        %s339 = smul.u32 2, %s19
        %p340 = scmp.lt.s32.totalorder %s339, 3
        %s341 = scalar_select %p340, %s339, 3
        %s342 = smul.addr %s341, 4
        %s343 = scalar_lea.vmem %s4, %s342
        %p344 = pneg %p160
        %p345 = pneg %p157
        %s346 = smul.u32 2, %s19
        %p347 = scmp.lt.s32.totalorder %s346, 3
        %s348 = scalar_select %p347, %s346, 3
        %s349 = smul.addr %s348, 4
        %s350 = scalar_lea.vmem %s5, %s349
        %p351 = pneg %p181
        %p352 = pneg %p178
        %s353 = smul.u32 2, %s19
        %s354 = smul.u32 2, %s19
        %s355 = smul.u32 2, %s19
        %p356 = scmp.lt.s32.totalorder %s355, 3
        %s357 = scalar_select %p356, %s355, 3
        %s358 = smul.addr %s357, 4
        %s359 = scalar_lea.vmem %s4, %s358
        %s360 = smul.u32 2, %s19
        %s361 = smul.u32 2, %s19
        %p362 = scmp.lt.s32.totalorder %s361, 3
        %s363 = scalar_select %p362, %s361, 3
        %s364 = smul.addr %s363, 4
        %s365 = scalar_lea.vmem %s5, %s364
        %s366 = smul.u32 2, %s19
        %p368 = scmp.eq.s32.totalorder %s19, 0
        // Predicated region
        $region113: #{feature_reconstruction_loss.5} parent=103 // pred_check
          %p369 = pneg %p368
        $region114: #{feature_reconstruction_loss.5} parent=103 // pred_check_branch
          %371 = sbr.rel (%p369) target = $region116
        $region115: #{feature_reconstruction_loss.5} parent=103 // pred_region
          %v372 = vlaneseq
          %vm373 = vcmp.ge.s32.totalorder %v372, 0
          %vm374 = vcmp.lt.s32.totalorder %v372, 256
          %vm375 = vmand %vm373, %vm374
          %376 = vst.msk [vmem:[#allocation2] sm:$0x3] %vm375, 0.0
        $region116: #{feature_reconstruction_loss.5} parent=103 // pred_fallthru
          _
        %v377 = vld [vmem:[%s2] sm:$0xf]
        %v378 = vld [vmem:[%s3] sm:$0xff]
        %v379 = vld [vmem:[%s310] sm:$0xff]
        %v380 = vld [vmem:[%s310 + $0x8] sm:$0x11]
        %382 = vset.pattern.permute.xlu0 0
        %383 = vperm.xlu0 %382, %v378
        %v384 = vpop.permute.xlu0 %383
        %v388 = vunpack.c.l.b16 %v379
        %v389 = vunpack.c.h.b16 %v379
        %v390 = vunpack.c.l.b16 %v380
        %v391 = vunpack.c.h.b16 %v380
        %v392 = vpack.c.b16 %v390, %v388
        %v393 = vpack.c.b16 %v391, %v389
        %vm394 = vcmask 72704
        %v396 = vsel %vm394, %v377, 0
        %vm398 = vcmask 1043456
        %vm399 = vcmask 1044480
        %v400 = vsel %vm398, 4294967295, 65535
        %v401 = vsel %vm399, %v400, 0
        %v403 = vand.u32 %v392, %v401
        %v406 = vand.u32 %v393, %v401
        %408 = vmatpush.bf16.msra.mxu0 0
        %409 = vmatpush.bf16.msra.mxu0 0
        %410 = vmatpush.bf16.msra.mxu0 0
        %411 = vmatpush.bf16.msra.mxu0 0
        %412 = vmatpush.bf16.msra.mxu0 0
        %413 = vmatpush.bf16.msra.mxu0 0
        %414 = vmatpush.bf16.msra.mxu0 0
        %415 = vmatpush.bf16.msra.mxu0 %v403
        %416 = vmatmul.bf16.gmra.mxu0 %v396
        %v417 = vpop.f32.mrf.mxu0
        %v418 = vadd.f32 %v384, %v417
        %v419 = vpop.f32.mrf.mxu0
        %420 = vdwg.mxu0
        %421 = vmatpush.bf16.msra.mxu0 0
        %422 = vmatpush.bf16.msra.mxu0 0
        %423 = vmatpush.bf16.msra.mxu0 0
        %424 = vmatpush.bf16.msra.mxu0 0
        %425 = vmatpush.bf16.msra.mxu0 0
        %426 = vmatpush.bf16.msra.mxu0 0
        %427 = vmatpush.bf16.msra.mxu0 0
        %428 = vmatpush.bf16.msra.mxu0 %v406
        %429 = vmatmul.bf16.gmra.mxu0 %v396
        %v430 = vpop.f32.mrf.mxu0
        %v431 = vadd.f32 %v384, %v430
        %v432 = vpop.f32.mrf.mxu0
        %433 = vdwg.mxu0
        %v434 = vld [vmem:[%s317] sm:$0xff]
        %v435 = vld [vmem:[%s317 + $0x8] sm:$0x11]
        %v438 = vunpack.c.l.b16 %v434
        %v439 = vunpack.c.h.b16 %v434
        %v440 = vunpack.c.l.b16 %v435
        %v441 = vunpack.c.h.b16 %v435
        %v442 = vpack.c.b16 %v440, %v438
        %v443 = vpack.c.b16 %v441, %v439
        %v445 = vand.u32 %v442, %v401
        %v448 = vand.u32 %v443, %v401
        %450 = vmatpush.bf16.msra.mxu0 0
        %451 = vmatpush.bf16.msra.mxu0 0
        %452 = vmatpush.bf16.msra.mxu0 0
        %453 = vmatpush.bf16.msra.mxu0 0
        %454 = vmatpush.bf16.msra.mxu0 0
        %455 = vmatpush.bf16.msra.mxu0 0
        %456 = vmatpush.bf16.msra.mxu0 0
        %457 = vmatpush.bf16.msra.mxu0 %v445
        %458 = vmatmul.bf16.gmra.mxu0 %v396
        %v459 = vpop.f32.mrf.mxu0
        %v460 = vadd.f32 %v384, %v459
        %v461 = vpop.f32.mrf.mxu0
        %462 = vdwg.mxu0
        %463 = vmatpush.bf16.msra.mxu0 0
        %464 = vmatpush.bf16.msra.mxu0 0
        %465 = vmatpush.bf16.msra.mxu0 0
        %466 = vmatpush.bf16.msra.mxu0 0
        %467 = vmatpush.bf16.msra.mxu0 0
        %468 = vmatpush.bf16.msra.mxu0 0
        %469 = vmatpush.bf16.msra.mxu0 0
        %470 = vmatpush.bf16.msra.mxu0 %v448
        %471 = vmatmul.bf16.gmra.mxu0 %v396
        %v472 = vpop.f32.mrf.mxu0
        %v473 = vadd.f32 %v384, %v472
        %v474 = vpop.f32.mrf.mxu0
        %475 = vdwg.mxu0
        %v476 = vsub.f32 %v418, %v460
        %v477 = vsub.f32 %v431, %v473
        %v478 = vld [vmem:[#allocation2] sm:$0x3]
        %v479 = vmul.f32 %v476, %v476
        %v480 = vmul.f32 %v477, %v477
        %v481 = vrot.slane %v479, 4
        %v482 = vadd.f32 %v479, %v481
        %v483 = vrot.slane %v482, 2
        %v484 = vadd.f32 %v482, %v483
        %v485 = vrot.slane %v484, 1
        %v486 = vadd.f32 %v484, %v485
        %v487 = vrot.slane %v480, 4
        %v488 = vadd.f32 %v480, %v487
        %v489 = vrot.slane %v488, 2
        %v490 = vadd.f32 %v488, %v489
        %v491 = vrot.slane %v490, 1
        %v492 = vadd.f32 %v490, %v491
        %v495 = vrot.slane %v492, 7
        %vm496 = vcmask 1040384
        %v497 = vsel %vm496, %v486, %v495
        %v499 = vadd.f32 %v478, %v497
        %v500 = vlaneseq
        %vm501 = vcmp.ge.s32.totalorder %v500, 0
        %vm502 = vcmp.lt.s32.totalorder %v500, 256
        %vm503 = vmand %vm501, %vm502
        %504 = vst.msk [vmem:[#allocation2] sm:$0x3] %vm503, %v499
        %v505 = vmax.f32 %v418, 0.0
        %v506 = vmax.f32 %v431, 0.0
        %v507 = vpack.c.bf16 %v506, %v505
        %508 = vst [vmem:[%s359] sm:$0xff] %v507
        %v509 = vmax.f32 %v460, 0.0
        %v510 = vmax.f32 %v473, 0.0
        %v511 = vpack.c.bf16 %v510, %v509
        %512 = vst [vmem:[%s365] sm:$0xff] %v511
        %p513 = scmp.eq.s32.totalorder %s19, 1
        // Predicated region
        $region117: #{feature_reconstruction_loss.5} parent=103 // pred_check
          %p514 = pneg %p513
        $region118: #{feature_reconstruction_loss.5} parent=103 // pred_check_branch
          %516 = sbr.rel (%p514) target = $region120
        $region119: #{feature_reconstruction_loss.5} parent=103 // pred_region
          %v517 = vld [vmem:[#allocation2] sm:$0x3]
          %v519 = vperm.slane %v517, 0
          %v520 = vperm.slane %v517, 1
          %v523 = vsel %vm496, %v519, 0.0
          %v524 = vsel %vm496, %v520, 0.0
          %v525 = vadd.f32 %v523, %v524
          %526 = vadd.xlane.f32.xlu0 %v525
          %v527 = vpop.xlane.xlu0 %526
          %v528 = vrot.slane %v527, 4
          %v529 = vadd.f32 %v527, %v528
          %v530 = vrot.slane %v529, 2
          %v531 = vadd.f32 %v529, %v530
          %v532 = vrot.slane %v531, 1
          %v533 = vadd.f32 %v531, %v532
          %s534 = vtos %v533
          %s535 = scalar_lea.smem [#allocation5], 0
          %536 = sst [smem:[%s535]] %s534
        $region120: #{feature_reconstruction_loss.5} parent=103 // pred_fallthru
          _
        %s537 = smul.u32 2, %s19
        %p538 = scmp.lt.s32.totalorder %s537, 3
        %s539 = scalar_select %p538, %s537, 3
        %s540 = smul.addr %s539, 4
        %s541 = scalar_lea.vmem %s4, %s540
        %s542 = smul.u32 2, %s19
        %p543 = scmp.lt.s32.totalorder %s542, 3
        %s544 = scalar_select %p543, %s542, 3
        %s545 = smul.addr %s544, 4
        %s546 = scalar_lea.vmem %s5, %s545
        // Predicated region
        $region121: #{feature_reconstruction_loss.5} parent=103 // pred_check
          %p547 = pneg %p131
        $region122: #{feature_reconstruction_loss.5} parent=103 // pred_check_branch
          %549 = sbr.rel (%p547) target = $region124
        $region123: #{feature_reconstruction_loss.5} parent=103 // pred_region
          %s550 = smul.u32 2, %s19
        $region124: #{feature_reconstruction_loss.5} parent=103 // pred_fallthru
          _
        // Predicated region
        $region125: #{feature_reconstruction_loss.5} parent=103 // pred_check
          %p551 = pneg %p157
        $region126: #{feature_reconstruction_loss.5} parent=103 // pred_check_branch
          %553 = sbr.rel (%p551) target = $region128
        $region127: #{feature_reconstruction_loss.5} parent=103 // pred_region
          %s554 = smul.u32 2, %s19
        $region128: #{feature_reconstruction_loss.5} parent=103 // pred_fallthru
          _
        // Predicated region
        $region129: #{feature_reconstruction_loss.5} parent=103 // pred_check
          %p555 = pneg %p178
        $region130: #{feature_reconstruction_loss.5} parent=103 // pred_check_branch
          %557 = sbr.rel (%p555) target = $region132
        $region131: #{feature_reconstruction_loss.5} parent=103 // pred_region
          %559 = vsyncadd [#allocation6], 0
          %s561 = sshll.u32 %s6, 4
          %s562 = int_to_ptr.hbm [resolvable:$true] %s561
          %564 = dma.smem_to_hbm [#allocation5], 16, %s562, [#allocation6]
        $region132: #{feature_reconstruction_loss.5} parent=103 // pred_fallthru
          _
        // Predicated region
        $region133: #{feature_reconstruction_loss.5} parent=103 // pred_check
          %p565 = pneg %p178
        $region134: #{feature_reconstruction_loss.5} parent=103 // pred_check_branch
          %567 = sbr.rel (%p565) target = $region136
        $region135: #{feature_reconstruction_loss.5} parent=103 // pred_region
          %569 = dma.done [#allocation6], 16
        $region136: #{feature_reconstruction_loss.5} parent=103 // pred_fallthru
          _
        %570 = sfence
      $region104: #{feature_reconstruction_loss.5} parent=5 // pred_fallthru
        _
      %p571 = scmp.le.s32.totalorder 2, %s14
      // Predicated region
      $region137: #{feature_reconstruction_loss.5} parent=5 // pred_check
        %p572 = pneg %p571
      $region138: #{feature_reconstruction_loss.5} parent=5 // pred_check_branch
        %574 = sbr.rel (%p572) target = $region140
      $region139: #{feature_reconstruction_loss.5} parent=5 // pred_region
        %s575 = ssub.s32 %s14, 2
        // Predicated region
        $region141: #{feature_reconstruction_loss.5} parent=139 // pred_check
          %p576 = pneg %p137
        $region142: #{feature_reconstruction_loss.5} parent=139 // pred_check_branch
          %578 = sbr.rel (%p576) target = $region144
        $region143: #{feature_reconstruction_loss.5} parent=139 // pred_region
          %s579 = smul.u32 2, %s20
          %p580 = scmp.lt.s32.totalorder %s579, 3
          %s581 = scalar_select %p580, %s579, 3
          %s582 = smul.addr %s581, 4
          %s583 = scalar_lea.vmem %s4, %s582
        $region144: #{feature_reconstruction_loss.5} parent=139 // pred_fallthru
          _
        // Predicated region
        $region145: #{feature_reconstruction_loss.5} parent=139 // pred_check
          %p584 = pneg %p163
        $region146: #{feature_reconstruction_loss.5} parent=139 // pred_check_branch
          %586 = sbr.rel (%p584) target = $region148
        $region147: #{feature_reconstruction_loss.5} parent=139 // pred_region
          %s587 = smul.u32 2, %s20
          %p588 = scmp.lt.s32.totalorder %s587, 3
          %s589 = scalar_select %p588, %s587, 3
          %s590 = smul.addr %s589, 4
          %s591 = scalar_lea.vmem %s5, %s590
        $region148: #{feature_reconstruction_loss.5} parent=139 // pred_fallthru
          _
      $region140: #{feature_reconstruction_loss.5} parent=5 // pred_fallthru
        _
    $region6: #{feature_reconstruction_loss.5} parent=1 // loop_footer
      %s18 = sadd.s32 1, %s14
    $region7: #{feature_reconstruction_loss.5} parent=1 // loop_footer_branch
      %13 = sbr.rel target = $region3
    $region8: #{feature_reconstruction_loss.5} parent=1 // loop_exit
      _
    %592 = vsyncpa [#allocation6], 1
    %s593 = scalar_lea.sflag [#allocation6], 1
    %594 = vsyncpa %s593, 1

// kernel: feature_reconstruction_loss.6
$region0: #{feature_reconstruction_loss.6}
  #allocation0 [shape = 'u32[]', space=smem, size = 0x4, offset = 0x4, fixed_abs, tag = 'smem constant byte address 0x4 - core index']
  #allocation1 [shape = 'u32[72,128]{1,0:T(1,128)}', space=vmem, size = 0x9000, scoped, tag = 'internal scratch']
  #allocation2 [shape = 'f32[1,256]{1,0:T(1,128)}', space=vmem, size = 0x400, scoped, tag = 'scratch operand']
  %s0 = inlined_call_operand.vmem [shape: bf16[72,512], index: 0, kind: input, shape index: {}]
  %s1 = inlined_call_operand.vmem [shape: bf16[72,512], index: 1, kind: input, shape index: {}]
  %s2 = inlined_call_operand.vmem [shape: bf16[8,72], index: 2, kind: input, shape index: {}]
  %s3 = inlined_call_operand.vmem [shape: f32[8,1], index: 3, kind: input, shape index: {}]
  %s4 = inlined_call_operand.vmem [shape: bf16[8,512], index: 4, kind: output, shape index: {0}]
  %s5 = inlined_call_operand.vmem [shape: bf16[8,512], index: 5, kind: output, shape index: {1}]
  %s6 = inlined_call_operand.hbm [shape: f32[1,1], index: 6, kind: output, shape index: {2}]
  %7 = xla_tuple %s4, %s5, %s6
  %s8 = sld [smem:[#allocation0]]
  $region149: #{feature_reconstruction_loss.6} parent=0
    _
  %s10 = ssub.s32 1, %s8
  %s11 = scalar_select 0, %s10, %s8
  $region1: #{feature_reconstruction_loss.6} parent=0
    #allocation3 [shape = 'u8[73728]{0}', space=vmem, size = 0x12000, scoped, tag = 'input window, operand 0']
    #allocation4 [shape = 'u8[73728]{0}', space=vmem, size = 0x12000, scoped, tag = 'input window, operand 1']
    #allocation5 [shape = 'u8[512]{0}', space=smem, size = 0x200, scoped, tag = 'output window, operand 2, single buffered']
    #allocation6 [shape = 's32[2]{0}', space=sflag, size = 0x8, scoped, tag = 'scoped memory for feature_reconstruction_loss.6']
    %12 = vsyncpa [#allocation6], 0
    loop: start=0, step=1, limit=4
    $region2: #{feature_reconstruction_loss.6} parent=1 // loop_pre_header
      _
    $region3: #{feature_reconstruction_loss.6} parent=1 // loop_header
      %s14 = sphi 0, %s18
      %p15 = scmp.ge.s32.totalorder %s14, 4
      %s24 = sphi 0, %s26
      %s27 = sphi 0, %s24
      %s28 = sphi 0, %s27
      %s44 = sphi 0, %s28
      %s50 = sphi 0, %s52
      %s53 = sphi 0, %s50
      %s54 = sphi 0, %s53
      %s70 = sphi 0, %s54
      %s74 = sphi 0, %s74
      %s76 = sphi 0, %s74
      %s77 = sphi 0, %s76
      %s91 = sphi 0, %s77
      %s95 = sphi 0, %s95
      %s97 = sphi 0, %s95
      %s98 = sphi 0, %s97
      %s112 = sphi 0, %s98
      %s118 = sphi 0, %s120
      %s121 = sphi 0, %s118
      %s122 = sphi 0, %s121
      %s138 = sphi 0, %s122
      %s144 = sphi 0, %s146
      %s147 = sphi 0, %s144
      %s148 = sphi 0, %s147
      %s164 = sphi 0, %s148
      %s168 = sphi 0, %s168
      %s170 = sphi 0, %s168
      %s171 = sphi 0, %s170
      %s185 = sphi 0, %s171
    $region4: #{feature_reconstruction_loss.6} parent=1 // loop_header_branch
      %17 = sbr.rel (%p15) target = $region8
    $region5: #{feature_reconstruction_loss.6} parent=1 // loop_body
      %s19 = ssub.s32 %s14, 1
      %s20 = ssub.s32 %s14, 2
      %s21 = sadd.s32 %s14, 1
      %s22 = ssub.s32 %s14, %s21
      %p23 = scmp.eq.s32.totalorder %s22, 0
      %s25 = sadd.s32 %s24, 1
      %s26 = scalar_select %p23, %s24, %s25
      %p29 = pneg %p23
      %p30 = scmp.eq.s32.totalorder %s14, 1
      %p31 = por %p29, %p30
      %p32 = scmp.ne.s32.totalorder %s24, %s27
      %p33 = scmp.eq.s32.totalorder %s14, 0
      %p34 = por %p32, %p33
      %p35 = scmp.ne.s32.totalorder %s24, %s27
      %p36 = scmp.eq.s32.totalorder %s19, 1
      %p37 = por %p35, %p36
      %p38 = scmp.ne.s32.totalorder %s27, %s28
      %p39 = scmp.eq.s32.totalorder %s19, 0
      %p40 = por %p38, %p39
      %p41 = scmp.ne.s32.totalorder %s27, %s28
      %p42 = scmp.eq.s32.totalorder %s20, 1
      %p43 = por %p41, %p42
      %p45 = scmp.ne.s32.totalorder %s28, %s44
      %p46 = scmp.eq.s32.totalorder %s20, 0
      %p47 = por %p45, %p46
      %s48 = ssub.s32 %s14, %s21
      %p49 = scmp.eq.s32.totalorder %s48, 0
      %s51 = sadd.s32 %s50, 1
      %s52 = scalar_select %p49, %s50, %s51
      %p55 = pneg %p49
      %p56 = scmp.eq.s32.totalorder %s14, 1
      %p57 = por %p55, %p56
      %p58 = scmp.ne.s32.totalorder %s50, %s53
      %p59 = scmp.eq.s32.totalorder %s14, 0
      %p60 = por %p58, %p59
      %p61 = scmp.ne.s32.totalorder %s50, %s53
      %p62 = scmp.eq.s32.totalorder %s19, 1
      %p63 = por %p61, %p62
      %p64 = scmp.ne.s32.totalorder %s53, %s54
      %p65 = scmp.eq.s32.totalorder %s19, 0
      %p66 = por %p64, %p65
      %p67 = scmp.ne.s32.totalorder %s53, %s54
      %p68 = scmp.eq.s32.totalorder %s20, 1
      %p69 = por %p67, %p68
      %p71 = scmp.ne.s32.totalorder %s54, %s70
      %p72 = scmp.eq.s32.totalorder %s20, 0
      %p73 = por %p71, %p72
      %s75 = sadd.s32 %s74, 1
      %p78 = scmp.eq.s32.totalorder %s14, 1
      %p79 = scmp.ne.s32.totalorder %s74, %s76
      %p80 = scmp.eq.s32.totalorder %s14, 0
      %p81 = por %p79, %p80
      %p82 = scmp.ne.s32.totalorder %s74, %s76
      %p83 = scmp.eq.s32.totalorder %s19, 1
      %p84 = por %p82, %p83
      %p85 = scmp.ne.s32.totalorder %s76, %s77
      %p86 = scmp.eq.s32.totalorder %s19, 0
      %p87 = por %p85, %p86
      %p88 = scmp.ne.s32.totalorder %s76, %s77
      %p89 = scmp.eq.s32.totalorder %s20, 1
      %p90 = por %p88, %p89
      %p92 = scmp.ne.s32.totalorder %s77, %s91
      %p93 = scmp.eq.s32.totalorder %s20, 0
      %p94 = por %p92, %p93
      %s96 = sadd.s32 %s95, 1
      %p99 = scmp.eq.s32.totalorder %s14, 1
      %p100 = scmp.ne.s32.totalorder %s95, %s97
      %p101 = scmp.eq.s32.totalorder %s14, 0
      %p102 = por %p100, %p101
      %p103 = scmp.ne.s32.totalorder %s95, %s97
      %p104 = scmp.eq.s32.totalorder %s19, 1
      %p105 = por %p103, %p104
      %p106 = scmp.ne.s32.totalorder %s97, %s98
      %p107 = scmp.eq.s32.totalorder %s19, 0
      %p108 = por %p106, %p107
      %p109 = scmp.ne.s32.totalorder %s97, %s98
      %p110 = scmp.eq.s32.totalorder %s20, 1
      %p111 = por %p109, %p110
      %p113 = scmp.ne.s32.totalorder %s98, %s112
      %p114 = scmp.eq.s32.totalorder %s20, 0
      %p115 = por %p113, %p114
      %s116 = ssub.s32 %s14, %s21
      %p117 = scmp.eq.s32.totalorder %s116, 0
      %s119 = sadd.s32 %s118, 1
      %s120 = scalar_select %p117, %s118, %s119
      %p123 = pneg %p117
      %p124 = scmp.eq.s32.totalorder %s14, 1
      %p125 = por %p123, %p124
      %p126 = scmp.ne.s32.totalorder %s118, %s121
      %p127 = scmp.eq.s32.totalorder %s14, 0
      %p128 = por %p126, %p127
      %p129 = scmp.ne.s32.totalorder %s118, %s121
      %p130 = scmp.eq.s32.totalorder %s19, 1
      %p131 = por %p129, %p130
      %p132 = scmp.ne.s32.totalorder %s121, %s122
      %p133 = scmp.eq.s32.totalorder %s19, 0
      %p134 = por %p132, %p133
      %p135 = scmp.ne.s32.totalorder %s121, %s122
      %p136 = scmp.eq.s32.totalorder %s20, 1
      %p137 = por %p135, %p136
      %p139 = scmp.ne.s32.totalorder %s122, %s138
      %p140 = scmp.eq.s32.totalorder %s20, 0
      %p141 = por %p139, %p140
      %s142 = ssub.s32 %s14, %s21
      %p143 = scmp.eq.s32.totalorder %s142, 0
      %s145 = sadd.s32 %s144, 1
      %s146 = scalar_select %p143, %s144, %s145
      %p149 = pneg %p143
      %p150 = scmp.eq.s32.totalorder %s14, 1
      %p151 = por %p149, %p150
      %p152 = scmp.ne.s32.totalorder %s144, %s147
      %p153 = scmp.eq.s32.totalorder %s14, 0
      %p154 = por %p152, %p153
      %p155 = scmp.ne.s32.totalorder %s144, %s147
      %p156 = scmp.eq.s32.totalorder %s19, 1
      %p157 = por %p155, %p156
      %p158 = scmp.ne.s32.totalorder %s147, %s148
      %p159 = scmp.eq.s32.totalorder %s19, 0
      %p160 = por %p158, %p159
      %p161 = scmp.ne.s32.totalorder %s147, %s148
      %p162 = scmp.eq.s32.totalorder %s20, 1
      %p163 = por %p161, %p162
      %p165 = scmp.ne.s32.totalorder %s148, %s164
      %p166 = scmp.eq.s32.totalorder %s20, 0
      %p167 = por %p165, %p166
      %s169 = sadd.s32 %s168, 1
      %p172 = scmp.eq.s32.totalorder %s14, 1
      %p173 = scmp.ne.s32.totalorder %s168, %s170
      %p174 = scmp.eq.s32.totalorder %s14, 0
      %p175 = por %p173, %p174
      %p176 = scmp.ne.s32.totalorder %s168, %s170
      %p177 = scmp.eq.s32.totalorder %s19, 1
      %p178 = por %p176, %p177
      %p179 = scmp.ne.s32.totalorder %s170, %s171
      %p180 = scmp.eq.s32.totalorder %s19, 0
      %p181 = por %p179, %p180
      %p182 = scmp.ne.s32.totalorder %s170, %s171
      %p183 = scmp.eq.s32.totalorder %s20, 1
      %p184 = por %p182, %p183
      %p186 = scmp.ne.s32.totalorder %s171, %s185
      %p187 = scmp.eq.s32.totalorder %s20, 0
      %p188 = por %p186, %p187
      %p189 = scmp.le.s32.totalorder 1, %s14
      %p190 = scmp.lt.s32.totalorder %s14, 3
      %p191 = pnand %p189, %p190
      %p192 = pneg %p191
      // Predicated region
      $region9: #{feature_reconstruction_loss.6} parent=5 // pred_check
        _
      $region10: #{feature_reconstruction_loss.6} parent=5 // pred_check_branch
        %194 = sbr.rel (%p191) target = $region12
      $region11: #{feature_reconstruction_loss.6} parent=5 // pred_region
        %s195 = ssub.s32 %s14, 1
        // Predicated region
        $region13: #{feature_reconstruction_loss.6} parent=11 // pred_check
          %p196 = pneg %p87
        $region14: #{feature_reconstruction_loss.6} parent=11 // pred_check_branch
          %198 = sbr.rel (%p196) target = $region16
        $region15: #{feature_reconstruction_loss.6} parent=11 // pred_region
          _
        $region16: #{feature_reconstruction_loss.6} parent=11 // pred_fallthru
          _
        // Predicated region
        $region17: #{feature_reconstruction_loss.6} parent=11 // pred_check
          %p199 = pneg %p108
        $region18: #{feature_reconstruction_loss.6} parent=11 // pred_check_branch
          %201 = sbr.rel (%p199) target = $region20
        $region19: #{feature_reconstruction_loss.6} parent=11 // pred_region
          _
        $region20: #{feature_reconstruction_loss.6} parent=11 // pred_fallthru
          _
      $region12: #{feature_reconstruction_loss.6} parent=5 // pred_fallthru
        _
      %p202 = scmp.lt.s32.totalorder %s14, 2
      // Predicated region
      $region21: #{feature_reconstruction_loss.6} parent=5 // pred_check
        %p203 = pneg %p202
      $region22: #{feature_reconstruction_loss.6} parent=5 // pred_check_branch
        %205 = sbr.rel (%p203) target = $region24
      $region23: #{feature_reconstruction_loss.6} parent=5 // pred_region
        // Predicated region
        $region25: #{feature_reconstruction_loss.6} parent=23 // pred_check
          %p206 = pneg %p34
        $region26: #{feature_reconstruction_loss.6} parent=23 // pred_check_branch
          %208 = sbr.rel (%p206) target = $region28
        $region27: #{feature_reconstruction_loss.6} parent=23 // pred_region
          %s209 = sand.u32 %s24, 1
          %s210 = sand.u32 %s24, 1
          %s211 = smul.addr %s210, 72
          %s212 = scalar_lea.vmem [#allocation3], %s211
          %s213 = smul.u32 2, %s14
          %s214 = smul.addr %s213, 4
          %s215 = scalar_lea.vmem %s0, %s214
          // Predicated region
          $region29: #{feature_reconstruction_loss.6} parent=27 // pred_check
            _
          $region30: #{feature_reconstruction_loss.6} parent=27 // pred_check_branch
            %217 = sbr.rel (0) target = $region32
          $region31: #{feature_reconstruction_loss.6} parent=27 // pred_region
            // Predicated region
            $region33: #{feature_reconstruction_loss.6} parent=31 // pred_check
              _
            $region34: #{feature_reconstruction_loss.6} parent=31 // pred_check_branch
              %219 = sbr.rel (0) target = $region36
            $region35: #{feature_reconstruction_loss.6} parent=31 // pred_region
              // Predicated region
              $region48: #{feature_reconstruction_loss.6} parent=35 // pred_check
                _
              $region49: #{feature_reconstruction_loss.6} parent=35 // pred_check_branch
                %251 = sbr.rel (0) target = $region51
              $region50: #{feature_reconstruction_loss.6} parent=35 // pred_region
                loop: start=0, step=1, limit=1
                $region52: #{feature_reconstruction_loss.6} parent=50 // loop_pre_header
                  _
                $region53: #{feature_reconstruction_loss.6} parent=50 // loop_header
                  %s253 = sphi 0, %s257
                  %p254 = scmp.ge.s32.totalorder %s253, 1
                  %s258 = sphi %s215, %s215
                  %s259 = sphi %s212, %s212
                $region54: #{feature_reconstruction_loss.6} parent=50 // loop_header_branch
                  %256 = sbr.rel (%p254) target = $region58
                $region55: #{feature_reconstruction_loss.6} parent=50 // loop_body
                  %v260 = vld [vmem:[%s258] sm:$0xff]
                  %261 = vst [vmem:[%s259] sm:$0xff] %v260
                  %v262 = vld [vmem:[%s258 + $0x10] sm:$0xff]
                  %263 = vst [vmem:[%s259 + $0x8] sm:$0xff] %v262
                  %v264 = vld [vmem:[%s258 + $0x20] sm:$0xff]
                  %265 = vst [vmem:[%s259 + $0x10] sm:$0xff] %v264
                  %v266 = vld [vmem:[%s258 + $0x30] sm:$0xff]
                  %267 = vst [vmem:[%s259 + $0x18] sm:$0xff] %v266
                  %v268 = vld [vmem:[%s258 + $0x40] sm:$0xff]
                  %269 = vst [vmem:[%s259 + $0x20] sm:$0xff] %v268
                  %v270 = vld [vmem:[%s258 + $0x50] sm:$0xff]
                  %271 = vst [vmem:[%s259 + $0x28] sm:$0xff] %v270
                  %v272 = vld [vmem:[%s258 + $0x60] sm:$0xff]
                  %273 = vst [vmem:[%s259 + $0x30] sm:$0xff] %v272
                  %v274 = vld [vmem:[%s258 + $0x70] sm:$0xff]
                  %275 = vst [vmem:[%s259 + $0x38] sm:$0xff] %v274
                  %v276 = vld [vmem:[%s258 + $0x80] sm:$0xff]
                  %277 = vst [vmem:[%s259 + $0x40] sm:$0xff] %v276
                $region56: #{feature_reconstruction_loss.6} parent=50 // loop_footer
                  %s257 = sadd.s32 1, %s253
                $region57: #{feature_reconstruction_loss.6} parent=50 // loop_footer_branch
                  %252 = sbr.rel target = $region53
                $region58: #{feature_reconstruction_loss.6} parent=50 // loop_exit
                  _
              $region51: #{feature_reconstruction_loss.6} parent=35 // pred_fallthru
                _
              // Predicated region
              $region59: #{feature_reconstruction_loss.6} parent=35 // pred_check
                _
              $region60: #{feature_reconstruction_loss.6} parent=35 // pred_check_branch
                %279 = sbr.rel target = $region62
              $region61: #{feature_reconstruction_loss.6} parent=35 // pred_region
                _
              $region62: #{feature_reconstruction_loss.6} parent=35 // pred_fallthru
                _
            $region36: #{feature_reconstruction_loss.6} parent=31 // pred_fallthru
              _
            // Predicated region
            $region37: #{feature_reconstruction_loss.6} parent=31 // pred_check
              _
            $region38: #{feature_reconstruction_loss.6} parent=31 // pred_check_branch
              %221 = sbr.rel target = $region40
            $region39: #{feature_reconstruction_loss.6} parent=31 // pred_region
              %s223 = ssub.s32 256, 1
              loop: start=0, step=1, limit=1
              $region41: #{feature_reconstruction_loss.6} parent=39 // loop_pre_header
                _
              $region42: #{feature_reconstruction_loss.6} parent=39 // loop_header
                %s225 = sphi 0, %s229
                %p226 = scmp.ge.s32.totalorder %s225, 1
                %s230 = sphi %s215, %s215
                %s231 = sphi %s212, %s212
              $region43: #{feature_reconstruction_loss.6} parent=39 // loop_header_branch
                %228 = sbr.rel (%p226) target = $region47
              $region44: #{feature_reconstruction_loss.6} parent=39 // loop_body
                %v232 = vld [vmem:[%s230] sm:%s223]
                %233 = vst [vmem:[%s231] sm:%s223] %v232
                %v234 = vld [vmem:[%s230 + $0x10] sm:%s223]
                %235 = vst [vmem:[%s231 + $0x8] sm:%s223] %v234
                %v236 = vld [vmem:[%s230 + $0x20] sm:%s223]
                %237 = vst [vmem:[%s231 + $0x10] sm:%s223] %v236
                %v238 = vld [vmem:[%s230 + $0x30] sm:%s223]
                %239 = vst [vmem:[%s231 + $0x18] sm:%s223] %v238
                %v240 = vld [vmem:[%s230 + $0x40] sm:%s223]
                %241 = vst [vmem:[%s231 + $0x20] sm:%s223] %v240
                %v242 = vld [vmem:[%s230 + $0x50] sm:%s223]
                %243 = vst [vmem:[%s231 + $0x28] sm:%s223] %v242
                %v244 = vld [vmem:[%s230 + $0x60] sm:%s223]
                %245 = vst [vmem:[%s231 + $0x30] sm:%s223] %v244
                %v246 = vld [vmem:[%s230 + $0x70] sm:%s223]
                %247 = vst [vmem:[%s231 + $0x38] sm:%s223] %v246
                %v248 = vld [vmem:[%s230 + $0x80] sm:%s223]
                %249 = vst [vmem:[%s231 + $0x40] sm:%s223] %v248
              $region45: #{feature_reconstruction_loss.6} parent=39 // loop_footer
                %s229 = sadd.s32 1, %s225
              $region46: #{feature_reconstruction_loss.6} parent=39 // loop_footer_branch
                %224 = sbr.rel target = $region42
              $region47: #{feature_reconstruction_loss.6} parent=39 // loop_exit
                _
            $region40: #{feature_reconstruction_loss.6} parent=31 // pred_fallthru
              _
          $region32: #{feature_reconstruction_loss.6} parent=27 // pred_fallthru
            _
          %280 = vnop
        $region28: #{feature_reconstruction_loss.6} parent=23 // pred_fallthru
          _
        // Predicated region
        $region63: #{feature_reconstruction_loss.6} parent=23 // pred_check
          %p281 = pneg %p60
        $region64: #{feature_reconstruction_loss.6} parent=23 // pred_check_branch
          %283 = sbr.rel (%p281) target = $region66
        $region65: #{feature_reconstruction_loss.6} parent=23 // pred_region
          %s284 = sand.u32 %s50, 1
          %s285 = sand.u32 %s50, 1
          %s286 = smul.addr %s285, 72
          %s287 = scalar_lea.vmem [#allocation4], %s286
          %s288 = smul.u32 2, %s14
          %s289 = smul.addr %s288, 4
          %s290 = scalar_lea.vmem %s1, %s289
          // Predicated region
          $region67: #{feature_reconstruction_loss.6} parent=65 // pred_check
            _
          $region68: #{feature_reconstruction_loss.6} parent=65 // pred_check_branch
            %292 = sbr.rel (0) target = $region70
          $region69: #{feature_reconstruction_loss.6} parent=65 // pred_region
            // Predicated region
            $region71: #{feature_reconstruction_loss.6} parent=69 // pred_check
              _
            $region72: #{feature_reconstruction_loss.6} parent=69 // pred_check_branch
              %294 = sbr.rel (0) target = $region74
            $region73: #{feature_reconstruction_loss.6} parent=69 // pred_region
              // Predicated region
              $region86: #{feature_reconstruction_loss.6} parent=73 // pred_check
                _
              $region87: #{feature_reconstruction_loss.6} parent=73 // pred_check_branch
                %326 = sbr.rel (0) target = $region89
              $region88: #{feature_reconstruction_loss.6} parent=73 // pred_region
                loop: start=0, step=1, limit=1
                $region90: #{feature_reconstruction_loss.6} parent=88 // loop_pre_header
                  _
                $region91: #{feature_reconstruction_loss.6} parent=88 // loop_header
                  %s328 = sphi 0, %s332
                  %p329 = scmp.ge.s32.totalorder %s328, 1
                  %s333 = sphi %s290, %s290
                  %s334 = sphi %s287, %s287
                $region92: #{feature_reconstruction_loss.6} parent=88 // loop_header_branch
                  %331 = sbr.rel (%p329) target = $region96
                $region93: #{feature_reconstruction_loss.6} parent=88 // loop_body
                  %v335 = vld [vmem:[%s333] sm:$0xff]
                  %336 = vst [vmem:[%s334] sm:$0xff] %v335
                  %v337 = vld [vmem:[%s333 + $0x10] sm:$0xff]
                  %338 = vst [vmem:[%s334 + $0x8] sm:$0xff] %v337
                  %v339 = vld [vmem:[%s333 + $0x20] sm:$0xff]
                  %340 = vst [vmem:[%s334 + $0x10] sm:$0xff] %v339
                  %v341 = vld [vmem:[%s333 + $0x30] sm:$0xff]
                  %342 = vst [vmem:[%s334 + $0x18] sm:$0xff] %v341
                  %v343 = vld [vmem:[%s333 + $0x40] sm:$0xff]
                  %344 = vst [vmem:[%s334 + $0x20] sm:$0xff] %v343
                  %v345 = vld [vmem:[%s333 + $0x50] sm:$0xff]
                  %346 = vst [vmem:[%s334 + $0x28] sm:$0xff] %v345
                  %v347 = vld [vmem:[%s333 + $0x60] sm:$0xff]
                  %348 = vst [vmem:[%s334 + $0x30] sm:$0xff] %v347
                  %v349 = vld [vmem:[%s333 + $0x70] sm:$0xff]
                  %350 = vst [vmem:[%s334 + $0x38] sm:$0xff] %v349
                  %v351 = vld [vmem:[%s333 + $0x80] sm:$0xff]
                  %352 = vst [vmem:[%s334 + $0x40] sm:$0xff] %v351
                $region94: #{feature_reconstruction_loss.6} parent=88 // loop_footer
                  %s332 = sadd.s32 1, %s328
                $region95: #{feature_reconstruction_loss.6} parent=88 // loop_footer_branch
                  %327 = sbr.rel target = $region91
                $region96: #{feature_reconstruction_loss.6} parent=88 // loop_exit
                  _
              $region89: #{feature_reconstruction_loss.6} parent=73 // pred_fallthru
                _
              // Predicated region
              $region97: #{feature_reconstruction_loss.6} parent=73 // pred_check
                _
              $region98: #{feature_reconstruction_loss.6} parent=73 // pred_check_branch
                %354 = sbr.rel target = $region100
              $region99: #{feature_reconstruction_loss.6} parent=73 // pred_region
                _
              $region100: #{feature_reconstruction_loss.6} parent=73 // pred_fallthru
                _
            $region74: #{feature_reconstruction_loss.6} parent=69 // pred_fallthru
              _
            // Predicated region
            $region75: #{feature_reconstruction_loss.6} parent=69 // pred_check
              _
            $region76: #{feature_reconstruction_loss.6} parent=69 // pred_check_branch
              %296 = sbr.rel target = $region78
            $region77: #{feature_reconstruction_loss.6} parent=69 // pred_region
              %s298 = ssub.s32 256, 1
              loop: start=0, step=1, limit=1
              $region79: #{feature_reconstruction_loss.6} parent=77 // loop_pre_header
                _
              $region80: #{feature_reconstruction_loss.6} parent=77 // loop_header
                %s300 = sphi 0, %s304
                %p301 = scmp.ge.s32.totalorder %s300, 1
                %s305 = sphi %s290, %s290
                %s306 = sphi %s287, %s287
              $region81: #{feature_reconstruction_loss.6} parent=77 // loop_header_branch
                %303 = sbr.rel (%p301) target = $region85
              $region82: #{feature_reconstruction_loss.6} parent=77 // loop_body
                %v307 = vld [vmem:[%s305] sm:%s298]
                %308 = vst [vmem:[%s306] sm:%s298] %v307
                %v309 = vld [vmem:[%s305 + $0x10] sm:%s298]
                %310 = vst [vmem:[%s306 + $0x8] sm:%s298] %v309
                %v311 = vld [vmem:[%s305 + $0x20] sm:%s298]
                %312 = vst [vmem:[%s306 + $0x10] sm:%s298] %v311
                %v313 = vld [vmem:[%s305 + $0x30] sm:%s298]
                %314 = vst [vmem:[%s306 + $0x18] sm:%s298] %v313
                %v315 = vld [vmem:[%s305 + $0x40] sm:%s298]
                %316 = vst [vmem:[%s306 + $0x20] sm:%s298] %v315
                %v317 = vld [vmem:[%s305 + $0x50] sm:%s298]
                %318 = vst [vmem:[%s306 + $0x28] sm:%s298] %v317
                %v319 = vld [vmem:[%s305 + $0x60] sm:%s298]
                %320 = vst [vmem:[%s306 + $0x30] sm:%s298] %v319
                %v321 = vld [vmem:[%s305 + $0x70] sm:%s298]
                %322 = vst [vmem:[%s306 + $0x38] sm:%s298] %v321
                %v323 = vld [vmem:[%s305 + $0x80] sm:%s298]
                %324 = vst [vmem:[%s306 + $0x40] sm:%s298] %v323
              $region83: #{feature_reconstruction_loss.6} parent=77 // loop_footer
                %s304 = sadd.s32 1, %s300
              $region84: #{feature_reconstruction_loss.6} parent=77 // loop_footer_branch
                %299 = sbr.rel target = $region80
              $region85: #{feature_reconstruction_loss.6} parent=77 // loop_exit
                _
            $region78: #{feature_reconstruction_loss.6} parent=69 // pred_fallthru
              _
          $region70: #{feature_reconstruction_loss.6} parent=65 // pred_fallthru
            _
          %355 = vnop
        $region66: #{feature_reconstruction_loss.6} parent=23 // pred_fallthru
          _
      $region24: #{feature_reconstruction_loss.6} parent=5 // pred_fallthru
        _
      %p356 = scmp.le.s32.totalorder 1, %s14
      %p357 = scmp.lt.s32.totalorder %s14, 3
      %p358 = pnand %p356, %p357
      %p359 = pneg %p358
      // Predicated region
      $region101: #{feature_reconstruction_loss.6} parent=5 // pred_check
        _
      $region102: #{feature_reconstruction_loss.6} parent=5 // pred_check_branch
        %361 = sbr.rel (%p358) target = $region104
      $region103: #{feature_reconstruction_loss.6} parent=5 // pred_region
        %s362 = ssub.s32 %s14, 1
        %s363 = sand.u32 %s27, 1
        %s364 = sand.u32 %s27, 1
        %s365 = smul.addr %s364, 72
        %s366 = scalar_lea.vmem [#allocation3], %s365
        // Predicated region
        $region105: #{feature_reconstruction_loss.6} parent=103 // pred_check
          %p367 = pneg %p40
        $region106: #{feature_reconstruction_loss.6} parent=103 // pred_check_branch
          %369 = sbr.rel (%p367) target = $region108
        $region107: #{feature_reconstruction_loss.6} parent=103 // pred_region
          _
        $region108: #{feature_reconstruction_loss.6} parent=103 // pred_fallthru
          _
        %s370 = sand.u32 %s53, 1
        %s371 = sand.u32 %s53, 1
        %s372 = smul.addr %s371, 72
        %s373 = scalar_lea.vmem [#allocation4], %s372
        // Predicated region
        $region109: #{feature_reconstruction_loss.6} parent=103 // pred_check
          %p374 = pneg %p66
        $region110: #{feature_reconstruction_loss.6} parent=103 // pred_check_branch
          %376 = sbr.rel (%p374) target = $region112
        $region111: #{feature_reconstruction_loss.6} parent=103 // pred_region
          _
        $region112: #{feature_reconstruction_loss.6} parent=103 // pred_fallthru
          _
        %s377 = sand.u32 %s27, 1
        %s378 = sand.u32 %s27, 1
        %s379 = smul.addr %s378, 72
        %s380 = scalar_lea.vmem [#allocation3], %s379
        %p381 = pneg %p40
        %p382 = pneg %p37
        %s383 = sand.u32 %s53, 1
        %s384 = sand.u32 %s53, 1
        %s385 = smul.addr %s384, 72
        %s386 = scalar_lea.vmem [#allocation4], %s385
        %p387 = pneg %p66
        %p388 = pneg %p63
        %p389 = pneg %p87
        %p390 = pneg %p84
        %p391 = pneg %p108
        %p392 = pneg %p105
        %p393 = pneg %p134
        %p394 = pneg %p131
        %s395 = smul.u32 2, %s19
        %p396 = scmp.lt.s32.totalorder %s395, 3
        %s397 = scalar_select %p396, %s395, 3
        %s398 = smul.addr %s397, 4
        %s399 = scalar_lea.vmem %s4, %s398
        %p400 = pneg %p160
        %p401 = pneg %p157
        %s402 = smul.u32 2, %s19
        %p403 = scmp.lt.s32.totalorder %s402, 3
        %s404 = scalar_select %p403, %s402, 3
        %s405 = smul.addr %s404, 4
        %s406 = scalar_lea.vmem %s5, %s405
        %p407 = pneg %p181
        %p408 = pneg %p178
        %s409 = smul.u32 2, %s19
        %s410 = smul.u32 2, %s19
        %s411 = smul.u32 2, %s19
        %p412 = scmp.lt.s32.totalorder %s411, 3
        %s413 = scalar_select %p412, %s411, 3
        %s414 = smul.addr %s413, 4
        %s415 = scalar_lea.vmem %s4, %s414
        %s416 = smul.u32 2, %s19
        %s417 = smul.u32 2, %s19
        %p418 = scmp.lt.s32.totalorder %s417, 3
        %s419 = scalar_select %p418, %s417, 3
        %s420 = smul.addr %s419, 4
        %s421 = scalar_lea.vmem %s5, %s420
        %s422 = smul.u32 2, %s19
        %p424 = scmp.eq.s32.totalorder %s19, 0
        // Predicated region
        $region113: #{feature_reconstruction_loss.6} parent=103 // pred_check
          %p425 = pneg %p424
        $region114: #{feature_reconstruction_loss.6} parent=103 // pred_check_branch
          %427 = sbr.rel (%p425) target = $region116
        $region115: #{feature_reconstruction_loss.6} parent=103 // pred_region
          %v428 = vlaneseq
          %vm429 = vcmp.ge.s32.totalorder %v428, 0
          %vm430 = vcmp.lt.s32.totalorder %v428, 256
          %vm431 = vmand %vm429, %vm430
          %432 = vst.msk [vmem:[#allocation2] sm:$0x3] %vm431, 0.0
        $region116: #{feature_reconstruction_loss.6} parent=103 // pred_fallthru
          _
        %v433 = vld [vmem:[%s2] sm:$0xf]
        %v434 = vld [vmem:[%s3] sm:$0xff]
        %v435 = vld [vmem:[%s366] sm:$0xff]
        %v436 = vld [vmem:[%s366 + $0x8] sm:$0xff]
        %v437 = vld [vmem:[%s366 + $0x10] sm:$0xff]
        %v438 = vld [vmem:[%s366 + $0x18] sm:$0xff]
        %v439 = vld [vmem:[%s366 + $0x20] sm:$0xff]
        %v440 = vld [vmem:[%s366 + $0x28] sm:$0xff]
        %v441 = vld [vmem:[%s366 + $0x30] sm:$0xff]
        %v442 = vld [vmem:[%s366 + $0x38] sm:$0xff]
        %v443 = vld [vmem:[%s366 + $0x40] sm:$0xff]
        %445 = vset.pattern.permute.xlu0 0
        %446 = vperm.xlu0 %445, %v434
        %v447 = vpop.permute.xlu0 %446
        %v458 = vunpack.c.l.b16 %v435
        %v459 = vunpack.c.h.b16 %v435
        %v460 = vunpack.c.l.b16 %v436
        %v461 = vunpack.c.h.b16 %v436
        %v462 = vunpack.c.l.b16 %v437
        %v463 = vunpack.c.h.b16 %v437
        %v464 = vunpack.c.l.b16 %v438
        %v465 = vunpack.c.h.b16 %v438
        %v466 = vunpack.c.l.b16 %v439
        %v467 = vunpack.c.h.b16 %v439
        %v468 = vunpack.c.l.b16 %v440
        %v469 = vunpack.c.h.b16 %v440
        %v470 = vunpack.c.l.b16 %v441
        %v471 = vunpack.c.h.b16 %v441
        %v472 = vunpack.c.l.b16 %v442
        %v473 = vunpack.c.h.b16 %v442
        %v474 = vunpack.c.l.b16 %v443
        %v475 = vunpack.c.h.b16 %v443
        %v476 = vpack.c.b16 %v460, %v458
        %v477 = vpack.c.b16 %v461, %v459
        %v478 = vpack.c.b16 %v464, %v462
        %v479 = vpack.c.b16 %v465, %v463
        %v480 = vpack.c.b16 %v468, %v466
        %v481 = vpack.c.b16 %v469, %v467
        %v482 = vpack.c.b16 %v472, %v470
        %v483 = vpack.c.b16 %v473, %v471
        %v484 = vpack.c.b16 %v474, %v474
        %v485 = vpack.c.b16 %v475, %v475
        %vm494 = vcmask 588800
        %v496 = vsel %vm494, %v433, 0
        %vm498 = vcmask 1043456
        %v500 = vsel %vm498, %v484, 0
        %v503 = vsel %vm498, %v485, 0
        %505 = vmatpush.bf16.msra.mxu0 0
        %506 = vmatpush.bf16.msra.mxu0 0
        %507 = vmatpush.bf16.msra.mxu0 0
        %508 = vmatpush.bf16.msra.mxu0 %v500
        %509 = vmatpush.bf16.msra.mxu0 %v482
        %510 = vmatpush.bf16.msra.mxu0 %v480
        %511 = vmatpush.bf16.msra.mxu0 %v478
        %512 = vmatpush.bf16.msra.mxu0 %v476
        %513 = vmatmul.bf16.gmra.mxu0 %v496
        %v514 = vpop.f32.mrf.mxu0
        %v515 = vadd.f32 %v447, %v514
        %v516 = vpop.f32.mrf.mxu0
        %517 = vdwg.mxu0
        %518 = vmatpush.bf16.msra.mxu0 0
        %519 = vmatpush.bf16.msra.mxu0 0
        %520 = vmatpush.bf16.msra.mxu0 0
        %521 = vmatpush.bf16.msra.mxu0 %v503
        %522 = vmatpush.bf16.msra.mxu0 %v483
        %523 = vmatpush.bf16.msra.mxu0 %v481
        %524 = vmatpush.bf16.msra.mxu0 %v479
        %525 = vmatpush.bf16.msra.mxu0 %v477
        %526 = vmatmul.bf16.gmra.mxu0 %v496
        %v527 = vpop.f32.mrf.mxu0
        %v528 = vadd.f32 %v447, %v527
        %v529 = vpop.f32.mrf.mxu0
        %530 = vdwg.mxu0
        %v531 = vld [vmem:[%s373] sm:$0xff]
        %v532 = vld [vmem:[%s373 + $0x8] sm:$0xff]
        %v533 = vld [vmem:[%s373 + $0x10] sm:$0xff]
        %v534 = vld [vmem:[%s373 + $0x18] sm:$0xff]
        %v535 = vld [vmem:[%s373 + $0x20] sm:$0xff]
        %v536 = vld [vmem:[%s373 + $0x28] sm:$0xff]
        %v537 = vld [vmem:[%s373 + $0x30] sm:$0xff]
        %v538 = vld [vmem:[%s373 + $0x38] sm:$0xff]
        %v539 = vld [vmem:[%s373 + $0x40] sm:$0xff]
        %v549 = vunpack.c.l.b16 %v531
        %v550 = vunpack.c.h.b16 %v531
        %v551 = vunpack.c.l.b16 %v532
        %v552 = vunpack.c.h.b16 %v532
        %v553 = vunpack.c.l.b16 %v533
        %v554 = vunpack.c.h.b16 %v533
        %v555 = vunpack.c.l.b16 %v534
        %v556 = vunpack.c.h.b16 %v534
        %v557 = vunpack.c.l.b16 %v535
        %v558 = vunpack.c.h.b16 %v535
        %v559 = vunpack.c.l.b16 %v536
        %v560 = vunpack.c.h.b16 %v536
        %v561 = vunpack.c.l.b16 %v537
        %v562 = vunpack.c.h.b16 %v537
        %v563 = vunpack.c.l.b16 %v538
        %v564 = vunpack.c.h.b16 %v538
        %v565 = vunpack.c.l.b16 %v539
        %v566 = vunpack.c.h.b16 %v539
        %v567 = vpack.c.b16 %v551, %v549
        %v568 = vpack.c.b16 %v552, %v550
        %v569 = vpack.c.b16 %v555, %v553
        %v570 = vpack.c.b16 %v556, %v554
        %v571 = vpack.c.b16 %v559, %v557
        %v572 = vpack.c.b16 %v560, %v558
        %v573 = vpack.c.b16 %v563, %v561
        %v574 = vpack.c.b16 %v564, %v562
        %v575 = vpack.c.b16 %v565, %v565
        %v576 = vpack.c.b16 %v566, %v566
        %v586 = vsel %vm498, %v575, 0
        %v589 = vsel %vm498, %v576, 0
        %591 = vmatpush.bf16.msra.mxu0 0
        %592 = vmatpush.bf16.msra.mxu0 0
        %593 = vmatpush.bf16.msra.mxu0 0
        %594 = vmatpush.bf16.msra.mxu0 %v586
        %595 = vmatpush.bf16.msra.mxu0 %v573
        %596 = vmatpush.bf16.msra.mxu0 %v571
        %597 = vmatpush.bf16.msra.mxu0 %v569
        %598 = vmatpush.bf16.msra.mxu0 %v567
        %599 = vmatmul.bf16.gmra.mxu0 %v496
        %v600 = vpop.f32.mrf.mxu0
        %v601 = vadd.f32 %v447, %v600
        %v602 = vpop.f32.mrf.mxu0
        %603 = vdwg.mxu0
        %604 = vmatpush.bf16.msra.mxu0 0
        %605 = vmatpush.bf16.msra.mxu0 0
        %606 = vmatpush.bf16.msra.mxu0 0
        %607 = vmatpush.bf16.msra.mxu0 %v589
        %608 = vmatpush.bf16.msra.mxu0 %v574
        %609 = vmatpush.bf16.msra.mxu0 %v572
        %610 = vmatpush.bf16.msra.mxu0 %v570
        %611 = vmatpush.bf16.msra.mxu0 %v568
        %612 = vmatmul.bf16.gmra.mxu0 %v496
        %v613 = vpop.f32.mrf.mxu0
        %v614 = vadd.f32 %v447, %v613
        %v615 = vpop.f32.mrf.mxu0
        %616 = vdwg.mxu0
        %v617 = vsub.f32 %v515, %v601
        %v618 = vsub.f32 %v528, %v614
        %v619 = vld [vmem:[#allocation2] sm:$0x3]
        %v620 = vmul.f32 %v617, %v617
        %v621 = vmul.f32 %v618, %v618
        %v622 = vrot.slane %v620, 4
        %v623 = vadd.f32 %v620, %v622
        %v624 = vrot.slane %v623, 2
        %v625 = vadd.f32 %v623, %v624
        %v626 = vrot.slane %v625, 1
        %v627 = vadd.f32 %v625, %v626
        %v628 = vrot.slane %v621, 4
        %v629 = vadd.f32 %v621, %v628
        %v630 = vrot.slane %v629, 2
        %v631 = vadd.f32 %v629, %v630
        %v632 = vrot.slane %v631, 1
        %v633 = vadd.f32 %v631, %v632
        %v636 = vrot.slane %v633, 7
        %vm637 = vcmask 1040384
        %v638 = vsel %vm637, %v627, %v636
        %v640 = vadd.f32 %v619, %v638
        %v641 = vlaneseq
        %vm642 = vcmp.ge.s32.totalorder %v641, 0
        %vm643 = vcmp.lt.s32.totalorder %v641, 256
        %vm644 = vmand %vm642, %vm643
        %645 = vst.msk [vmem:[#allocation2] sm:$0x3] %vm644, %v640
        %v646 = vmax.f32 %v515, 0.0
        %v647 = vmax.f32 %v528, 0.0
        %v648 = vpack.c.bf16 %v647, %v646
        %649 = vst [vmem:[%s415] sm:$0xff] %v648
        %v650 = vmax.f32 %v601, 0.0
        %v651 = vmax.f32 %v614, 0.0
        %v652 = vpack.c.bf16 %v651, %v650
        %653 = vst [vmem:[%s421] sm:$0xff] %v652
        %p654 = scmp.eq.s32.totalorder %s19, 1
        // Predicated region
        $region117: #{feature_reconstruction_loss.6} parent=103 // pred_check
          %p655 = pneg %p654
        $region118: #{feature_reconstruction_loss.6} parent=103 // pred_check_branch
          %657 = sbr.rel (%p655) target = $region120
        $region119: #{feature_reconstruction_loss.6} parent=103 // pred_region
          %v658 = vld [vmem:[#allocation2] sm:$0x3]
          %v660 = vperm.slane %v658, 0
          %v661 = vperm.slane %v658, 1
          %v664 = vsel %vm637, %v660, 0.0
          %v665 = vsel %vm637, %v661, 0.0
          %v666 = vadd.f32 %v664, %v665
          %667 = vadd.xlane.f32.xlu0 %v666
          %v668 = vpop.xlane.xlu0 %667
          %v669 = vrot.slane %v668, 4
          %v670 = vadd.f32 %v668, %v669
          %v671 = vrot.slane %v670, 2
          %v672 = vadd.f32 %v670, %v671
          %v673 = vrot.slane %v672, 1
          %v674 = vadd.f32 %v672, %v673
          %s675 = vtos %v674
          %s676 = scalar_lea.smem [#allocation5], 0
          %677 = sst [smem:[%s676]] %s675
        $region120: #{feature_reconstruction_loss.6} parent=103 // pred_fallthru
          _
        %s678 = smul.u32 2, %s19
        %p679 = scmp.lt.s32.totalorder %s678, 3
        %s680 = scalar_select %p679, %s678, 3
        %s681 = smul.addr %s680, 4
        %s682 = scalar_lea.vmem %s4, %s681
        %s683 = smul.u32 2, %s19
        %p684 = scmp.lt.s32.totalorder %s683, 3
        %s685 = scalar_select %p684, %s683, 3
        %s686 = smul.addr %s685, 4
        %s687 = scalar_lea.vmem %s5, %s686
        // Predicated region
        $region121: #{feature_reconstruction_loss.6} parent=103 // pred_check
          %p688 = pneg %p131
        $region122: #{feature_reconstruction_loss.6} parent=103 // pred_check_branch
          %690 = sbr.rel (%p688) target = $region124
        $region123: #{feature_reconstruction_loss.6} parent=103 // pred_region
          %s691 = smul.u32 2, %s19
        $region124: #{feature_reconstruction_loss.6} parent=103 // pred_fallthru
          _
        // Predicated region
        $region125: #{feature_reconstruction_loss.6} parent=103 // pred_check
          %p692 = pneg %p157
        $region126: #{feature_reconstruction_loss.6} parent=103 // pred_check_branch
          %694 = sbr.rel (%p692) target = $region128
        $region127: #{feature_reconstruction_loss.6} parent=103 // pred_region
          %s695 = smul.u32 2, %s19
        $region128: #{feature_reconstruction_loss.6} parent=103 // pred_fallthru
          _
        // Predicated region
        $region129: #{feature_reconstruction_loss.6} parent=103 // pred_check
          %p696 = pneg %p178
        $region130: #{feature_reconstruction_loss.6} parent=103 // pred_check_branch
          %698 = sbr.rel (%p696) target = $region132
        $region131: #{feature_reconstruction_loss.6} parent=103 // pred_region
          %700 = vsyncadd [#allocation6], 0
          %s702 = sshll.u32 %s6, 4
          %s703 = int_to_ptr.hbm [resolvable:$true] %s702
          %705 = dma.smem_to_hbm [#allocation5], 16, %s703, [#allocation6]
        $region132: #{feature_reconstruction_loss.6} parent=103 // pred_fallthru
          _
        // Predicated region
        $region133: #{feature_reconstruction_loss.6} parent=103 // pred_check
          %p706 = pneg %p178
        $region134: #{feature_reconstruction_loss.6} parent=103 // pred_check_branch
          %708 = sbr.rel (%p706) target = $region136
        $region135: #{feature_reconstruction_loss.6} parent=103 // pred_region
          %710 = dma.done [#allocation6], 16
        $region136: #{feature_reconstruction_loss.6} parent=103 // pred_fallthru
          _
        %711 = sfence
      $region104: #{feature_reconstruction_loss.6} parent=5 // pred_fallthru
        _
      %p712 = scmp.le.s32.totalorder 2, %s14
      // Predicated region
      $region137: #{feature_reconstruction_loss.6} parent=5 // pred_check
        %p713 = pneg %p712
      $region138: #{feature_reconstruction_loss.6} parent=5 // pred_check_branch
        %715 = sbr.rel (%p713) target = $region140
      $region139: #{feature_reconstruction_loss.6} parent=5 // pred_region
        %s716 = ssub.s32 %s14, 2
        // Predicated region
        $region141: #{feature_reconstruction_loss.6} parent=139 // pred_check
          %p717 = pneg %p137
        $region142: #{feature_reconstruction_loss.6} parent=139 // pred_check_branch
          %719 = sbr.rel (%p717) target = $region144
        $region143: #{feature_reconstruction_loss.6} parent=139 // pred_region
          %s720 = smul.u32 2, %s20
          %p721 = scmp.lt.s32.totalorder %s720, 3
          %s722 = scalar_select %p721, %s720, 3
          %s723 = smul.addr %s722, 4
          %s724 = scalar_lea.vmem %s4, %s723
        $region144: #{feature_reconstruction_loss.6} parent=139 // pred_fallthru
          _
        // Predicated region
        $region145: #{feature_reconstruction_loss.6} parent=139 // pred_check
          %p725 = pneg %p163
        $region146: #{feature_reconstruction_loss.6} parent=139 // pred_check_branch
          %727 = sbr.rel (%p725) target = $region148
        $region147: #{feature_reconstruction_loss.6} parent=139 // pred_region
          %s728 = smul.u32 2, %s20
          %p729 = scmp.lt.s32.totalorder %s728, 3
          %s730 = scalar_select %p729, %s728, 3
          %s731 = smul.addr %s730, 4
          %s732 = scalar_lea.vmem %s5, %s731
        $region148: #{feature_reconstruction_loss.6} parent=139 // pred_fallthru
          _
      $region140: #{feature_reconstruction_loss.6} parent=5 // pred_fallthru
        _
    $region6: #{feature_reconstruction_loss.6} parent=1 // loop_footer
      %s18 = sadd.s32 1, %s14
    $region7: #{feature_reconstruction_loss.6} parent=1 // loop_footer_branch
      %13 = sbr.rel target = $region3
    $region8: #{feature_reconstruction_loss.6} parent=1 // loop_exit
      _
    %733 = vsyncpa [#allocation6], 1
    %s734 = scalar_lea.sflag [#allocation6], 1
    %735 = vsyncpa %s734, 1

// kernel: feature_reconstruction_loss.7
$region0: #{feature_reconstruction_loss.7}
  #allocation0 [shape = 'u32[]', space=smem, size = 0x4, offset = 0x4, fixed_abs, tag = 'smem constant byte address 0x4 - core index']
  #allocation1 [shape = 'u32[72,128]{1,0:T(1,128)}', space=vmem, size = 0x9000, scoped, tag = 'internal scratch']
  #allocation2 [shape = 'f32[1,256]{1,0:T(1,128)}', space=vmem, size = 0x400, scoped, tag = 'scratch operand']
  %s0 = inlined_call_operand.vmem [shape: bf16[72,512], index: 0, kind: input, shape index: {}]
  %s1 = inlined_call_operand.vmem [shape: bf16[72,512], index: 1, kind: input, shape index: {}]
  %s2 = inlined_call_operand.vmem [shape: bf16[16,72], index: 2, kind: input, shape index: {}]
  %s3 = inlined_call_operand.vmem [shape: f32[16,1], index: 3, kind: input, shape index: {}]
  %s4 = inlined_call_operand.vmem [shape: bf16[16,512], index: 4, kind: output, shape index: {0}]
  %s5 = inlined_call_operand.vmem [shape: bf16[16,512], index: 5, kind: output, shape index: {1}]
  %s6 = inlined_call_operand.hbm [shape: f32[1,1], index: 6, kind: output, shape index: {2}]
  %7 = xla_tuple %s4, %s5, %s6
  %s8 = sld [smem:[#allocation0]]
  $region217: #{feature_reconstruction_loss.7} parent=0
    _
  %s10 = ssub.s32 1, %s8
  %s11 = scalar_select 0, %s10, %s8
  $region1: #{feature_reconstruction_loss.7} parent=0
    #allocation3 [shape = 'u8[73728]{0}', space=vmem, size = 0x12000, scoped, tag = 'input window, operand 0']
    #allocation4 [shape = 'u8[73728]{0}', space=vmem, size = 0x12000, scoped, tag = 'input window, operand 1']
    #allocation5 [shape = 'u8[16384]{0}', space=vmem, size = 0x4000, scoped, tag = 'output window, operand 0']
    #allocation6 [shape = 'u8[16384]{0}', space=vmem, size = 0x4000, scoped, tag = 'output window, operand 1']
    #allocation7 [shape = 'u8[512]{0}', space=smem, size = 0x200, scoped, tag = 'output window, operand 2, single buffered']
    #allocation8 [shape = 's32[2]{0}', space=sflag, size = 0x8, scoped, tag = 'scoped memory for feature_reconstruction_loss.7']
    %12 = vsyncpa [#allocation8], 0
    loop: start=0, step=1, limit=4
    $region2: #{feature_reconstruction_loss.7} parent=1 // loop_pre_header
      _
    $region3: #{feature_reconstruction_loss.7} parent=1 // loop_header
      %s14 = sphi 0, %s18
      %p15 = scmp.ge.s32.totalorder %s14, 4
      %s24 = sphi 0, %s26
      %s27 = sphi 0, %s24
      %s28 = sphi 0, %s27
      %s44 = sphi 0, %s28
      %s50 = sphi 0, %s52
      %s53 = sphi 0, %s50
      %s54 = sphi 0, %s53
      %s70 = sphi 0, %s54
      %s74 = sphi 0, %s74
      %s76 = sphi 0, %s74
      %s77 = sphi 0, %s76
      %s91 = sphi 0, %s77
      %s95 = sphi 0, %s95
      %s97 = sphi 0, %s95
      %s98 = sphi 0, %s97
      %s112 = sphi 0, %s98
      %s118 = sphi 0, %s120
      %s121 = sphi 0, %s118
      %s122 = sphi 0, %s121
      %s138 = sphi 0, %s122
      %s144 = sphi 0, %s146
      %s147 = sphi 0, %s144
      %s148 = sphi 0, %s147
      %s164 = sphi 0, %s148
      %s168 = sphi 0, %s168
      %s170 = sphi 0, %s168
      %s171 = sphi 0, %s170
      %s185 = sphi 0, %s171
    $region4: #{feature_reconstruction_loss.7} parent=1 // loop_header_branch
      %17 = sbr.rel (%p15) target = $region8
    $region5: #{feature_reconstruction_loss.7} parent=1 // loop_body
      %s19 = ssub.s32 %s14, 1
      %s20 = ssub.s32 %s14, 2
      %s21 = sadd.s32 %s14, 1
      %s22 = ssub.s32 %s14, %s21
      %p23 = scmp.eq.s32.totalorder %s22, 0
      %s25 = sadd.s32 %s24, 1
      %s26 = scalar_select %p23, %s24, %s25
      %p29 = pneg %p23
      %p30 = scmp.eq.s32.totalorder %s14, 1
      %p31 = por %p29, %p30
      %p32 = scmp.ne.s32.totalorder %s24, %s27
      %p33 = scmp.eq.s32.totalorder %s14, 0
      %p34 = por %p32, %p33
      %p35 = scmp.ne.s32.totalorder %s24, %s27
      %p36 = scmp.eq.s32.totalorder %s19, 1
      %p37 = por %p35, %p36
      %p38 = scmp.ne.s32.totalorder %s27, %s28
      %p39 = scmp.eq.s32.totalorder %s19, 0
      %p40 = por %p38, %p39
      %p41 = scmp.ne.s32.totalorder %s27, %s28
      %p42 = scmp.eq.s32.totalorder %s20, 1
      %p43 = por %p41, %p42
      %p45 = scmp.ne.s32.totalorder %s28, %s44
      %p46 = scmp.eq.s32.totalorder %s20, 0
      %p47 = por %p45, %p46
      %s48 = ssub.s32 %s14, %s21
      %p49 = scmp.eq.s32.totalorder %s48, 0
      %s51 = sadd.s32 %s50, 1
      %s52 = scalar_select %p49, %s50, %s51
      %p55 = pneg %p49
      %p56 = scmp.eq.s32.totalorder %s14, 1
      %p57 = por %p55, %p56
      %p58 = scmp.ne.s32.totalorder %s50, %s53
      %p59 = scmp.eq.s32.totalorder %s14, 0
      %p60 = por %p58, %p59
      %p61 = scmp.ne.s32.totalorder %s50, %s53
      %p62 = scmp.eq.s32.totalorder %s19, 1
      %p63 = por %p61, %p62
      %p64 = scmp.ne.s32.totalorder %s53, %s54
      %p65 = scmp.eq.s32.totalorder %s19, 0
      %p66 = por %p64, %p65
      %p67 = scmp.ne.s32.totalorder %s53, %s54
      %p68 = scmp.eq.s32.totalorder %s20, 1
      %p69 = por %p67, %p68
      %p71 = scmp.ne.s32.totalorder %s54, %s70
      %p72 = scmp.eq.s32.totalorder %s20, 0
      %p73 = por %p71, %p72
      %s75 = sadd.s32 %s74, 1
      %p78 = scmp.eq.s32.totalorder %s14, 1
      %p79 = scmp.ne.s32.totalorder %s74, %s76
      %p80 = scmp.eq.s32.totalorder %s14, 0
      %p81 = por %p79, %p80
      %p82 = scmp.ne.s32.totalorder %s74, %s76
      %p83 = scmp.eq.s32.totalorder %s19, 1
      %p84 = por %p82, %p83
      %p85 = scmp.ne.s32.totalorder %s76, %s77
      %p86 = scmp.eq.s32.totalorder %s19, 0
      %p87 = por %p85, %p86
      %p88 = scmp.ne.s32.totalorder %s76, %s77
      %p89 = scmp.eq.s32.totalorder %s20, 1
      %p90 = por %p88, %p89
      %p92 = scmp.ne.s32.totalorder %s77, %s91
      %p93 = scmp.eq.s32.totalorder %s20, 0
      %p94 = por %p92, %p93
      %s96 = sadd.s32 %s95, 1
      %p99 = scmp.eq.s32.totalorder %s14, 1
      %p100 = scmp.ne.s32.totalorder %s95, %s97
      %p101 = scmp.eq.s32.totalorder %s14, 0
      %p102 = por %p100, %p101
      %p103 = scmp.ne.s32.totalorder %s95, %s97
      %p104 = scmp.eq.s32.totalorder %s19, 1
      %p105 = por %p103, %p104
      %p106 = scmp.ne.s32.totalorder %s97, %s98
      %p107 = scmp.eq.s32.totalorder %s19, 0
      %p108 = por %p106, %p107
      %p109 = scmp.ne.s32.totalorder %s97, %s98
      %p110 = scmp.eq.s32.totalorder %s20, 1
      %p111 = por %p109, %p110
      %p113 = scmp.ne.s32.totalorder %s98, %s112
      %p114 = scmp.eq.s32.totalorder %s20, 0
      %p115 = por %p113, %p114
      %s116 = ssub.s32 %s14, %s21
      %p117 = scmp.eq.s32.totalorder %s116, 0
      %s119 = sadd.s32 %s118, 1
      %s120 = scalar_select %p117, %s118, %s119
      %p123 = pneg %p117
      %p124 = scmp.eq.s32.totalorder %s14, 1
      %p125 = por %p123, %p124
      %p126 = scmp.ne.s32.totalorder %s118, %s121
      %p127 = scmp.eq.s32.totalorder %s14, 0
      %p128 = por %p126, %p127
      %p129 = scmp.ne.s32.totalorder %s118, %s121
      %p130 = scmp.eq.s32.totalorder %s19, 1
      %p131 = por %p129, %p130
      %p132 = scmp.ne.s32.totalorder %s121, %s122
      %p133 = scmp.eq.s32.totalorder %s19, 0
      %p134 = por %p132, %p133
      %p135 = scmp.ne.s32.totalorder %s121, %s122
      %p136 = scmp.eq.s32.totalorder %s20, 1
      %p137 = por %p135, %p136
      %p139 = scmp.ne.s32.totalorder %s122, %s138
      %p140 = scmp.eq.s32.totalorder %s20, 0
      %p141 = por %p139, %p140
      %s142 = ssub.s32 %s14, %s21
      %p143 = scmp.eq.s32.totalorder %s142, 0
      %s145 = sadd.s32 %s144, 1
      %s146 = scalar_select %p143, %s144, %s145
      %p149 = pneg %p143
      %p150 = scmp.eq.s32.totalorder %s14, 1
      %p151 = por %p149, %p150
      %p152 = scmp.ne.s32.totalorder %s144, %s147
      %p153 = scmp.eq.s32.totalorder %s14, 0
      %p154 = por %p152, %p153
      %p155 = scmp.ne.s32.totalorder %s144, %s147
      %p156 = scmp.eq.s32.totalorder %s19, 1
      %p157 = por %p155, %p156
      %p158 = scmp.ne.s32.totalorder %s147, %s148
      %p159 = scmp.eq.s32.totalorder %s19, 0
      %p160 = por %p158, %p159
      %p161 = scmp.ne.s32.totalorder %s147, %s148
      %p162 = scmp.eq.s32.totalorder %s20, 1
      %p163 = por %p161, %p162
      %p165 = scmp.ne.s32.totalorder %s148, %s164
      %p166 = scmp.eq.s32.totalorder %s20, 0
      %p167 = por %p165, %p166
      %s169 = sadd.s32 %s168, 1
      %p172 = scmp.eq.s32.totalorder %s14, 1
      %p173 = scmp.ne.s32.totalorder %s168, %s170
      %p174 = scmp.eq.s32.totalorder %s14, 0
      %p175 = por %p173, %p174
      %p176 = scmp.ne.s32.totalorder %s168, %s170
      %p177 = scmp.eq.s32.totalorder %s19, 1
      %p178 = por %p176, %p177
      %p179 = scmp.ne.s32.totalorder %s170, %s171
      %p180 = scmp.eq.s32.totalorder %s19, 0
      %p181 = por %p179, %p180
      %p182 = scmp.ne.s32.totalorder %s170, %s171
      %p183 = scmp.eq.s32.totalorder %s20, 1
      %p184 = por %p182, %p183
      %p186 = scmp.ne.s32.totalorder %s171, %s185
      %p187 = scmp.eq.s32.totalorder %s20, 0
      %p188 = por %p186, %p187
      %p189 = scmp.le.s32.totalorder 1, %s14
      %p190 = scmp.lt.s32.totalorder %s14, 3
      %p191 = pnand %p189, %p190
      %p192 = pneg %p191
      // Predicated region
      $region9: #{feature_reconstruction_loss.7} parent=5 // pred_check
        _
      $region10: #{feature_reconstruction_loss.7} parent=5 // pred_check_branch
        %194 = sbr.rel (%p191) target = $region12
      $region11: #{feature_reconstruction_loss.7} parent=5 // pred_region
        %s195 = ssub.s32 %s14, 1
        // Predicated region
        $region13: #{feature_reconstruction_loss.7} parent=11 // pred_check
          %p196 = pneg %p87
        $region14: #{feature_reconstruction_loss.7} parent=11 // pred_check_branch
          %198 = sbr.rel (%p196) target = $region16
        $region15: #{feature_reconstruction_loss.7} parent=11 // pred_region
          _
        $region16: #{feature_reconstruction_loss.7} parent=11 // pred_fallthru
          _
        // Predicated region
        $region17: #{feature_reconstruction_loss.7} parent=11 // pred_check
          %p199 = pneg %p108
        $region18: #{feature_reconstruction_loss.7} parent=11 // pred_check_branch
          %201 = sbr.rel (%p199) target = $region20
        $region19: #{feature_reconstruction_loss.7} parent=11 // pred_region
          _
        $region20: #{feature_reconstruction_loss.7} parent=11 // pred_fallthru
          _
      $region12: #{feature_reconstruction_loss.7} parent=5 // pred_fallthru
        _
      %p202 = scmp.lt.s32.totalorder %s14, 2
      // Predicated region
      $region21: #{feature_reconstruction_loss.7} parent=5 // pred_check
        %p203 = pneg %p202
      $region22: #{feature_reconstruction_loss.7} parent=5 // pred_check_branch
        %205 = sbr.rel (%p203) target = $region24
      $region23: #{feature_reconstruction_loss.7} parent=5 // pred_region
        // Predicated region
        $region25: #{feature_reconstruction_loss.7} parent=23 // pred_check
          %p206 = pneg %p34
        $region26: #{feature_reconstruction_loss.7} parent=23 // pred_check_branch
          %208 = sbr.rel (%p206) target = $region28
        $region27: #{feature_reconstruction_loss.7} parent=23 // pred_region
          %s209 = sand.u32 %s24, 1
          %s210 = sand.u32 %s24, 1
          %s211 = smul.addr %s210, 72
          %s212 = scalar_lea.vmem [#allocation3], %s211
          %s213 = smul.u32 2, %s14
          %s214 = smul.addr %s213, 4
          %s215 = scalar_lea.vmem %s0, %s214
          // Predicated region
          $region29: #{feature_reconstruction_loss.7} parent=27 // pred_check
            _
          $region30: #{feature_reconstruction_loss.7} parent=27 // pred_check_branch
            %217 = sbr.rel (0) target = $region32
          $region31: #{feature_reconstruction_loss.7} parent=27 // pred_region
            // Predicated region
            $region33: #{feature_reconstruction_loss.7} parent=31 // pred_check
              _
            $region34: #{feature_reconstruction_loss.7} parent=31 // pred_check_branch
              %219 = sbr.rel (0) target = $region36
            $region35: #{feature_reconstruction_loss.7} parent=31 // pred_region
              // Predicated region
              $region48: #{feature_reconstruction_loss.7} parent=35 // pred_check
                _
              $region49: #{feature_reconstruction_loss.7} parent=35 // pred_check_branch
                %251 = sbr.rel (0) target = $region51
              $region50: #{feature_reconstruction_loss.7} parent=35 // pred_region
                loop: start=0, step=1, limit=1
                $region52: #{feature_reconstruction_loss.7} parent=50 // loop_pre_header
                  _
                $region53: #{feature_reconstruction_loss.7} parent=50 // loop_header
                  %s253 = sphi 0, %s257
                  %p254 = scmp.ge.s32.totalorder %s253, 1
                  %s258 = sphi %s215, %s215
                  %s259 = sphi %s212, %s212
                $region54: #{feature_reconstruction_loss.7} parent=50 // loop_header_branch
                  %256 = sbr.rel (%p254) target = $region58
                $region55: #{feature_reconstruction_loss.7} parent=50 // loop_body
                  %v260 = vld [vmem:[%s258] sm:$0xff]
                  %261 = vst [vmem:[%s259] sm:$0xff] %v260
                  %v262 = vld [vmem:[%s258 + $0x10] sm:$0xff]
                  %263 = vst [vmem:[%s259 + $0x8] sm:$0xff] %v262
                  %v264 = vld [vmem:[%s258 + $0x20] sm:$0xff]
                  %265 = vst [vmem:[%s259 + $0x10] sm:$0xff] %v264
                  %v266 = vld [vmem:[%s258 + $0x30] sm:$0xff]
                  %267 = vst [vmem:[%s259 + $0x18] sm:$0xff] %v266
                  %v268 = vld [vmem:[%s258 + $0x40] sm:$0xff]
                  %269 = vst [vmem:[%s259 + $0x20] sm:$0xff] %v268
                  %v270 = vld [vmem:[%s258 + $0x50] sm:$0xff]
                  %271 = vst [vmem:[%s259 + $0x28] sm:$0xff] %v270
                  %v272 = vld [vmem:[%s258 + $0x60] sm:$0xff]
                  %273 = vst [vmem:[%s259 + $0x30] sm:$0xff] %v272
                  %v274 = vld [vmem:[%s258 + $0x70] sm:$0xff]
                  %275 = vst [vmem:[%s259 + $0x38] sm:$0xff] %v274
                  %v276 = vld [vmem:[%s258 + $0x80] sm:$0xff]
                  %277 = vst [vmem:[%s259 + $0x40] sm:$0xff] %v276
                $region56: #{feature_reconstruction_loss.7} parent=50 // loop_footer
                  %s257 = sadd.s32 1, %s253
                $region57: #{feature_reconstruction_loss.7} parent=50 // loop_footer_branch
                  %252 = sbr.rel target = $region53
                $region58: #{feature_reconstruction_loss.7} parent=50 // loop_exit
                  _
              $region51: #{feature_reconstruction_loss.7} parent=35 // pred_fallthru
                _
              // Predicated region
              $region59: #{feature_reconstruction_loss.7} parent=35 // pred_check
                _
              $region60: #{feature_reconstruction_loss.7} parent=35 // pred_check_branch
                %279 = sbr.rel target = $region62
              $region61: #{feature_reconstruction_loss.7} parent=35 // pred_region
                _
              $region62: #{feature_reconstruction_loss.7} parent=35 // pred_fallthru
                _
            $region36: #{feature_reconstruction_loss.7} parent=31 // pred_fallthru
              _
            // Predicated region
            $region37: #{feature_reconstruction_loss.7} parent=31 // pred_check
              _
            $region38: #{feature_reconstruction_loss.7} parent=31 // pred_check_branch
              %221 = sbr.rel target = $region40
            $region39: #{feature_reconstruction_loss.7} parent=31 // pred_region
              %s223 = ssub.s32 256, 1
              loop: start=0, step=1, limit=1
              $region41: #{feature_reconstruction_loss.7} parent=39 // loop_pre_header
                _
              $region42: #{feature_reconstruction_loss.7} parent=39 // loop_header
                %s225 = sphi 0, %s229
                %p226 = scmp.ge.s32.totalorder %s225, 1
                %s230 = sphi %s215, %s215
                %s231 = sphi %s212, %s212
              $region43: #{feature_reconstruction_loss.7} parent=39 // loop_header_branch
                %228 = sbr.rel (%p226) target = $region47
              $region44: #{feature_reconstruction_loss.7} parent=39 // loop_body
                %v232 = vld [vmem:[%s230] sm:%s223]
                %233 = vst [vmem:[%s231] sm:%s223] %v232
                %v234 = vld [vmem:[%s230 + $0x10] sm:%s223]
                %235 = vst [vmem:[%s231 + $0x8] sm:%s223] %v234
                %v236 = vld [vmem:[%s230 + $0x20] sm:%s223]
                %237 = vst [vmem:[%s231 + $0x10] sm:%s223] %v236
                %v238 = vld [vmem:[%s230 + $0x30] sm:%s223]
                %239 = vst [vmem:[%s231 + $0x18] sm:%s223] %v238
                %v240 = vld [vmem:[%s230 + $0x40] sm:%s223]
                %241 = vst [vmem:[%s231 + $0x20] sm:%s223] %v240
                %v242 = vld [vmem:[%s230 + $0x50] sm:%s223]
                %243 = vst [vmem:[%s231 + $0x28] sm:%s223] %v242
                %v244 = vld [vmem:[%s230 + $0x60] sm:%s223]
                %245 = vst [vmem:[%s231 + $0x30] sm:%s223] %v244
                %v246 = vld [vmem:[%s230 + $0x70] sm:%s223]
                %247 = vst [vmem:[%s231 + $0x38] sm:%s223] %v246
                %v248 = vld [vmem:[%s230 + $0x80] sm:%s223]
                %249 = vst [vmem:[%s231 + $0x40] sm:%s223] %v248
              $region45: #{feature_reconstruction_loss.7} parent=39 // loop_footer
                %s229 = sadd.s32 1, %s225
              $region46: #{feature_reconstruction_loss.7} parent=39 // loop_footer_branch
                %224 = sbr.rel target = $region42
              $region47: #{feature_reconstruction_loss.7} parent=39 // loop_exit
                _
            $region40: #{feature_reconstruction_loss.7} parent=31 // pred_fallthru
              _
          $region32: #{feature_reconstruction_loss.7} parent=27 // pred_fallthru
            _
          %280 = vnop
        $region28: #{feature_reconstruction_loss.7} parent=23 // pred_fallthru
          _
        // Predicated region
        $region63: #{feature_reconstruction_loss.7} parent=23 // pred_check
          %p281 = pneg %p60
        $region64: #{feature_reconstruction_loss.7} parent=23 // pred_check_branch
          %283 = sbr.rel (%p281) target = $region66
        $region65: #{feature_reconstruction_loss.7} parent=23 // pred_region
          %s284 = sand.u32 %s50, 1
          %s285 = sand.u32 %s50, 1
          %s286 = smul.addr %s285, 72
          %s287 = scalar_lea.vmem [#allocation4], %s286
          %s288 = smul.u32 2, %s14
          %s289 = smul.addr %s288, 4
          %s290 = scalar_lea.vmem %s1, %s289
          // Predicated region
          $region67: #{feature_reconstruction_loss.7} parent=65 // pred_check
            _
          $region68: #{feature_reconstruction_loss.7} parent=65 // pred_check_branch
            %292 = sbr.rel (0) target = $region70
          $region69: #{feature_reconstruction_loss.7} parent=65 // pred_region
            // Predicated region
            $region71: #{feature_reconstruction_loss.7} parent=69 // pred_check
              _
            $region72: #{feature_reconstruction_loss.7} parent=69 // pred_check_branch
              %294 = sbr.rel (0) target = $region74
            $region73: #{feature_reconstruction_loss.7} parent=69 // pred_region
              // Predicated region
              $region86: #{feature_reconstruction_loss.7} parent=73 // pred_check
                _
              $region87: #{feature_reconstruction_loss.7} parent=73 // pred_check_branch
                %326 = sbr.rel (0) target = $region89
              $region88: #{feature_reconstruction_loss.7} parent=73 // pred_region
                loop: start=0, step=1, limit=1
                $region90: #{feature_reconstruction_loss.7} parent=88 // loop_pre_header
                  _
                $region91: #{feature_reconstruction_loss.7} parent=88 // loop_header
                  %s328 = sphi 0, %s332
                  %p329 = scmp.ge.s32.totalorder %s328, 1
                  %s333 = sphi %s290, %s290
                  %s334 = sphi %s287, %s287
                $region92: #{feature_reconstruction_loss.7} parent=88 // loop_header_branch
                  %331 = sbr.rel (%p329) target = $region96
                $region93: #{feature_reconstruction_loss.7} parent=88 // loop_body
                  %v335 = vld [vmem:[%s333] sm:$0xff]
                  %336 = vst [vmem:[%s334] sm:$0xff] %v335
                  %v337 = vld [vmem:[%s333 + $0x10] sm:$0xff]
                  %338 = vst [vmem:[%s334 + $0x8] sm:$0xff] %v337
                  %v339 = vld [vmem:[%s333 + $0x20] sm:$0xff]
                  %340 = vst [vmem:[%s334 + $0x10] sm:$0xff] %v339
                  %v341 = vld [vmem:[%s333 + $0x30] sm:$0xff]
                  %342 = vst [vmem:[%s334 + $0x18] sm:$0xff] %v341
                  %v343 = vld [vmem:[%s333 + $0x40] sm:$0xff]
                  %344 = vst [vmem:[%s334 + $0x20] sm:$0xff] %v343
                  %v345 = vld [vmem:[%s333 + $0x50] sm:$0xff]
                  %346 = vst [vmem:[%s334 + $0x28] sm:$0xff] %v345
                  %v347 = vld [vmem:[%s333 + $0x60] sm:$0xff]
                  %348 = vst [vmem:[%s334 + $0x30] sm:$0xff] %v347
                  %v349 = vld [vmem:[%s333 + $0x70] sm:$0xff]
                  %350 = vst [vmem:[%s334 + $0x38] sm:$0xff] %v349
                  %v351 = vld [vmem:[%s333 + $0x80] sm:$0xff]
                  %352 = vst [vmem:[%s334 + $0x40] sm:$0xff] %v351
                $region94: #{feature_reconstruction_loss.7} parent=88 // loop_footer
                  %s332 = sadd.s32 1, %s328
                $region95: #{feature_reconstruction_loss.7} parent=88 // loop_footer_branch
                  %327 = sbr.rel target = $region91
                $region96: #{feature_reconstruction_loss.7} parent=88 // loop_exit
                  _
              $region89: #{feature_reconstruction_loss.7} parent=73 // pred_fallthru
                _
              // Predicated region
              $region97: #{feature_reconstruction_loss.7} parent=73 // pred_check
                _
              $region98: #{feature_reconstruction_loss.7} parent=73 // pred_check_branch
                %354 = sbr.rel target = $region100
              $region99: #{feature_reconstruction_loss.7} parent=73 // pred_region
                _
              $region100: #{feature_reconstruction_loss.7} parent=73 // pred_fallthru
                _
            $region74: #{feature_reconstruction_loss.7} parent=69 // pred_fallthru
              _
            // Predicated region
            $region75: #{feature_reconstruction_loss.7} parent=69 // pred_check
              _
            $region76: #{feature_reconstruction_loss.7} parent=69 // pred_check_branch
              %296 = sbr.rel target = $region78
            $region77: #{feature_reconstruction_loss.7} parent=69 // pred_region
              %s298 = ssub.s32 256, 1
              loop: start=0, step=1, limit=1
              $region79: #{feature_reconstruction_loss.7} parent=77 // loop_pre_header
                _
              $region80: #{feature_reconstruction_loss.7} parent=77 // loop_header
                %s300 = sphi 0, %s304
                %p301 = scmp.ge.s32.totalorder %s300, 1
                %s305 = sphi %s290, %s290
                %s306 = sphi %s287, %s287
              $region81: #{feature_reconstruction_loss.7} parent=77 // loop_header_branch
                %303 = sbr.rel (%p301) target = $region85
              $region82: #{feature_reconstruction_loss.7} parent=77 // loop_body
                %v307 = vld [vmem:[%s305] sm:%s298]
                %308 = vst [vmem:[%s306] sm:%s298] %v307
                %v309 = vld [vmem:[%s305 + $0x10] sm:%s298]
                %310 = vst [vmem:[%s306 + $0x8] sm:%s298] %v309
                %v311 = vld [vmem:[%s305 + $0x20] sm:%s298]
                %312 = vst [vmem:[%s306 + $0x10] sm:%s298] %v311
                %v313 = vld [vmem:[%s305 + $0x30] sm:%s298]
                %314 = vst [vmem:[%s306 + $0x18] sm:%s298] %v313
                %v315 = vld [vmem:[%s305 + $0x40] sm:%s298]
                %316 = vst [vmem:[%s306 + $0x20] sm:%s298] %v315
                %v317 = vld [vmem:[%s305 + $0x50] sm:%s298]
                %318 = vst [vmem:[%s306 + $0x28] sm:%s298] %v317
                %v319 = vld [vmem:[%s305 + $0x60] sm:%s298]
                %320 = vst [vmem:[%s306 + $0x30] sm:%s298] %v319
                %v321 = vld [vmem:[%s305 + $0x70] sm:%s298]
                %322 = vst [vmem:[%s306 + $0x38] sm:%s298] %v321
                %v323 = vld [vmem:[%s305 + $0x80] sm:%s298]
                %324 = vst [vmem:[%s306 + $0x40] sm:%s298] %v323
              $region83: #{feature_reconstruction_loss.7} parent=77 // loop_footer
                %s304 = sadd.s32 1, %s300
              $region84: #{feature_reconstruction_loss.7} parent=77 // loop_footer_branch
                %299 = sbr.rel target = $region80
              $region85: #{feature_reconstruction_loss.7} parent=77 // loop_exit
                _
            $region78: #{feature_reconstruction_loss.7} parent=69 // pred_fallthru
              _
          $region70: #{feature_reconstruction_loss.7} parent=65 // pred_fallthru
            _
          %355 = vnop
        $region66: #{feature_reconstruction_loss.7} parent=23 // pred_fallthru
          _
      $region24: #{feature_reconstruction_loss.7} parent=5 // pred_fallthru
        _
      %p356 = scmp.le.s32.totalorder 1, %s14
      %p357 = scmp.lt.s32.totalorder %s14, 3
      %p358 = pnand %p356, %p357
      %p359 = pneg %p358
      // Predicated region
      $region101: #{feature_reconstruction_loss.7} parent=5 // pred_check
        _
      $region102: #{feature_reconstruction_loss.7} parent=5 // pred_check_branch
        %361 = sbr.rel (%p358) target = $region104
      $region103: #{feature_reconstruction_loss.7} parent=5 // pred_region
        %s362 = ssub.s32 %s14, 1
        %s363 = sand.u32 %s27, 1
        %s364 = sand.u32 %s27, 1
        %s365 = smul.addr %s364, 72
        %s366 = scalar_lea.vmem [#allocation3], %s365
        // Predicated region
        $region105: #{feature_reconstruction_loss.7} parent=103 // pred_check
          %p367 = pneg %p40
        $region106: #{feature_reconstruction_loss.7} parent=103 // pred_check_branch
          %369 = sbr.rel (%p367) target = $region108
        $region107: #{feature_reconstruction_loss.7} parent=103 // pred_region
          _
        $region108: #{feature_reconstruction_loss.7} parent=103 // pred_fallthru
          _
        %s370 = sand.u32 %s53, 1
        %s371 = sand.u32 %s53, 1
        %s372 = smul.addr %s371, 72
        %s373 = scalar_lea.vmem [#allocation4], %s372
        // Predicated region
        $region109: #{feature_reconstruction_loss.7} parent=103 // pred_check
          %p374 = pneg %p66
        $region110: #{feature_reconstruction_loss.7} parent=103 // pred_check_branch
          %376 = sbr.rel (%p374) target = $region112
        $region111: #{feature_reconstruction_loss.7} parent=103 // pred_region
          _
        $region112: #{feature_reconstruction_loss.7} parent=103 // pred_fallthru
          _
        %s377 = sand.u32 %s27, 1
        %s378 = sand.u32 %s27, 1
        %s379 = smul.addr %s378, 72
        %s380 = scalar_lea.vmem [#allocation3], %s379
        %p381 = pneg %p40
        %p382 = pneg %p37
        %s383 = sand.u32 %s53, 1
        %s384 = sand.u32 %s53, 1
        %s385 = smul.addr %s384, 72
        %s386 = scalar_lea.vmem [#allocation4], %s385
        %p387 = pneg %p66
        %p388 = pneg %p63
        %p389 = pneg %p87
        %p390 = pneg %p84
        %p391 = pneg %p108
        %p392 = pneg %p105
        %p393 = pneg %p134
        %p394 = pneg %p131
        %s395 = sand.u32 %s121, 1
        %s396 = sand.u32 %s121, 1
        %s397 = smul.addr %s396, 16
        %s398 = scalar_lea.vmem [#allocation5], %s397
        %p399 = pneg %p160
        %p400 = pneg %p157
        %s401 = sand.u32 %s147, 1
        %s402 = sand.u32 %s147, 1
        %s403 = smul.addr %s402, 16
        %s404 = scalar_lea.vmem [#allocation6], %s403
        %p405 = pneg %p181
        %p406 = pneg %p178
        %s407 = smul.u32 2, %s19
        %s408 = smul.u32 2, %s19
        %s409 = smul.u32 2, %s19
        %s410 = smul.u32 2, %s19
        %p412 = scmp.eq.s32.totalorder %s19, 0
        // Predicated region
        $region113: #{feature_reconstruction_loss.7} parent=103 // pred_check
          %p413 = pneg %p412
        $region114: #{feature_reconstruction_loss.7} parent=103 // pred_check_branch
          %415 = sbr.rel (%p413) target = $region116
        $region115: #{feature_reconstruction_loss.7} parent=103 // pred_region
          %v416 = vlaneseq
          %vm417 = vcmp.ge.s32.totalorder %v416, 0
          %vm418 = vcmp.lt.s32.totalorder %v416, 256
          %vm419 = vmand %vm417, %vm418
          %420 = vst.msk [vmem:[#allocation2] sm:$0x3] %vm419, 0.0
        $region116: #{feature_reconstruction_loss.7} parent=103 // pred_fallthru
          _
        %v421 = vld [vmem:[%s2] sm:$0xf]
        %v422 = vld [vmem:[%s2 + $0x4] sm:$0xf]
        %v423 = vld [vmem:[%s3] sm:$0xff]
        %v424 = vld [vmem:[%s3 + $0x8] sm:$0xff]
        %v425 = vld [vmem:[%s366] sm:$0xff]
        %v426 = vld [vmem:[%s366 + $0x8] sm:$0xff]
        %v427 = vld [vmem:[%s366 + $0x10] sm:$0xff]
        %v428 = vld [vmem:[%s366 + $0x18] sm:$0xff]
        %v429 = vld [vmem:[%s366 + $0x20] sm:$0xff]
        %v430 = vld [vmem:[%s366 + $0x28] sm:$0xff]
        %v431 = vld [vmem:[%s366 + $0x30] sm:$0xff]
        %v432 = vld [vmem:[%s366 + $0x38] sm:$0xff]
        %v433 = vld [vmem:[%s366 + $0x40] sm:$0xff]
        %435 = vset.pattern.permute.xlu0 0
        %436 = vperm.xlu0 %435, %v423
        %v437 = vpop.permute.xlu0 %436
        %440 = vset.pattern.permute.xlu0 0
        %441 = vperm.xlu0 %440, %v424
        %v442 = vpop.permute.xlu0 %441
        %v446 = vunpack.c.l.b16 %v421
        %v447 = vunpack.c.l.b16 %v422
        %v448 = vpack.c.b16 %v447, %v446
        %v458 = vunpack.c.l.b16 %v425
        %v459 = vunpack.c.h.b16 %v425
        %v460 = vunpack.c.l.b16 %v426
        %v461 = vunpack.c.h.b16 %v426
        %v462 = vunpack.c.l.b16 %v427
        %v463 = vunpack.c.h.b16 %v427
        %v464 = vunpack.c.l.b16 %v428
        %v465 = vunpack.c.h.b16 %v428
        %v466 = vunpack.c.l.b16 %v429
        %v467 = vunpack.c.h.b16 %v429
        %v468 = vunpack.c.l.b16 %v430
        %v469 = vunpack.c.h.b16 %v430
        %v470 = vunpack.c.l.b16 %v431
        %v471 = vunpack.c.h.b16 %v431
        %v472 = vunpack.c.l.b16 %v432
        %v473 = vunpack.c.h.b16 %v432
        %v474 = vunpack.c.l.b16 %v433
        %v475 = vunpack.c.h.b16 %v433
        %v476 = vpack.c.b16 %v460, %v458
        %v477 = vpack.c.b16 %v461, %v459
        %v478 = vpack.c.b16 %v464, %v462
        %v479 = vpack.c.b16 %v465, %v463
        %v480 = vpack.c.b16 %v468, %v466
        %v481 = vpack.c.b16 %v469, %v467
        %v482 = vpack.c.b16 %v472, %v470
        %v483 = vpack.c.b16 %v473, %v471
        %v484 = vpack.c.b16 %v474, %v474
        %v485 = vpack.c.b16 %v475, %v475
        %vm494 = vcmask 588800
        %v496 = vsel %vm494, %v448, 0
        %vm498 = vcmask 1043456
        %v500 = vsel %vm498, %v484, 0
        %v503 = vsel %vm498, %v485, 0
        %505 = vmatpush.bf16.msra.mxu0 0
        %506 = vmatpush.bf16.msra.mxu0 0
        %507 = vmatpush.bf16.msra.mxu0 0
        %508 = vmatpush.bf16.msra.mxu0 %v500
        %509 = vmatpush.bf16.msra.mxu0 %v482
        %510 = vmatpush.bf16.msra.mxu0 %v480
        %511 = vmatpush.bf16.msra.mxu0 %v478
        %512 = vmatpush.bf16.msra.mxu0 %v476
        %513 = vmatmul.bf16.gmra.mxu0 %v496
        %v514 = vpop.f32.mrf.mxu0
        %v515 = vadd.f32 %v437, %v514
        %v516 = vpop.f32.mrf.mxu0
        %v517 = vadd.f32 %v442, %v516
        %518 = vdwg.mxu0
        %519 = vmatpush.bf16.msra.mxu0 0
        %520 = vmatpush.bf16.msra.mxu0 0
        %521 = vmatpush.bf16.msra.mxu0 0
        %522 = vmatpush.bf16.msra.mxu0 %v503
        %523 = vmatpush.bf16.msra.mxu0 %v483
        %524 = vmatpush.bf16.msra.mxu0 %v481
        %525 = vmatpush.bf16.msra.mxu0 %v479
        %526 = vmatpush.bf16.msra.mxu0 %v477
        %527 = vmatmul.bf16.gmra.mxu0 %v496
        %v528 = vpop.f32.mrf.mxu0
        %v529 = vadd.f32 %v437, %v528
        %v530 = vpop.f32.mrf.mxu0
        %v531 = vadd.f32 %v442, %v530
        %532 = vdwg.mxu0
        %v533 = vld [vmem:[%s373] sm:$0xff]
        %v534 = vld [vmem:[%s373 + $0x8] sm:$0xff]
        %v535 = vld [vmem:[%s373 + $0x10] sm:$0xff]
        %v536 = vld [vmem:[%s373 + $0x18] sm:$0xff]
        %v537 = vld [vmem:[%s373 + $0x20] sm:$0xff]
        %v538 = vld [vmem:[%s373 + $0x28] sm:$0xff]
        %v539 = vld [vmem:[%s373 + $0x30] sm:$0xff]
        %v540 = vld [vmem:[%s373 + $0x38] sm:$0xff]
        %v541 = vld [vmem:[%s373 + $0x40] sm:$0xff]
        %v551 = vunpack.c.l.b16 %v533
        %v552 = vunpack.c.h.b16 %v533
        %v553 = vunpack.c.l.b16 %v534
        %v554 = vunpack.c.h.b16 %v534
        %v555 = vunpack.c.l.b16 %v535
        %v556 = vunpack.c.h.b16 %v535
        %v557 = vunpack.c.l.b16 %v536
        %v558 = vunpack.c.h.b16 %v536
        %v559 = vunpack.c.l.b16 %v537
        %v560 = vunpack.c.h.b16 %v537
        %v561 = vunpack.c.l.b16 %v538
        %v562 = vunpack.c.h.b16 %v538
        %v563 = vunpack.c.l.b16 %v539
        %v564 = vunpack.c.h.b16 %v539
        %v565 = vunpack.c.l.b16 %v540
        %v566 = vunpack.c.h.b16 %v540
        %v567 = vunpack.c.l.b16 %v541
        %v568 = vunpack.c.h.b16 %v541
        %v569 = vpack.c.b16 %v553, %v551
        %v570 = vpack.c.b16 %v554, %v552
        %v571 = vpack.c.b16 %v557, %v555
        %v572 = vpack.c.b16 %v558, %v556
        %v573 = vpack.c.b16 %v561, %v559
        %v574 = vpack.c.b16 %v562, %v560
        %v575 = vpack.c.b16 %v565, %v563
        %v576 = vpack.c.b16 %v566, %v564
        %v577 = vpack.c.b16 %v567, %v567
        %v578 = vpack.c.b16 %v568, %v568
        %v588 = vsel %vm498, %v577, 0
        %v591 = vsel %vm498, %v578, 0
        %593 = vmatpush.bf16.msra.mxu0 0
        %594 = vmatpush.bf16.msra.mxu0 0
        %595 = vmatpush.bf16.msra.mxu0 0
        %596 = vmatpush.bf16.msra.mxu0 %v588
        %597 = vmatpush.bf16.msra.mxu0 %v575
        %598 = vmatpush.bf16.msra.mxu0 %v573
        %599 = vmatpush.bf16.msra.mxu0 %v571
        %600 = vmatpush.bf16.msra.mxu0 %v569
        %601 = vmatmul.bf16.gmra.mxu0 %v496
        %v602 = vpop.f32.mrf.mxu0
        %v603 = vadd.f32 %v437, %v602
        %v604 = vpop.f32.mrf.mxu0
        %v605 = vadd.f32 %v442, %v604
        %606 = vdwg.mxu0
        %607 = vmatpush.bf16.msra.mxu0 0
        %608 = vmatpush.bf16.msra.mxu0 0
        %609 = vmatpush.bf16.msra.mxu0 0
        %610 = vmatpush.bf16.msra.mxu0 %v591
        %611 = vmatpush.bf16.msra.mxu0 %v576
        %612 = vmatpush.bf16.msra.mxu0 %v574
        %613 = vmatpush.bf16.msra.mxu0 %v572
        %614 = vmatpush.bf16.msra.mxu0 %v570
        %615 = vmatmul.bf16.gmra.mxu0 %v496
        %v616 = vpop.f32.mrf.mxu0
        %v617 = vadd.f32 %v437, %v616
        %v618 = vpop.f32.mrf.mxu0
        %v619 = vadd.f32 %v442, %v618
        %620 = vdwg.mxu0
        %v621 = vsub.f32 %v515, %v603
        %v622 = vsub.f32 %v529, %v617
        %v623 = vsub.f32 %v517, %v605
        %v624 = vsub.f32 %v531, %v619
        %v625 = vld [vmem:[#allocation2] sm:$0x3]
        %v626 = vmul.f32 %v621, %v621
        %v627 = vmul.f32 %v622, %v622
        %v628 = vmul.f32 %v623, %v623
        %v629 = vmul.f32 %v624, %v624
        %v630 = vadd.f32 %v626, %v628
        %v631 = vrot.slane %v630, 4
        %v632 = vadd.f32 %v630, %v631
        %v633 = vrot.slane %v632, 2
        %v634 = vadd.f32 %v632, %v633
        %v635 = vrot.slane %v634, 1
        %v636 = vadd.f32 %v634, %v635
        %v637 = vadd.f32 %v627, %v629
        %v638 = vrot.slane %v637, 4
        %v639 = vadd.f32 %v637, %v638
        %v640 = vrot.slane %v639, 2
        %v641 = vadd.f32 %v639, %v640
        %v642 = vrot.slane %v641, 1
        %v643 = vadd.f32 %v641, %v642
        %v646 = vrot.slane %v643, 7
        %vm647 = vcmask 1040384
        %v648 = vsel %vm647, %v636, %v646
        %v650 = vadd.f32 %v625, %v648
        %v651 = vlaneseq
        %vm652 = vcmp.ge.s32.totalorder %v651, 0
        %vm653 = vcmp.lt.s32.totalorder %v651, 256
        %vm654 = vmand %vm652, %vm653
        %655 = vst.msk [vmem:[#allocation2] sm:$0x3] %vm654, %v650
        %v656 = vmax.f32 %v515, 0.0
        %v657 = vmax.f32 %v529, 0.0
        %v658 = vmax.f32 %v517, 0.0
        %v659 = vmax.f32 %v531, 0.0
        %v660 = vpack.c.bf16 %v657, %v656
        %v661 = vpack.c.bf16 %v659, %v658
        %662 = vst [vmem:[%s398] sm:$0xff] %v660
        %663 = vst [vmem:[%s398 + $0x8] sm:$0xff] %v661
        %v664 = vmax.f32 %v603, 0.0
        %v665 = vmax.f32 %v617, 0.0
        %v666 = vmax.f32 %v605, 0.0
        %v667 = vmax.f32 %v619, 0.0
        %v668 = vpack.c.bf16 %v665, %v664
        %v669 = vpack.c.bf16 %v667, %v666
        %670 = vst [vmem:[%s404] sm:$0xff] %v668
        %671 = vst [vmem:[%s404 + $0x8] sm:$0xff] %v669
        %p672 = scmp.eq.s32.totalorder %s19, 1
        // Predicated region
        $region117: #{feature_reconstruction_loss.7} parent=103 // pred_check
          %p673 = pneg %p672
        $region118: #{feature_reconstruction_loss.7} parent=103 // pred_check_branch
          %675 = sbr.rel (%p673) target = $region120
        $region119: #{feature_reconstruction_loss.7} parent=103 // pred_region
          %v676 = vld [vmem:[#allocation2] sm:$0x3]
          %v678 = vperm.slane %v676, 0
          %v679 = vperm.slane %v676, 1
          %v682 = vsel %vm647, %v678, 0.0
          %v683 = vsel %vm647, %v679, 0.0
          %v684 = vadd.f32 %v682, %v683
          %685 = vadd.xlane.f32.xlu0 %v684
          %v686 = vpop.xlane.xlu0 %685
          %v687 = vrot.slane %v686, 4
          %v688 = vadd.f32 %v686, %v687
          %v689 = vrot.slane %v688, 2
          %v690 = vadd.f32 %v688, %v689
          %v691 = vrot.slane %v690, 1
          %v692 = vadd.f32 %v690, %v691
          %s693 = vtos %v692
          %s694 = scalar_lea.smem [#allocation7], 0
          %695 = sst [smem:[%s694]] %s693
        $region120: #{feature_reconstruction_loss.7} parent=103 // pred_fallthru
          _
        %s696 = sand.u32 %s121, 1
        %s697 = sand.u32 %s121, 1
        %s698 = smul.addr %s697, 16
        %s699 = scalar_lea.vmem [#allocation5], %s698
        %s700 = sand.u32 %s147, 1
        %s701 = sand.u32 %s147, 1
        %s702 = smul.addr %s701, 16
        %s703 = scalar_lea.vmem [#allocation6], %s702
        // Predicated region
        $region121: #{feature_reconstruction_loss.7} parent=103 // pred_check
          %p704 = pneg %p131
        $region122: #{feature_reconstruction_loss.7} parent=103 // pred_check_branch
          %706 = sbr.rel (%p704) target = $region124
        $region123: #{feature_reconstruction_loss.7} parent=103 // pred_region
          %s707 = smul.u32 2, %s19
          %s708 = smul.addr %s707, 4
          %s709 = scalar_lea.vmem %s4, %s708
          // Predicated region
          $region125: #{feature_reconstruction_loss.7} parent=123 // pred_check
            _
          $region126: #{feature_reconstruction_loss.7} parent=123 // pred_check_branch
            %711 = sbr.rel (0) target = $region128
          $region127: #{feature_reconstruction_loss.7} parent=123 // pred_region
            // Predicated region
            $region129: #{feature_reconstruction_loss.7} parent=127 // pred_check
              _
            $region130: #{feature_reconstruction_loss.7} parent=127 // pred_check_branch
              %713 = sbr.rel (0) target = $region132
            $region131: #{feature_reconstruction_loss.7} parent=127 // pred_region
              // Predicated region
              $region144: #{feature_reconstruction_loss.7} parent=131 // pred_check
                _
              $region145: #{feature_reconstruction_loss.7} parent=131 // pred_check_branch
                %731 = sbr.rel (0) target = $region147
              $region146: #{feature_reconstruction_loss.7} parent=131 // pred_region
                loop: start=0, step=1, limit=1
                $region148: #{feature_reconstruction_loss.7} parent=146 // loop_pre_header
                  _
                $region149: #{feature_reconstruction_loss.7} parent=146 // loop_header
                  %s733 = sphi 0, %s737
                  %p734 = scmp.ge.s32.totalorder %s733, 1
                  %s738 = sphi %s699, %s699
                  %s739 = sphi %s709, %s709
                $region150: #{feature_reconstruction_loss.7} parent=146 // loop_header_branch
                  %736 = sbr.rel (%p734) target = $region154
                $region151: #{feature_reconstruction_loss.7} parent=146 // loop_body
                  %v740 = vld [vmem:[%s738] sm:$0xff]
                  %741 = vst [vmem:[%s739] sm:$0xff] %v740
                  %v742 = vld [vmem:[%s738 + $0x8] sm:$0xff]
                  %743 = vst [vmem:[%s739 + $0x10] sm:$0xff] %v742
                $region152: #{feature_reconstruction_loss.7} parent=146 // loop_footer
                  %s737 = sadd.s32 1, %s733
                $region153: #{feature_reconstruction_loss.7} parent=146 // loop_footer_branch
                  %732 = sbr.rel target = $region149
                $region154: #{feature_reconstruction_loss.7} parent=146 // loop_exit
                  _
              $region147: #{feature_reconstruction_loss.7} parent=131 // pred_fallthru
                _
              // Predicated region
              $region155: #{feature_reconstruction_loss.7} parent=131 // pred_check
                _
              $region156: #{feature_reconstruction_loss.7} parent=131 // pred_check_branch
                %745 = sbr.rel target = $region158
              $region157: #{feature_reconstruction_loss.7} parent=131 // pred_region
                _
              $region158: #{feature_reconstruction_loss.7} parent=131 // pred_fallthru
                _
            $region132: #{feature_reconstruction_loss.7} parent=127 // pred_fallthru
              _
            // Predicated region
            $region133: #{feature_reconstruction_loss.7} parent=127 // pred_check
              _
            $region134: #{feature_reconstruction_loss.7} parent=127 // pred_check_branch
              %715 = sbr.rel target = $region136
            $region135: #{feature_reconstruction_loss.7} parent=127 // pred_region
              %s717 = ssub.s32 256, 1
              loop: start=0, step=1, limit=1
              $region137: #{feature_reconstruction_loss.7} parent=135 // loop_pre_header
                _
              $region138: #{feature_reconstruction_loss.7} parent=135 // loop_header
                %s719 = sphi 0, %s723
                %p720 = scmp.ge.s32.totalorder %s719, 1
                %s724 = sphi %s699, %s699
                %s725 = sphi %s709, %s709
              $region139: #{feature_reconstruction_loss.7} parent=135 // loop_header_branch
                %722 = sbr.rel (%p720) target = $region143
              $region140: #{feature_reconstruction_loss.7} parent=135 // loop_body
                %v726 = vld [vmem:[%s724] sm:%s717]
                %727 = vst [vmem:[%s725] sm:%s717] %v726
                %v728 = vld [vmem:[%s724 + $0x8] sm:%s717]
                %729 = vst [vmem:[%s725 + $0x10] sm:%s717] %v728
              $region141: #{feature_reconstruction_loss.7} parent=135 // loop_footer
                %s723 = sadd.s32 1, %s719
              $region142: #{feature_reconstruction_loss.7} parent=135 // loop_footer_branch
                %718 = sbr.rel target = $region138
              $region143: #{feature_reconstruction_loss.7} parent=135 // loop_exit
                _
            $region136: #{feature_reconstruction_loss.7} parent=127 // pred_fallthru
              _
          $region128: #{feature_reconstruction_loss.7} parent=123 // pred_fallthru
            _
          %746 = vnop
        $region124: #{feature_reconstruction_loss.7} parent=103 // pred_fallthru
          _
        // Predicated region
        $region159: #{feature_reconstruction_loss.7} parent=103 // pred_check
          %p747 = pneg %p157
        $region160: #{feature_reconstruction_loss.7} parent=103 // pred_check_branch
          %749 = sbr.rel (%p747) target = $region162
        $region161: #{feature_reconstruction_loss.7} parent=103 // pred_region
          %s750 = smul.u32 2, %s19
          %s751 = smul.addr %s750, 4
          %s752 = scalar_lea.vmem %s5, %s751
          // Predicated region
          $region163: #{feature_reconstruction_loss.7} parent=161 // pred_check
            _
          $region164: #{feature_reconstruction_loss.7} parent=161 // pred_check_branch
            %754 = sbr.rel (0) target = $region166
          $region165: #{feature_reconstruction_loss.7} parent=161 // pred_region
            // Predicated region
            $region167: #{feature_reconstruction_loss.7} parent=165 // pred_check
              _
            $region168: #{feature_reconstruction_loss.7} parent=165 // pred_check_branch
              %756 = sbr.rel (0) target = $region170
            $region169: #{feature_reconstruction_loss.7} parent=165 // pred_region
              // Predicated region
              $region182: #{feature_reconstruction_loss.7} parent=169 // pred_check
                _
              $region183: #{feature_reconstruction_loss.7} parent=169 // pred_check_branch
                %774 = sbr.rel (0) target = $region185
              $region184: #{feature_reconstruction_loss.7} parent=169 // pred_region
                loop: start=0, step=1, limit=1
                $region186: #{feature_reconstruction_loss.7} parent=184 // loop_pre_header
                  _
                $region187: #{feature_reconstruction_loss.7} parent=184 // loop_header
                  %s776 = sphi 0, %s780
                  %p777 = scmp.ge.s32.totalorder %s776, 1
                  %s781 = sphi %s703, %s703
                  %s782 = sphi %s752, %s752
                $region188: #{feature_reconstruction_loss.7} parent=184 // loop_header_branch
                  %779 = sbr.rel (%p777) target = $region192
                $region189: #{feature_reconstruction_loss.7} parent=184 // loop_body
                  %v783 = vld [vmem:[%s781] sm:$0xff]
                  %784 = vst [vmem:[%s782] sm:$0xff] %v783
                  %v785 = vld [vmem:[%s781 + $0x8] sm:$0xff]
                  %786 = vst [vmem:[%s782 + $0x10] sm:$0xff] %v785
                $region190: #{feature_reconstruction_loss.7} parent=184 // loop_footer
                  %s780 = sadd.s32 1, %s776
                $region191: #{feature_reconstruction_loss.7} parent=184 // loop_footer_branch
                  %775 = sbr.rel target = $region187
                $region192: #{feature_reconstruction_loss.7} parent=184 // loop_exit
                  _
              $region185: #{feature_reconstruction_loss.7} parent=169 // pred_fallthru
                _
              // Predicated region
              $region193: #{feature_reconstruction_loss.7} parent=169 // pred_check
                _
              $region194: #{feature_reconstruction_loss.7} parent=169 // pred_check_branch
                %788 = sbr.rel target = $region196
              $region195: #{feature_reconstruction_loss.7} parent=169 // pred_region
                _
              $region196: #{feature_reconstruction_loss.7} parent=169 // pred_fallthru
                _
            $region170: #{feature_reconstruction_loss.7} parent=165 // pred_fallthru
              _
            // Predicated region
            $region171: #{feature_reconstruction_loss.7} parent=165 // pred_check
              _
            $region172: #{feature_reconstruction_loss.7} parent=165 // pred_check_branch
              %758 = sbr.rel target = $region174
            $region173: #{feature_reconstruction_loss.7} parent=165 // pred_region
              %s760 = ssub.s32 256, 1
              loop: start=0, step=1, limit=1
              $region175: #{feature_reconstruction_loss.7} parent=173 // loop_pre_header
                _
              $region176: #{feature_reconstruction_loss.7} parent=173 // loop_header
                %s762 = sphi 0, %s766
                %p763 = scmp.ge.s32.totalorder %s762, 1
                %s767 = sphi %s703, %s703
                %s768 = sphi %s752, %s752
              $region177: #{feature_reconstruction_loss.7} parent=173 // loop_header_branch
                %765 = sbr.rel (%p763) target = $region181
              $region178: #{feature_reconstruction_loss.7} parent=173 // loop_body
                %v769 = vld [vmem:[%s767] sm:%s760]
                %770 = vst [vmem:[%s768] sm:%s760] %v769
                %v771 = vld [vmem:[%s767 + $0x8] sm:%s760]
                %772 = vst [vmem:[%s768 + $0x10] sm:%s760] %v771
              $region179: #{feature_reconstruction_loss.7} parent=173 // loop_footer
                %s766 = sadd.s32 1, %s762
              $region180: #{feature_reconstruction_loss.7} parent=173 // loop_footer_branch
                %761 = sbr.rel target = $region176
              $region181: #{feature_reconstruction_loss.7} parent=173 // loop_exit
                _
            $region174: #{feature_reconstruction_loss.7} parent=165 // pred_fallthru
              _
          $region166: #{feature_reconstruction_loss.7} parent=161 // pred_fallthru
            _
          %789 = vnop
        $region162: #{feature_reconstruction_loss.7} parent=103 // pred_fallthru
          _
        // Predicated region
        $region197: #{feature_reconstruction_loss.7} parent=103 // pred_check
          %p790 = pneg %p178
        $region198: #{feature_reconstruction_loss.7} parent=103 // pred_check_branch
          %792 = sbr.rel (%p790) target = $region200
        $region199: #{feature_reconstruction_loss.7} parent=103 // pred_region
          %794 = vsyncadd [#allocation8], 0
          %s796 = sshll.u32 %s6, 4
          %s797 = int_to_ptr.hbm [resolvable:$true] %s796
          %799 = dma.smem_to_hbm [#allocation7], 16, %s797, [#allocation8]
        $region200: #{feature_reconstruction_loss.7} parent=103 // pred_fallthru
          _
        // Predicated region
        $region201: #{feature_reconstruction_loss.7} parent=103 // pred_check
          %p800 = pneg %p178
        $region202: #{feature_reconstruction_loss.7} parent=103 // pred_check_branch
          %802 = sbr.rel (%p800) target = $region204
        $region203: #{feature_reconstruction_loss.7} parent=103 // pred_region
          %804 = dma.done [#allocation8], 16
        $region204: #{feature_reconstruction_loss.7} parent=103 // pred_fallthru
          _
        %805 = sfence
      $region104: #{feature_reconstruction_loss.7} parent=5 // pred_fallthru
        _
      %p806 = scmp.le.s32.totalorder 2, %s14
      // Predicated region
      $region205: #{feature_reconstruction_loss.7} parent=5 // pred_check
        %p807 = pneg %p806
      $region206: #{feature_reconstruction_loss.7} parent=5 // pred_check_branch
        %809 = sbr.rel (%p807) target = $region208
      $region207: #{feature_reconstruction_loss.7} parent=5 // pred_region
        %s810 = ssub.s32 %s14, 2
        // Predicated region
        $region209: #{feature_reconstruction_loss.7} parent=207 // pred_check
          %p811 = pneg %p137
        $region210: #{feature_reconstruction_loss.7} parent=207 // pred_check_branch
          %813 = sbr.rel (%p811) target = $region212
        $region211: #{feature_reconstruction_loss.7} parent=207 // pred_region
          %s814 = sand.u32 %s122, 1
          %s815 = sand.u32 %s122, 1
          %s816 = smul.addr %s815, 16
          %s817 = scalar_lea.vmem [#allocation5], %s816
        $region212: #{feature_reconstruction_loss.7} parent=207 // pred_fallthru
          _
        // Predicated region
        $region213: #{feature_reconstruction_loss.7} parent=207 // pred_check
          %p818 = pneg %p163
        $region214: #{feature_reconstruction_loss.7} parent=207 // pred_check_branch
          %820 = sbr.rel (%p818) target = $region216
        $region215: #{feature_reconstruction_loss.7} parent=207 // pred_region
          %s821 = sand.u32 %s148, 1
          %s822 = sand.u32 %s148, 1
          %s823 = smul.addr %s822, 16
          %s824 = scalar_lea.vmem [#allocation6], %s823
        $region216: #{feature_reconstruction_loss.7} parent=207 // pred_fallthru
          _
      $region208: #{feature_reconstruction_loss.7} parent=5 // pred_fallthru
        _
    $region6: #{feature_reconstruction_loss.7} parent=1 // loop_footer
      %s18 = sadd.s32 1, %s14
    $region7: #{feature_reconstruction_loss.7} parent=1 // loop_footer_branch
      %13 = sbr.rel target = $region3
    $region8: #{feature_reconstruction_loss.7} parent=1 // loop_exit
      _
    %825 = vsyncpa [#allocation8], 1
    %s826 = scalar_lea.sflag [#allocation8], 1
    %827 = vsyncpa %s826, 1

// kernel: feature_reconstruction_loss.8
$region0: #{feature_reconstruction_loss.8}
  #allocation0 [shape = 'u32[]', space=smem, size = 0x4, offset = 0x4, fixed_abs, tag = 'smem constant byte address 0x4 - core index']
  #allocation1 [shape = 'u32[72,128]{1,0:T(1,128)}', space=vmem, size = 0x9000, scoped, tag = 'internal scratch']
  #allocation2 [shape = 'f32[1,256]{1,0:T(1,128)}', space=vmem, size = 0x400, scoped, tag = 'scratch operand']
  %s0 = inlined_call_operand.vmem [shape: bf16[144,512], index: 0, kind: input, shape index: {}]
  %s1 = inlined_call_operand.vmem [shape: bf16[144,512], index: 1, kind: input, shape index: {}]
  %s2 = inlined_call_operand.vmem [shape: bf16[16,144], index: 2, kind: input, shape index: {}]
  %s3 = inlined_call_operand.vmem [shape: f32[16,1], index: 3, kind: input, shape index: {}]
  %s4 = inlined_call_operand.vmem [shape: bf16[16,512], index: 4, kind: output, shape index: {0}]
  %s5 = inlined_call_operand.vmem [shape: bf16[16,512], index: 5, kind: output, shape index: {1}]
  %s6 = inlined_call_operand.hbm [shape: f32[1,1], index: 6, kind: output, shape index: {2}]
  %7 = xla_tuple %s4, %s5, %s6
  %s8 = sld [smem:[#allocation0]]
  $region217: #{feature_reconstruction_loss.8} parent=0
    _
  %s10 = ssub.s32 1, %s8
  %s11 = scalar_select 0, %s10, %s8
  $region1: #{feature_reconstruction_loss.8} parent=0
    #allocation3 [shape = 'u8[147456]{0}', space=vmem, size = 0x24000, scoped, tag = 'input window, operand 0']
    #allocation4 [shape = 'u8[147456]{0}', space=vmem, size = 0x24000, scoped, tag = 'input window, operand 1']
    #allocation5 [shape = 'u8[16384]{0}', space=vmem, size = 0x4000, scoped, tag = 'output window, operand 0']
    #allocation6 [shape = 'u8[16384]{0}', space=vmem, size = 0x4000, scoped, tag = 'output window, operand 1']
    #allocation7 [shape = 'u8[512]{0}', space=smem, size = 0x200, scoped, tag = 'output window, operand 2, single buffered']
    #allocation8 [shape = 's32[2]{0}', space=sflag, size = 0x8, scoped, tag = 'scoped memory for feature_reconstruction_loss.8']
    %12 = vsyncpa [#allocation8], 0
    loop: start=0, step=1, limit=4
    $region2: #{feature_reconstruction_loss.8} parent=1 // loop_pre_header
      _
    $region3: #{feature_reconstruction_loss.8} parent=1 // loop_header
      %s14 = sphi 0, %s18
      %p15 = scmp.ge.s32.totalorder %s14, 4
      %s24 = sphi 0, %s26
      %s27 = sphi 0, %s24
      %s28 = sphi 0, %s27
      %s44 = sphi 0, %s28
      %s50 = sphi 0, %s52
      %s53 = sphi 0, %s50
      %s54 = sphi 0, %s53
      %s70 = sphi 0, %s54
      %s74 = sphi 0, %s74
      %s76 = sphi 0, %s74
      %s77 = sphi 0, %s76
      %s91 = sphi 0, %s77
      %s95 = sphi 0, %s95
      %s97 = sphi 0, %s95
      %s98 = sphi 0, %s97
      %s112 = sphi 0, %s98
      %s118 = sphi 0, %s120
      %s121 = sphi 0, %s118
      %s122 = sphi 0, %s121
      %s138 = sphi 0, %s122
      %s144 = sphi 0, %s146
      %s147 = sphi 0, %s144
      %s148 = sphi 0, %s147
      %s164 = sphi 0, %s148
      %s168 = sphi 0, %s168
      %s170 = sphi 0, %s168
      %s171 = sphi 0, %s170
      %s185 = sphi 0, %s171
    $region4: #{feature_reconstruction_loss.8} parent=1 // loop_header_branch
      %17 = sbr.rel (%p15) target = $region8
    $region5: #{feature_reconstruction_loss.8} parent=1 // loop_body
      %s19 = ssub.s32 %s14, 1
      %s20 = ssub.s32 %s14, 2
      %s21 = sadd.s32 %s14, 1
      %s22 = ssub.s32 %s14, %s21
      %p23 = scmp.eq.s32.totalorder %s22, 0
      %s25 = sadd.s32 %s24, 1
      %s26 = scalar_select %p23, %s24, %s25
      %p29 = pneg %p23
      %p30 = scmp.eq.s32.totalorder %s14, 1
      %p31 = por %p29, %p30
      %p32 = scmp.ne.s32.totalorder %s24, %s27
      %p33 = scmp.eq.s32.totalorder %s14, 0
      %p34 = por %p32, %p33
      %p35 = scmp.ne.s32.totalorder %s24, %s27
      %p36 = scmp.eq.s32.totalorder %s19, 1
      %p37 = por %p35, %p36
      %p38 = scmp.ne.s32.totalorder %s27, %s28
      %p39 = scmp.eq.s32.totalorder %s19, 0
      %p40 = por %p38, %p39
      %p41 = scmp.ne.s32.totalorder %s27, %s28
      %p42 = scmp.eq.s32.totalorder %s20, 1
      %p43 = por %p41, %p42
      %p45 = scmp.ne.s32.totalorder %s28, %s44
      %p46 = scmp.eq.s32.totalorder %s20, 0
      %p47 = por %p45, %p46
      %s48 = ssub.s32 %s14, %s21
      %p49 = scmp.eq.s32.totalorder %s48, 0
      %s51 = sadd.s32 %s50, 1
      %s52 = scalar_select %p49, %s50, %s51
      %p55 = pneg %p49
      %p56 = scmp.eq.s32.totalorder %s14, 1
      %p57 = por %p55, %p56
      %p58 = scmp.ne.s32.totalorder %s50, %s53
      %p59 = scmp.eq.s32.totalorder %s14, 0
      %p60 = por %p58, %p59
      %p61 = scmp.ne.s32.totalorder %s50, %s53
      %p62 = scmp.eq.s32.totalorder %s19, 1
      %p63 = por %p61, %p62
      %p64 = scmp.ne.s32.totalorder %s53, %s54
      %p65 = scmp.eq.s32.totalorder %s19, 0
      %p66 = por %p64, %p65
      %p67 = scmp.ne.s32.totalorder %s53, %s54
      %p68 = scmp.eq.s32.totalorder %s20, 1
      %p69 = por %p67, %p68
      %p71 = scmp.ne.s32.totalorder %s54, %s70
      %p72 = scmp.eq.s32.totalorder %s20, 0
      %p73 = por %p71, %p72
      %s75 = sadd.s32 %s74, 1
      %p78 = scmp.eq.s32.totalorder %s14, 1
      %p79 = scmp.ne.s32.totalorder %s74, %s76
      %p80 = scmp.eq.s32.totalorder %s14, 0
      %p81 = por %p79, %p80
      %p82 = scmp.ne.s32.totalorder %s74, %s76
      %p83 = scmp.eq.s32.totalorder %s19, 1
      %p84 = por %p82, %p83
      %p85 = scmp.ne.s32.totalorder %s76, %s77
      %p86 = scmp.eq.s32.totalorder %s19, 0
      %p87 = por %p85, %p86
      %p88 = scmp.ne.s32.totalorder %s76, %s77
      %p89 = scmp.eq.s32.totalorder %s20, 1
      %p90 = por %p88, %p89
      %p92 = scmp.ne.s32.totalorder %s77, %s91
      %p93 = scmp.eq.s32.totalorder %s20, 0
      %p94 = por %p92, %p93
      %s96 = sadd.s32 %s95, 1
      %p99 = scmp.eq.s32.totalorder %s14, 1
      %p100 = scmp.ne.s32.totalorder %s95, %s97
      %p101 = scmp.eq.s32.totalorder %s14, 0
      %p102 = por %p100, %p101
      %p103 = scmp.ne.s32.totalorder %s95, %s97
      %p104 = scmp.eq.s32.totalorder %s19, 1
      %p105 = por %p103, %p104
      %p106 = scmp.ne.s32.totalorder %s97, %s98
      %p107 = scmp.eq.s32.totalorder %s19, 0
      %p108 = por %p106, %p107
      %p109 = scmp.ne.s32.totalorder %s97, %s98
      %p110 = scmp.eq.s32.totalorder %s20, 1
      %p111 = por %p109, %p110
      %p113 = scmp.ne.s32.totalorder %s98, %s112
      %p114 = scmp.eq.s32.totalorder %s20, 0
      %p115 = por %p113, %p114
      %s116 = ssub.s32 %s14, %s21
      %p117 = scmp.eq.s32.totalorder %s116, 0
      %s119 = sadd.s32 %s118, 1
      %s120 = scalar_select %p117, %s118, %s119
      %p123 = pneg %p117
      %p124 = scmp.eq.s32.totalorder %s14, 1
      %p125 = por %p123, %p124
      %p126 = scmp.ne.s32.totalorder %s118, %s121
      %p127 = scmp.eq.s32.totalorder %s14, 0
      %p128 = por %p126, %p127
      %p129 = scmp.ne.s32.totalorder %s118, %s121
      %p130 = scmp.eq.s32.totalorder %s19, 1
      %p131 = por %p129, %p130
      %p132 = scmp.ne.s32.totalorder %s121, %s122
      %p133 = scmp.eq.s32.totalorder %s19, 0
      %p134 = por %p132, %p133
      %p135 = scmp.ne.s32.totalorder %s121, %s122
      %p136 = scmp.eq.s32.totalorder %s20, 1
      %p137 = por %p135, %p136
      %p139 = scmp.ne.s32.totalorder %s122, %s138
      %p140 = scmp.eq.s32.totalorder %s20, 0
      %p141 = por %p139, %p140
      %s142 = ssub.s32 %s14, %s21
      %p143 = scmp.eq.s32.totalorder %s142, 0
      %s145 = sadd.s32 %s144, 1
      %s146 = scalar_select %p143, %s144, %s145
      %p149 = pneg %p143
      %p150 = scmp.eq.s32.totalorder %s14, 1
      %p151 = por %p149, %p150
      %p152 = scmp.ne.s32.totalorder %s144, %s147
      %p153 = scmp.eq.s32.totalorder %s14, 0
      %p154 = por %p152, %p153
      %p155 = scmp.ne.s32.totalorder %s144, %s147
      %p156 = scmp.eq.s32.totalorder %s19, 1
      %p157 = por %p155, %p156
      %p158 = scmp.ne.s32.totalorder %s147, %s148
      %p159 = scmp.eq.s32.totalorder %s19, 0
      %p160 = por %p158, %p159
      %p161 = scmp.ne.s32.totalorder %s147, %s148
      %p162 = scmp.eq.s32.totalorder %s20, 1
      %p163 = por %p161, %p162
      %p165 = scmp.ne.s32.totalorder %s148, %s164
      %p166 = scmp.eq.s32.totalorder %s20, 0
      %p167 = por %p165, %p166
      %s169 = sadd.s32 %s168, 1
      %p172 = scmp.eq.s32.totalorder %s14, 1
      %p173 = scmp.ne.s32.totalorder %s168, %s170
      %p174 = scmp.eq.s32.totalorder %s14, 0
      %p175 = por %p173, %p174
      %p176 = scmp.ne.s32.totalorder %s168, %s170
      %p177 = scmp.eq.s32.totalorder %s19, 1
      %p178 = por %p176, %p177
      %p179 = scmp.ne.s32.totalorder %s170, %s171
      %p180 = scmp.eq.s32.totalorder %s19, 0
      %p181 = por %p179, %p180
      %p182 = scmp.ne.s32.totalorder %s170, %s171
      %p183 = scmp.eq.s32.totalorder %s20, 1
      %p184 = por %p182, %p183
      %p186 = scmp.ne.s32.totalorder %s171, %s185
      %p187 = scmp.eq.s32.totalorder %s20, 0
      %p188 = por %p186, %p187
      %p189 = scmp.le.s32.totalorder 1, %s14
      %p190 = scmp.lt.s32.totalorder %s14, 3
      %p191 = pnand %p189, %p190
      %p192 = pneg %p191
      // Predicated region
      $region9: #{feature_reconstruction_loss.8} parent=5 // pred_check
        _
      $region10: #{feature_reconstruction_loss.8} parent=5 // pred_check_branch
        %194 = sbr.rel (%p191) target = $region12
      $region11: #{feature_reconstruction_loss.8} parent=5 // pred_region
        %s195 = ssub.s32 %s14, 1
        // Predicated region
        $region13: #{feature_reconstruction_loss.8} parent=11 // pred_check
          %p196 = pneg %p87
        $region14: #{feature_reconstruction_loss.8} parent=11 // pred_check_branch
          %198 = sbr.rel (%p196) target = $region16
        $region15: #{feature_reconstruction_loss.8} parent=11 // pred_region
          _
        $region16: #{feature_reconstruction_loss.8} parent=11 // pred_fallthru
          _
        // Predicated region
        $region17: #{feature_reconstruction_loss.8} parent=11 // pred_check
          %p199 = pneg %p108
        $region18: #{feature_reconstruction_loss.8} parent=11 // pred_check_branch
          %201 = sbr.rel (%p199) target = $region20
        $region19: #{feature_reconstruction_loss.8} parent=11 // pred_region
          _
        $region20: #{feature_reconstruction_loss.8} parent=11 // pred_fallthru
          _
      $region12: #{feature_reconstruction_loss.8} parent=5 // pred_fallthru
        _
      %p202 = scmp.lt.s32.totalorder %s14, 2
      // Predicated region
      $region21: #{feature_reconstruction_loss.8} parent=5 // pred_check
        %p203 = pneg %p202
      $region22: #{feature_reconstruction_loss.8} parent=5 // pred_check_branch
        %205 = sbr.rel (%p203) target = $region24
      $region23: #{feature_reconstruction_loss.8} parent=5 // pred_region
        // Predicated region
        $region25: #{feature_reconstruction_loss.8} parent=23 // pred_check
          %p206 = pneg %p34
        $region26: #{feature_reconstruction_loss.8} parent=23 // pred_check_branch
          %208 = sbr.rel (%p206) target = $region28
        $region27: #{feature_reconstruction_loss.8} parent=23 // pred_region
          %s209 = sand.u32 %s24, 1
          %s210 = sand.u32 %s24, 1
          %s211 = smul.addr %s210, 144
          %s212 = scalar_lea.vmem [#allocation3], %s211
          %s213 = smul.u32 2, %s14
          %s214 = smul.addr %s213, 4
          %s215 = scalar_lea.vmem %s0, %s214
          // Predicated region
          $region29: #{feature_reconstruction_loss.8} parent=27 // pred_check
            _
          $region30: #{feature_reconstruction_loss.8} parent=27 // pred_check_branch
            %217 = sbr.rel (0) target = $region32
          $region31: #{feature_reconstruction_loss.8} parent=27 // pred_region
            // Predicated region
            $region33: #{feature_reconstruction_loss.8} parent=31 // pred_check
              _
            $region34: #{feature_reconstruction_loss.8} parent=31 // pred_check_branch
              %219 = sbr.rel (0) target = $region36
            $region35: #{feature_reconstruction_loss.8} parent=31 // pred_region
              // Predicated region
              $region48: #{feature_reconstruction_loss.8} parent=35 // pred_check
                _
              $region49: #{feature_reconstruction_loss.8} parent=35 // pred_check_branch
                %269 = sbr.rel (0) target = $region51
              $region50: #{feature_reconstruction_loss.8} parent=35 // pred_region
                loop: start=0, step=1, limit=1
                $region52: #{feature_reconstruction_loss.8} parent=50 // loop_pre_header
                  _
                $region53: #{feature_reconstruction_loss.8} parent=50 // loop_header
                  %s271 = sphi 0, %s275
                  %p272 = scmp.ge.s32.totalorder %s271, 1
                  %s276 = sphi %s215, %s215
                  %s277 = sphi %s212, %s212
                $region54: #{feature_reconstruction_loss.8} parent=50 // loop_header_branch
                  %274 = sbr.rel (%p272) target = $region58
                $region55: #{feature_reconstruction_loss.8} parent=50 // loop_body
                  %v278 = vld [vmem:[%s276] sm:$0xff]
                  %279 = vst [vmem:[%s277] sm:$0xff] %v278
                  %v280 = vld [vmem:[%s276 + $0x10] sm:$0xff]
                  %281 = vst [vmem:[%s277 + $0x8] sm:$0xff] %v280
                  %v282 = vld [vmem:[%s276 + $0x20] sm:$0xff]
                  %283 = vst [vmem:[%s277 + $0x10] sm:$0xff] %v282
                  %v284 = vld [vmem:[%s276 + $0x30] sm:$0xff]
                  %285 = vst [vmem:[%s277 + $0x18] sm:$0xff] %v284
                  %v286 = vld [vmem:[%s276 + $0x40] sm:$0xff]
                  %287 = vst [vmem:[%s277 + $0x20] sm:$0xff] %v286
                  %v288 = vld [vmem:[%s276 + $0x50] sm:$0xff]
                  %289 = vst [vmem:[%s277 + $0x28] sm:$0xff] %v288
                  %v290 = vld [vmem:[%s276 + $0x60] sm:$0xff]
                  %291 = vst [vmem:[%s277 + $0x30] sm:$0xff] %v290
                  %v292 = vld [vmem:[%s276 + $0x70] sm:$0xff]
                  %293 = vst [vmem:[%s277 + $0x38] sm:$0xff] %v292
                  %v294 = vld [vmem:[%s276 + $0x80] sm:$0xff]
                  %295 = vst [vmem:[%s277 + $0x40] sm:$0xff] %v294
                  %v296 = vld [vmem:[%s276 + $0x90] sm:$0xff]
                  %297 = vst [vmem:[%s277 + $0x48] sm:$0xff] %v296
                  %v298 = vld [vmem:[%s276 + $0xa0] sm:$0xff]
                  %299 = vst [vmem:[%s277 + $0x50] sm:$0xff] %v298
                  %v300 = vld [vmem:[%s276 + $0xb0] sm:$0xff]
                  %301 = vst [vmem:[%s277 + $0x58] sm:$0xff] %v300
                  %v302 = vld [vmem:[%s276 + $0xc0] sm:$0xff]
                  %303 = vst [vmem:[%s277 + $0x60] sm:$0xff] %v302
                  %v304 = vld [vmem:[%s276 + $0xd0] sm:$0xff]
                  %305 = vst [vmem:[%s277 + $0x68] sm:$0xff] %v304
                  %v306 = vld [vmem:[%s276 + $0xe0] sm:$0xff]
                  %307 = vst [vmem:[%s277 + $0x70] sm:$0xff] %v306
                  %v308 = vld [vmem:[%s276 + $0xf0] sm:$0xff]
                  %309 = vst [vmem:[%s277 + $0x78] sm:$0xff] %v308
                  %v310 = vld [vmem:[%s276 + $0x100] sm:$0xff]
                  %311 = vst [vmem:[%s277 + $0x80] sm:$0xff] %v310
                  %v312 = vld [vmem:[%s276 + $0x110] sm:$0xff]
                  %313 = vst [vmem:[%s277 + $0x88] sm:$0xff] %v312
                $region56: #{feature_reconstruction_loss.8} parent=50 // loop_footer
                  %s275 = sadd.s32 1, %s271
                $region57: #{feature_reconstruction_loss.8} parent=50 // loop_footer_branch
                  %270 = sbr.rel target = $region53
                $region58: #{feature_reconstruction_loss.8} parent=50 // loop_exit
                  _
              $region51: #{feature_reconstruction_loss.8} parent=35 // pred_fallthru
                _
              // Predicated region
              $region59: #{feature_reconstruction_loss.8} parent=35 // pred_check
                _
              $region60: #{feature_reconstruction_loss.8} parent=35 // pred_check_branch
                %315 = sbr.rel target = $region62
              $region61: #{feature_reconstruction_loss.8} parent=35 // pred_region
                _
              $region62: #{feature_reconstruction_loss.8} parent=35 // pred_fallthru
                _
            $region36: #{feature_reconstruction_loss.8} parent=31 // pred_fallthru
              _
            // Predicated region
            $region37: #{feature_reconstruction_loss.8} parent=31 // pred_check
              _
            $region38: #{feature_reconstruction_loss.8} parent=31 // pred_check_branch
              %221 = sbr.rel target = $region40
            $region39: #{feature_reconstruction_loss.8} parent=31 // pred_region
              %s223 = ssub.s32 256, 1
              loop: start=0, step=1, limit=1
              $region41: #{feature_reconstruction_loss.8} parent=39 // loop_pre_header
                _
              $region42: #{feature_reconstruction_loss.8} parent=39 // loop_header
                %s225 = sphi 0, %s229
                %p226 = scmp.ge.s32.totalorder %s225, 1
                %s230 = sphi %s215, %s215
                %s231 = sphi %s212, %s212
              $region43: #{feature_reconstruction_loss.8} parent=39 // loop_header_branch
                %228 = sbr.rel (%p226) target = $region47
              $region44: #{feature_reconstruction_loss.8} parent=39 // loop_body
                %v232 = vld [vmem:[%s230] sm:%s223]
                %233 = vst [vmem:[%s231] sm:%s223] %v232
                %v234 = vld [vmem:[%s230 + $0x10] sm:%s223]
                %235 = vst [vmem:[%s231 + $0x8] sm:%s223] %v234
                %v236 = vld [vmem:[%s230 + $0x20] sm:%s223]
                %237 = vst [vmem:[%s231 + $0x10] sm:%s223] %v236
                %v238 = vld [vmem:[%s230 + $0x30] sm:%s223]
                %239 = vst [vmem:[%s231 + $0x18] sm:%s223] %v238
                %v240 = vld [vmem:[%s230 + $0x40] sm:%s223]
                %241 = vst [vmem:[%s231 + $0x20] sm:%s223] %v240
                %v242 = vld [vmem:[%s230 + $0x50] sm:%s223]
                %243 = vst [vmem:[%s231 + $0x28] sm:%s223] %v242
                %v244 = vld [vmem:[%s230 + $0x60] sm:%s223]
                %245 = vst [vmem:[%s231 + $0x30] sm:%s223] %v244
                %v246 = vld [vmem:[%s230 + $0x70] sm:%s223]
                %247 = vst [vmem:[%s231 + $0x38] sm:%s223] %v246
                %v248 = vld [vmem:[%s230 + $0x80] sm:%s223]
                %249 = vst [vmem:[%s231 + $0x40] sm:%s223] %v248
                %v250 = vld [vmem:[%s230 + $0x90] sm:%s223]
                %251 = vst [vmem:[%s231 + $0x48] sm:%s223] %v250
                %v252 = vld [vmem:[%s230 + $0xa0] sm:%s223]
                %253 = vst [vmem:[%s231 + $0x50] sm:%s223] %v252
                %v254 = vld [vmem:[%s230 + $0xb0] sm:%s223]
                %255 = vst [vmem:[%s231 + $0x58] sm:%s223] %v254
                %v256 = vld [vmem:[%s230 + $0xc0] sm:%s223]
                %257 = vst [vmem:[%s231 + $0x60] sm:%s223] %v256
                %v258 = vld [vmem:[%s230 + $0xd0] sm:%s223]
                %259 = vst [vmem:[%s231 + $0x68] sm:%s223] %v258
                %v260 = vld [vmem:[%s230 + $0xe0] sm:%s223]
                %261 = vst [vmem:[%s231 + $0x70] sm:%s223] %v260
                %v262 = vld [vmem:[%s230 + $0xf0] sm:%s223]
                %263 = vst [vmem:[%s231 + $0x78] sm:%s223] %v262
                %v264 = vld [vmem:[%s230 + $0x100] sm:%s223]
                %265 = vst [vmem:[%s231 + $0x80] sm:%s223] %v264
                %v266 = vld [vmem:[%s230 + $0x110] sm:%s223]
                %267 = vst [vmem:[%s231 + $0x88] sm:%s223] %v266
              $region45: #{feature_reconstruction_loss.8} parent=39 // loop_footer
                %s229 = sadd.s32 1, %s225
              $region46: #{feature_reconstruction_loss.8} parent=39 // loop_footer_branch
                %224 = sbr.rel target = $region42
              $region47: #{feature_reconstruction_loss.8} parent=39 // loop_exit
                _
            $region40: #{feature_reconstruction_loss.8} parent=31 // pred_fallthru
              _
          $region32: #{feature_reconstruction_loss.8} parent=27 // pred_fallthru
            _
          %316 = vnop
        $region28: #{feature_reconstruction_loss.8} parent=23 // pred_fallthru
          _
        // Predicated region
        $region63: #{feature_reconstruction_loss.8} parent=23 // pred_check
          %p317 = pneg %p60
        $region64: #{feature_reconstruction_loss.8} parent=23 // pred_check_branch
          %319 = sbr.rel (%p317) target = $region66
        $region65: #{feature_reconstruction_loss.8} parent=23 // pred_region
          %s320 = sand.u32 %s50, 1
          %s321 = sand.u32 %s50, 1
          %s322 = smul.addr %s321, 144
          %s323 = scalar_lea.vmem [#allocation4], %s322
          %s324 = smul.u32 2, %s14
          %s325 = smul.addr %s324, 4
          %s326 = scalar_lea.vmem %s1, %s325
          // Predicated region
          $region67: #{feature_reconstruction_loss.8} parent=65 // pred_check
            _
          $region68: #{feature_reconstruction_loss.8} parent=65 // pred_check_branch
            %328 = sbr.rel (0) target = $region70
          $region69: #{feature_reconstruction_loss.8} parent=65 // pred_region
            // Predicated region
            $region71: #{feature_reconstruction_loss.8} parent=69 // pred_check
              _
            $region72: #{feature_reconstruction_loss.8} parent=69 // pred_check_branch
              %330 = sbr.rel (0) target = $region74
            $region73: #{feature_reconstruction_loss.8} parent=69 // pred_region
              // Predicated region
              $region86: #{feature_reconstruction_loss.8} parent=73 // pred_check
                _
              $region87: #{feature_reconstruction_loss.8} parent=73 // pred_check_branch
                %380 = sbr.rel (0) target = $region89
              $region88: #{feature_reconstruction_loss.8} parent=73 // pred_region
                loop: start=0, step=1, limit=1
                $region90: #{feature_reconstruction_loss.8} parent=88 // loop_pre_header
                  _
                $region91: #{feature_reconstruction_loss.8} parent=88 // loop_header
                  %s382 = sphi 0, %s386
                  %p383 = scmp.ge.s32.totalorder %s382, 1
                  %s387 = sphi %s326, %s326
                  %s388 = sphi %s323, %s323
                $region92: #{feature_reconstruction_loss.8} parent=88 // loop_header_branch
                  %385 = sbr.rel (%p383) target = $region96
                $region93: #{feature_reconstruction_loss.8} parent=88 // loop_body
                  %v389 = vld [vmem:[%s387] sm:$0xff]
                  %390 = vst [vmem:[%s388] sm:$0xff] %v389
                  %v391 = vld [vmem:[%s387 + $0x10] sm:$0xff]
                  %392 = vst [vmem:[%s388 + $0x8] sm:$0xff] %v391
                  %v393 = vld [vmem:[%s387 + $0x20] sm:$0xff]
                  %394 = vst [vmem:[%s388 + $0x10] sm:$0xff] %v393
                  %v395 = vld [vmem:[%s387 + $0x30] sm:$0xff]
                  %396 = vst [vmem:[%s388 + $0x18] sm:$0xff] %v395
                  %v397 = vld [vmem:[%s387 + $0x40] sm:$0xff]
                  %398 = vst [vmem:[%s388 + $0x20] sm:$0xff] %v397
                  %v399 = vld [vmem:[%s387 + $0x50] sm:$0xff]
                  %400 = vst [vmem:[%s388 + $0x28] sm:$0xff] %v399
                  %v401 = vld [vmem:[%s387 + $0x60] sm:$0xff]
                  %402 = vst [vmem:[%s388 + $0x30] sm:$0xff] %v401
                  %v403 = vld [vmem:[%s387 + $0x70] sm:$0xff]
                  %404 = vst [vmem:[%s388 + $0x38] sm:$0xff] %v403
                  %v405 = vld [vmem:[%s387 + $0x80] sm:$0xff]
                  %406 = vst [vmem:[%s388 + $0x40] sm:$0xff] %v405
                  %v407 = vld [vmem:[%s387 + $0x90] sm:$0xff]
                  %408 = vst [vmem:[%s388 + $0x48] sm:$0xff] %v407
                  %v409 = vld [vmem:[%s387 + $0xa0] sm:$0xff]
                  %410 = vst [vmem:[%s388 + $0x50] sm:$0xff] %v409
                  %v411 = vld [vmem:[%s387 + $0xb0] sm:$0xff]
                  %412 = vst [vmem:[%s388 + $0x58] sm:$0xff] %v411
                  %v413 = vld [vmem:[%s387 + $0xc0] sm:$0xff]
                  %414 = vst [vmem:[%s388 + $0x60] sm:$0xff] %v413
                  %v415 = vld [vmem:[%s387 + $0xd0] sm:$0xff]
                  %416 = vst [vmem:[%s388 + $0x68] sm:$0xff] %v415
                  %v417 = vld [vmem:[%s387 + $0xe0] sm:$0xff]
                  %418 = vst [vmem:[%s388 + $0x70] sm:$0xff] %v417
                  %v419 = vld [vmem:[%s387 + $0xf0] sm:$0xff]
                  %420 = vst [vmem:[%s388 + $0x78] sm:$0xff] %v419
                  %v421 = vld [vmem:[%s387 + $0x100] sm:$0xff]
                  %422 = vst [vmem:[%s388 + $0x80] sm:$0xff] %v421
                  %v423 = vld [vmem:[%s387 + $0x110] sm:$0xff]
                  %424 = vst [vmem:[%s388 + $0x88] sm:$0xff] %v423
                $region94: #{feature_reconstruction_loss.8} parent=88 // loop_footer
                  %s386 = sadd.s32 1, %s382
                $region95: #{feature_reconstruction_loss.8} parent=88 // loop_footer_branch
                  %381 = sbr.rel target = $region91
                $region96: #{feature_reconstruction_loss.8} parent=88 // loop_exit
                  _
              $region89: #{feature_reconstruction_loss.8} parent=73 // pred_fallthru
                _
              // Predicated region
              $region97: #{feature_reconstruction_loss.8} parent=73 // pred_check
                _
              $region98: #{feature_reconstruction_loss.8} parent=73 // pred_check_branch
                %426 = sbr.rel target = $region100
              $region99: #{feature_reconstruction_loss.8} parent=73 // pred_region
                _
              $region100: #{feature_reconstruction_loss.8} parent=73 // pred_fallthru
                _
            $region74: #{feature_reconstruction_loss.8} parent=69 // pred_fallthru
              _
            // Predicated region
            $region75: #{feature_reconstruction_loss.8} parent=69 // pred_check
              _
            $region76: #{feature_reconstruction_loss.8} parent=69 // pred_check_branch
              %332 = sbr.rel target = $region78
            $region77: #{feature_reconstruction_loss.8} parent=69 // pred_region
              %s334 = ssub.s32 256, 1
              loop: start=0, step=1, limit=1
              $region79: #{feature_reconstruction_loss.8} parent=77 // loop_pre_header
                _
              $region80: #{feature_reconstruction_loss.8} parent=77 // loop_header
                %s336 = sphi 0, %s340
                %p337 = scmp.ge.s32.totalorder %s336, 1
                %s341 = sphi %s326, %s326
                %s342 = sphi %s323, %s323
              $region81: #{feature_reconstruction_loss.8} parent=77 // loop_header_branch
                %339 = sbr.rel (%p337) target = $region85
              $region82: #{feature_reconstruction_loss.8} parent=77 // loop_body
                %v343 = vld [vmem:[%s341] sm:%s334]
                %344 = vst [vmem:[%s342] sm:%s334] %v343
                %v345 = vld [vmem:[%s341 + $0x10] sm:%s334]
                %346 = vst [vmem:[%s342 + $0x8] sm:%s334] %v345
                %v347 = vld [vmem:[%s341 + $0x20] sm:%s334]
                %348 = vst [vmem:[%s342 + $0x10] sm:%s334] %v347
                %v349 = vld [vmem:[%s341 + $0x30] sm:%s334]
                %350 = vst [vmem:[%s342 + $0x18] sm:%s334] %v349
                %v351 = vld [vmem:[%s341 + $0x40] sm:%s334]
                %352 = vst [vmem:[%s342 + $0x20] sm:%s334] %v351
                %v353 = vld [vmem:[%s341 + $0x50] sm:%s334]
                %354 = vst [vmem:[%s342 + $0x28] sm:%s334] %v353
                %v355 = vld [vmem:[%s341 + $0x60] sm:%s334]
                %356 = vst [vmem:[%s342 + $0x30] sm:%s334] %v355
                %v357 = vld [vmem:[%s341 + $0x70] sm:%s334]
                %358 = vst [vmem:[%s342 + $0x38] sm:%s334] %v357
                %v359 = vld [vmem:[%s341 + $0x80] sm:%s334]
                %360 = vst [vmem:[%s342 + $0x40] sm:%s334] %v359
                %v361 = vld [vmem:[%s341 + $0x90] sm:%s334]
                %362 = vst [vmem:[%s342 + $0x48] sm:%s334] %v361
                %v363 = vld [vmem:[%s341 + $0xa0] sm:%s334]
                %364 = vst [vmem:[%s342 + $0x50] sm:%s334] %v363
                %v365 = vld [vmem:[%s341 + $0xb0] sm:%s334]
                %366 = vst [vmem:[%s342 + $0x58] sm:%s334] %v365
                %v367 = vld [vmem:[%s341 + $0xc0] sm:%s334]
                %368 = vst [vmem:[%s342 + $0x60] sm:%s334] %v367
                %v369 = vld [vmem:[%s341 + $0xd0] sm:%s334]
                %370 = vst [vmem:[%s342 + $0x68] sm:%s334] %v369
                %v371 = vld [vmem:[%s341 + $0xe0] sm:%s334]
                %372 = vst [vmem:[%s342 + $0x70] sm:%s334] %v371
                %v373 = vld [vmem:[%s341 + $0xf0] sm:%s334]
                %374 = vst [vmem:[%s342 + $0x78] sm:%s334] %v373
                %v375 = vld [vmem:[%s341 + $0x100] sm:%s334]
                %376 = vst [vmem:[%s342 + $0x80] sm:%s334] %v375
                %v377 = vld [vmem:[%s341 + $0x110] sm:%s334]
                %378 = vst [vmem:[%s342 + $0x88] sm:%s334] %v377
              $region83: #{feature_reconstruction_loss.8} parent=77 // loop_footer
                %s340 = sadd.s32 1, %s336
              $region84: #{feature_reconstruction_loss.8} parent=77 // loop_footer_branch
                %335 = sbr.rel target = $region80
              $region85: #{feature_reconstruction_loss.8} parent=77 // loop_exit
                _
            $region78: #{feature_reconstruction_loss.8} parent=69 // pred_fallthru
              _
          $region70: #{feature_reconstruction_loss.8} parent=65 // pred_fallthru
            _
          %427 = vnop
        $region66: #{feature_reconstruction_loss.8} parent=23 // pred_fallthru
          _
      $region24: #{feature_reconstruction_loss.8} parent=5 // pred_fallthru
        _
      %p428 = scmp.le.s32.totalorder 1, %s14
      %p429 = scmp.lt.s32.totalorder %s14, 3
      %p430 = pnand %p428, %p429
      %p431 = pneg %p430
      // Predicated region
      $region101: #{feature_reconstruction_loss.8} parent=5 // pred_check
        _
      $region102: #{feature_reconstruction_loss.8} parent=5 // pred_check_branch
        %433 = sbr.rel (%p430) target = $region104
      $region103: #{feature_reconstruction_loss.8} parent=5 // pred_region
        %s434 = ssub.s32 %s14, 1
        %s435 = sand.u32 %s27, 1
        %s436 = sand.u32 %s27, 1
        %s437 = smul.addr %s436, 144
        %s438 = scalar_lea.vmem [#allocation3], %s437
        // Predicated region
        $region105: #{feature_reconstruction_loss.8} parent=103 // pred_check
          %p439 = pneg %p40
        $region106: #{feature_reconstruction_loss.8} parent=103 // pred_check_branch
          %441 = sbr.rel (%p439) target = $region108
        $region107: #{feature_reconstruction_loss.8} parent=103 // pred_region
          _
        $region108: #{feature_reconstruction_loss.8} parent=103 // pred_fallthru
          _
        %s442 = sand.u32 %s53, 1
        %s443 = sand.u32 %s53, 1
        %s444 = smul.addr %s443, 144
        %s445 = scalar_lea.vmem [#allocation4], %s444
        // Predicated region
        $region109: #{feature_reconstruction_loss.8} parent=103 // pred_check
          %p446 = pneg %p66
        $region110: #{feature_reconstruction_loss.8} parent=103 // pred_check_branch
          %448 = sbr.rel (%p446) target = $region112
        $region111: #{feature_reconstruction_loss.8} parent=103 // pred_region
          _
        $region112: #{feature_reconstruction_loss.8} parent=103 // pred_fallthru
          _
        %s449 = sand.u32 %s27, 1
        %s450 = sand.u32 %s27, 1
        %s451 = smul.addr %s450, 144
        %s452 = scalar_lea.vmem [#allocation3], %s451
        %p453 = pneg %p40
        %p454 = pneg %p37
        %s455 = sand.u32 %s53, 1
        %s456 = sand.u32 %s53, 1
        %s457 = smul.addr %s456, 144
        %s458 = scalar_lea.vmem [#allocation4], %s457
        %p459 = pneg %p66
        %p460 = pneg %p63
        %p461 = pneg %p87
        %p462 = pneg %p84
        %p463 = pneg %p108
        %p464 = pneg %p105
        %p465 = pneg %p134
        %p466 = pneg %p131
        %s467 = sand.u32 %s121, 1
        %s468 = sand.u32 %s121, 1
        %s469 = smul.addr %s468, 16
        %s470 = scalar_lea.vmem [#allocation5], %s469
        %p471 = pneg %p160
        %p472 = pneg %p157
        %s473 = sand.u32 %s147, 1
        %s474 = sand.u32 %s147, 1
        %s475 = smul.addr %s474, 16
        %s476 = scalar_lea.vmem [#allocation6], %s475
        %p477 = pneg %p181
        %p478 = pneg %p178
        %s479 = smul.u32 2, %s19
        %s480 = smul.u32 2, %s19
        %s481 = smul.u32 2, %s19
        %s482 = smul.u32 2, %s19
        %p484 = scmp.eq.s32.totalorder %s19, 0
        // Predicated region
        $region113: #{feature_reconstruction_loss.8} parent=103 // pred_check
          %p485 = pneg %p484
        $region114: #{feature_reconstruction_loss.8} parent=103 // pred_check_branch
          %487 = sbr.rel (%p485) target = $region116
        $region115: #{feature_reconstruction_loss.8} parent=103 // pred_region
          %v488 = vlaneseq
          %vm489 = vcmp.ge.s32.totalorder %v488, 0
          %vm490 = vcmp.lt.s32.totalorder %v488, 256
          %vm491 = vmand %vm489, %vm490
          %492 = vst.msk [vmem:[#allocation2] sm:$0x3] %vm491, 0.0
        $region116: #{feature_reconstruction_loss.8} parent=103 // pred_fallthru
          _
        %v493 = vld [vmem:[%s2] sm:$0xff]
        %v494 = vld [vmem:[%s2 + $0x8] sm:$0xff]
        %v495 = vld [vmem:[%s3] sm:$0xff]
        %v496 = vld [vmem:[%s3 + $0x8] sm:$0xff]
        %v497 = vld [vmem:[%s438] sm:$0xff]
        %v498 = vld [vmem:[%s438 + $0x8] sm:$0xff]
        %v499 = vld [vmem:[%s438 + $0x10] sm:$0xff]
        %v500 = vld [vmem:[%s438 + $0x18] sm:$0xff]
        %v501 = vld [vmem:[%s438 + $0x20] sm:$0xff]
        %v502 = vld [vmem:[%s438 + $0x28] sm:$0xff]
        %v503 = vld [vmem:[%s438 + $0x30] sm:$0xff]
        %v504 = vld [vmem:[%s438 + $0x38] sm:$0xff]
        %v505 = vld [vmem:[%s438 + $0x40] sm:$0xff]
        %v506 = vld [vmem:[%s438 + $0x48] sm:$0xff]
        %v507 = vld [vmem:[%s438 + $0x50] sm:$0xff]
        %v508 = vld [vmem:[%s438 + $0x58] sm:$0xff]
        %v509 = vld [vmem:[%s438 + $0x60] sm:$0xff]
        %v510 = vld [vmem:[%s438 + $0x68] sm:$0xff]
        %v511 = vld [vmem:[%s438 + $0x70] sm:$0xff]
        %v512 = vld [vmem:[%s438 + $0x78] sm:$0xff]
        %v513 = vld [vmem:[%s438 + $0x80] sm:$0xff]
        %v514 = vld [vmem:[%s438 + $0x88] sm:$0xff]
        %516 = vset.pattern.permute.xlu0 0
        %517 = vperm.xlu0 %516, %v495
        %v518 = vpop.permute.xlu0 %517
        %521 = vset.pattern.permute.xlu0 0
        %522 = vperm.xlu0 %521, %v496
        %v523 = vpop.permute.xlu0 %522
        %v527 = vunpack.c.l.b16 %v493
        %v528 = vunpack.c.h.b16 %v493
        %v529 = vunpack.c.l.b16 %v494
        %v530 = vunpack.c.h.b16 %v494
        %v531 = vpack.c.b16 %v529, %v527
        %v532 = vpack.c.b16 %v530, %v528
        %v552 = vunpack.c.l.b16 %v497
        %v553 = vunpack.c.h.b16 %v497
        %v554 = vunpack.c.l.b16 %v498
        %v555 = vunpack.c.h.b16 %v498
        %v556 = vunpack.c.l.b16 %v499
        %v557 = vunpack.c.h.b16 %v499
        %v558 = vunpack.c.l.b16 %v500
        %v559 = vunpack.c.h.b16 %v500
        %v560 = vunpack.c.l.b16 %v501
        %v561 = vunpack.c.h.b16 %v501
        %v562 = vunpack.c.l.b16 %v502
        %v563 = vunpack.c.h.b16 %v502
        %v564 = vunpack.c.l.b16 %v503
        %v565 = vunpack.c.h.b16 %v503
        %v566 = vunpack.c.l.b16 %v504
        %v567 = vunpack.c.h.b16 %v504
        %v568 = vunpack.c.l.b16 %v505
        %v569 = vunpack.c.h.b16 %v505
        %v570 = vunpack.c.l.b16 %v506
        %v571 = vunpack.c.h.b16 %v506
        %v572 = vunpack.c.l.b16 %v507
        %v573 = vunpack.c.h.b16 %v507
        %v574 = vunpack.c.l.b16 %v508
        %v575 = vunpack.c.h.b16 %v508
        %v576 = vunpack.c.l.b16 %v509
        %v577 = vunpack.c.h.b16 %v509
        %v578 = vunpack.c.l.b16 %v510
        %v579 = vunpack.c.h.b16 %v510
        %v580 = vunpack.c.l.b16 %v511
        %v581 = vunpack.c.h.b16 %v511
        %v582 = vunpack.c.l.b16 %v512
        %v583 = vunpack.c.h.b16 %v512
        %v584 = vunpack.c.l.b16 %v513
        %v585 = vunpack.c.h.b16 %v513
        %v586 = vunpack.c.l.b16 %v514
        %v587 = vunpack.c.h.b16 %v514
        %v588 = vpack.c.b16 %v554, %v552
        %v589 = vpack.c.b16 %v555, %v553
        %v590 = vpack.c.b16 %v558, %v556
        %v591 = vpack.c.b16 %v559, %v557
        %v592 = vpack.c.b16 %v562, %v560
        %v593 = vpack.c.b16 %v563, %v561
        %v594 = vpack.c.b16 %v566, %v564
        %v595 = vpack.c.b16 %v567, %v565
        %v596 = vpack.c.b16 %v570, %v568
        %v597 = vpack.c.b16 %v571, %v569
        %v598 = vpack.c.b16 %v574, %v572
        %v599 = vpack.c.b16 %v575, %v573
        %v600 = vpack.c.b16 %v578, %v576
        %v601 = vpack.c.b16 %v579, %v577
        %v602 = vpack.c.b16 %v582, %v580
        %v603 = vpack.c.b16 %v583, %v581
        %v604 = vpack.c.b16 %v586, %v584
        %v605 = vpack.c.b16 %v587, %v585
        %vm624 = vcmask 130048
        %v626 = vsel %vm624, %v532, 0
        %628 = vmatpush.bf16.msra.mxu0 %v602
        %629 = vmatpush.bf16.msra.mxu0 %v600
        %630 = vmatpush.bf16.msra.mxu0 %v598
        %631 = vmatpush.bf16.msra.mxu0 %v596
        %632 = vmatpush.bf16.msra.mxu0 %v594
        %633 = vmatpush.bf16.msra.mxu0 %v592
        %634 = vmatpush.bf16.msra.mxu0 %v590
        %635 = vmatpush.bf16.msra.mxu0 %v588
        %636 = vmatmul.bf16.gmra.mxu0 %v531
        %v637 = vpop.f32.mrf.mxu0
        %v638 = vadd.f32 %v518, %v637
        %v639 = vpop.f32.mrf.mxu0
        %v640 = vadd.f32 %v523, %v639
        %641 = vdwg.mxu0
        %642 = vmatpush.bf16.msra.mxu0 0
        %643 = vmatpush.bf16.msra.mxu0 0
        %644 = vmatpush.bf16.msra.mxu0 0
        %645 = vmatpush.bf16.msra.mxu0 0
        %646 = vmatpush.bf16.msra.mxu0 0
        %647 = vmatpush.bf16.msra.mxu0 0
        %648 = vmatpush.bf16.msra.mxu0 0
        %649 = vmatpush.bf16.msra.mxu0 %v604
        %650 = vmatmul.bf16.gmra.mxu0 %v626
        %v651 = vpop.f32.mrf.mxu0
        %v652 = vadd.f32 %v638, %v651
        %v653 = vpop.f32.mrf.mxu0
        %v654 = vadd.f32 %v640, %v653
        %655 = vdwg.mxu0
        %656 = vmatpush.bf16.msra.mxu0 %v603
        %657 = vmatpush.bf16.msra.mxu0 %v601
        %658 = vmatpush.bf16.msra.mxu0 %v599
        %659 = vmatpush.bf16.msra.mxu0 %v597
        %660 = vmatpush.bf16.msra.mxu0 %v595
        %661 = vmatpush.bf16.msra.mxu0 %v593
        %662 = vmatpush.bf16.msra.mxu0 %v591
        %663 = vmatpush.bf16.msra.mxu0 %v589
        %664 = vmatmul.bf16.gmra.mxu0 %v531
        %v665 = vpop.f32.mrf.mxu0
        %v666 = vadd.f32 %v518, %v665
        %v667 = vpop.f32.mrf.mxu0
        %v668 = vadd.f32 %v523, %v667
        %669 = vdwg.mxu0
        %670 = vmatpush.bf16.msra.mxu0 0
        %671 = vmatpush.bf16.msra.mxu0 0
        %672 = vmatpush.bf16.msra.mxu0 0
        %673 = vmatpush.bf16.msra.mxu0 0
        %674 = vmatpush.bf16.msra.mxu0 0
        %675 = vmatpush.bf16.msra.mxu0 0
        %676 = vmatpush.bf16.msra.mxu0 0
        %677 = vmatpush.bf16.msra.mxu0 %v605
        %678 = vmatmul.bf16.gmra.mxu0 %v626
        %v679 = vpop.f32.mrf.mxu0
        %v680 = vadd.f32 %v666, %v679
        %v681 = vpop.f32.mrf.mxu0
        %v682 = vadd.f32 %v668, %v681
        %683 = vdwg.mxu0
        %v684 = vld [vmem:[%s445] sm:$0xff]
        %v685 = vld [vmem:[%s445 + $0x8] sm:$0xff]
        %v686 = vld [vmem:[%s445 + $0x10] sm:$0xff]
        %v687 = vld [vmem:[%s445 + $0x18] sm:$0xff]
        %v688 = vld [vmem:[%s445 + $0x20] sm:$0xff]
        %v689 = vld [vmem:[%s445 + $0x28] sm:$0xff]
        %v690 = vld [vmem:[%s445 + $0x30] sm:$0xff]
        %v691 = vld [vmem:[%s445 + $0x38] sm:$0xff]
        %v692 = vld [vmem:[%s445 + $0x40] sm:$0xff]
        %v693 = vld [vmem:[%s445 + $0x48] sm:$0xff]
        %v694 = vld [vmem:[%s445 + $0x50] sm:$0xff]
        %v695 = vld [vmem:[%s445 + $0x58] sm:$0xff]
        %v696 = vld [vmem:[%s445 + $0x60] sm:$0xff]
        %v697 = vld [vmem:[%s445 + $0x68] sm:$0xff]
        %v698 = vld [vmem:[%s445 + $0x70] sm:$0xff]
        %v699 = vld [vmem:[%s445 + $0x78] sm:$0xff]
        %v700 = vld [vmem:[%s445 + $0x80] sm:$0xff]
        %v701 = vld [vmem:[%s445 + $0x88] sm:$0xff]
        %v720 = vunpack.c.l.b16 %v684
        %v721 = vunpack.c.h.b16 %v684
        %v722 = vunpack.c.l.b16 %v685
        %v723 = vunpack.c.h.b16 %v685
        %v724 = vunpack.c.l.b16 %v686
        %v725 = vunpack.c.h.b16 %v686
        %v726 = vunpack.c.l.b16 %v687
        %v727 = vunpack.c.h.b16 %v687
        %v728 = vunpack.c.l.b16 %v688
        %v729 = vunpack.c.h.b16 %v688
        %v730 = vunpack.c.l.b16 %v689
        %v731 = vunpack.c.h.b16 %v689
        %v732 = vunpack.c.l.b16 %v690
        %v733 = vunpack.c.h.b16 %v690
        %v734 = vunpack.c.l.b16 %v691
        %v735 = vunpack.c.h.b16 %v691
        %v736 = vunpack.c.l.b16 %v692
        %v737 = vunpack.c.h.b16 %v692
        %v738 = vunpack.c.l.b16 %v693
        %v739 = vunpack.c.h.b16 %v693
        %v740 = vunpack.c.l.b16 %v694
        %v741 = vunpack.c.h.b16 %v694
        %v742 = vunpack.c.l.b16 %v695
        %v743 = vunpack.c.h.b16 %v695
        %v744 = vunpack.c.l.b16 %v696
        %v745 = vunpack.c.h.b16 %v696
        %v746 = vunpack.c.l.b16 %v697
        %v747 = vunpack.c.h.b16 %v697
        %v748 = vunpack.c.l.b16 %v698
        %v749 = vunpack.c.h.b16 %v698
        %v750 = vunpack.c.l.b16 %v699
        %v751 = vunpack.c.h.b16 %v699
        %v752 = vunpack.c.l.b16 %v700
        %v753 = vunpack.c.h.b16 %v700
        %v754 = vunpack.c.l.b16 %v701
        %v755 = vunpack.c.h.b16 %v701
        %v756 = vpack.c.b16 %v722, %v720
        %v757 = vpack.c.b16 %v723, %v721
        %v758 = vpack.c.b16 %v726, %v724
        %v759 = vpack.c.b16 %v727, %v725
        %v760 = vpack.c.b16 %v730, %v728
        %v761 = vpack.c.b16 %v731, %v729
        %v762 = vpack.c.b16 %v734, %v732
        %v763 = vpack.c.b16 %v735, %v733
        %v764 = vpack.c.b16 %v738, %v736
        %v765 = vpack.c.b16 %v739, %v737
        %v766 = vpack.c.b16 %v742, %v740
        %v767 = vpack.c.b16 %v743, %v741
        %v768 = vpack.c.b16 %v746, %v744
        %v769 = vpack.c.b16 %v747, %v745
        %v770 = vpack.c.b16 %v750, %v748
        %v771 = vpack.c.b16 %v751, %v749
        %v772 = vpack.c.b16 %v754, %v752
        %v773 = vpack.c.b16 %v755, %v753
        %792 = vmatpush.bf16.msra.mxu0 %v770
        %793 = vmatpush.bf16.msra.mxu0 %v768
        %794 = vmatpush.bf16.msra.mxu0 %v766
        %795 = vmatpush.bf16.msra.mxu0 %v764
        %796 = vmatpush.bf16.msra.mxu0 %v762
        %797 = vmatpush.bf16.msra.mxu0 %v760
        %798 = vmatpush.bf16.msra.mxu0 %v758
        %799 = vmatpush.bf16.msra.mxu0 %v756
        %800 = vmatmul.bf16.gmra.mxu0 %v531
        %v801 = vpop.f32.mrf.mxu0
        %v802 = vadd.f32 %v518, %v801
        %v803 = vpop.f32.mrf.mxu0
        %v804 = vadd.f32 %v523, %v803
        %805 = vdwg.mxu0
        %806 = vmatpush.bf16.msra.mxu0 0
        %807 = vmatpush.bf16.msra.mxu0 0
        %808 = vmatpush.bf16.msra.mxu0 0
        %809 = vmatpush.bf16.msra.mxu0 0
        %810 = vmatpush.bf16.msra.mxu0 0
        %811 = vmatpush.bf16.msra.mxu0 0
        %812 = vmatpush.bf16.msra.mxu0 0
        %813 = vmatpush.bf16.msra.mxu0 %v772
        %814 = vmatmul.bf16.gmra.mxu0 %v626
        %v815 = vpop.f32.mrf.mxu0
        %v816 = vadd.f32 %v802, %v815
        %v817 = vpop.f32.mrf.mxu0
        %v818 = vadd.f32 %v804, %v817
        %819 = vdwg.mxu0
        %820 = vmatpush.bf16.msra.mxu0 %v771
        %821 = vmatpush.bf16.msra.mxu0 %v769
        %822 = vmatpush.bf16.msra.mxu0 %v767
        %823 = vmatpush.bf16.msra.mxu0 %v765
        %824 = vmatpush.bf16.msra.mxu0 %v763
        %825 = vmatpush.bf16.msra.mxu0 %v761
        %826 = vmatpush.bf16.msra.mxu0 %v759
        %827 = vmatpush.bf16.msra.mxu0 %v757
        %828 = vmatmul.bf16.gmra.mxu0 %v531
        %v829 = vpop.f32.mrf.mxu0
        %v830 = vadd.f32 %v518, %v829
        %v831 = vpop.f32.mrf.mxu0
        %v832 = vadd.f32 %v523, %v831
        %833 = vdwg.mxu0
        %834 = vmatpush.bf16.msra.mxu0 0
        %835 = vmatpush.bf16.msra.mxu0 0
        %836 = vmatpush.bf16.msra.mxu0 0
        %837 = vmatpush.bf16.msra.mxu0 0
        %838 = vmatpush.bf16.msra.mxu0 0
        %839 = vmatpush.bf16.msra.mxu0 0
        %840 = vmatpush.bf16.msra.mxu0 0
        %841 = vmatpush.bf16.msra.mxu0 %v773
        %842 = vmatmul.bf16.gmra.mxu0 %v626
        %v843 = vpop.f32.mrf.mxu0
        %v844 = vadd.f32 %v830, %v843
        %v845 = vpop.f32.mrf.mxu0
        %v846 = vadd.f32 %v832, %v845
        %847 = vdwg.mxu0
        %v848 = vsub.f32 %v652, %v816
        %v849 = vsub.f32 %v680, %v844
        %v850 = vsub.f32 %v654, %v818
        %v851 = vsub.f32 %v682, %v846
        %v852 = vld [vmem:[#allocation2] sm:$0x3]
        %v853 = vmul.f32 %v848, %v848
        %v854 = vmul.f32 %v849, %v849
        %v855 = vmul.f32 %v850, %v850
        %v856 = vmul.f32 %v851, %v851
        %v857 = vadd.f32 %v853, %v855
        %v858 = vrot.slane %v857, 4
        %v859 = vadd.f32 %v857, %v858
        %v860 = vrot.slane %v859, 2
        %v861 = vadd.f32 %v859, %v860
        %v862 = vrot.slane %v861, 1
        %v863 = vadd.f32 %v861, %v862
        %v864 = vadd.f32 %v854, %v856
        %v865 = vrot.slane %v864, 4
        %v866 = vadd.f32 %v864, %v865
        %v867 = vrot.slane %v866, 2
        %v868 = vadd.f32 %v866, %v867
        %v869 = vrot.slane %v868, 1
        %v870 = vadd.f32 %v868, %v869
        %v873 = vrot.slane %v870, 7
        %vm874 = vcmask 1040384
        %v875 = vsel %vm874, %v863, %v873
        %v877 = vadd.f32 %v852, %v875
        %v878 = vlaneseq
        %vm879 = vcmp.ge.s32.totalorder %v878, 0
        %vm880 = vcmp.lt.s32.totalorder %v878, 256
        %vm881 = vmand %vm879, %vm880
        %882 = vst.msk [vmem:[#allocation2] sm:$0x3] %vm881, %v877
        %v883 = vmax.f32 %v652, 0.0
        %v884 = vmax.f32 %v680, 0.0
        %v885 = vmax.f32 %v654, 0.0
        %v886 = vmax.f32 %v682, 0.0
        %v887 = vpack.c.bf16 %v884, %v883
        %v888 = vpack.c.bf16 %v886, %v885
        %889 = vst [vmem:[%s470] sm:$0xff] %v887
        %890 = vst [vmem:[%s470 + $0x8] sm:$0xff] %v888
        %v891 = vmax.f32 %v816, 0.0
        %v892 = vmax.f32 %v844, 0.0
        %v893 = vmax.f32 %v818, 0.0
        %v894 = vmax.f32 %v846, 0.0
        %v895 = vpack.c.bf16 %v892, %v891
        %v896 = vpack.c.bf16 %v894, %v893
        %897 = vst [vmem:[%s476] sm:$0xff] %v895
        %898 = vst [vmem:[%s476 + $0x8] sm:$0xff] %v896
        %p899 = scmp.eq.s32.totalorder %s19, 1
        // Predicated region
        $region117: #{feature_reconstruction_loss.8} parent=103 // pred_check
          %p900 = pneg %p899
        $region118: #{feature_reconstruction_loss.8} parent=103 // pred_check_branch
          %902 = sbr.rel (%p900) target = $region120
        $region119: #{feature_reconstruction_loss.8} parent=103 // pred_region
          %v903 = vld [vmem:[#allocation2] sm:$0x3]
          %v905 = vperm.slane %v903, 0
          %v906 = vperm.slane %v903, 1
          %v909 = vsel %vm874, %v905, 0.0
          %v910 = vsel %vm874, %v906, 0.0
          %v911 = vadd.f32 %v909, %v910
          %912 = vadd.xlane.f32.xlu0 %v911
          %v913 = vpop.xlane.xlu0 %912
          %v914 = vrot.slane %v913, 4
          %v915 = vadd.f32 %v913, %v914
          %v916 = vrot.slane %v915, 2
          %v917 = vadd.f32 %v915, %v916
          %v918 = vrot.slane %v917, 1
          %v919 = vadd.f32 %v917, %v918
          %s920 = vtos %v919
          %s921 = scalar_lea.smem [#allocation7], 0
          %922 = sst [smem:[%s921]] %s920
        $region120: #{feature_reconstruction_loss.8} parent=103 // pred_fallthru
          _
        %s923 = sand.u32 %s121, 1
        %s924 = sand.u32 %s121, 1
        %s925 = smul.addr %s924, 16
        %s926 = scalar_lea.vmem [#allocation5], %s925
        %s927 = sand.u32 %s147, 1
        %s928 = sand.u32 %s147, 1
        %s929 = smul.addr %s928, 16
        %s930 = scalar_lea.vmem [#allocation6], %s929
        // Predicated region
        $region121: #{feature_reconstruction_loss.8} parent=103 // pred_check
          %p931 = pneg %p131
        $region122: #{feature_reconstruction_loss.8} parent=103 // pred_check_branch
          %933 = sbr.rel (%p931) target = $region124
        $region123: #{feature_reconstruction_loss.8} parent=103 // pred_region
          %s934 = smul.u32 2, %s19
          %s935 = smul.addr %s934, 4
          %s936 = scalar_lea.vmem %s4, %s935
          // Predicated region
          $region125: #{feature_reconstruction_loss.8} parent=123 // pred_check
            _
          $region126: #{feature_reconstruction_loss.8} parent=123 // pred_check_branch
            %938 = sbr.rel (0) target = $region128
          $region127: #{feature_reconstruction_loss.8} parent=123 // pred_region
            // Predicated region
            $region129: #{feature_reconstruction_loss.8} parent=127 // pred_check
              _
            $region130: #{feature_reconstruction_loss.8} parent=127 // pred_check_branch
              %940 = sbr.rel (0) target = $region132
            $region131: #{feature_reconstruction_loss.8} parent=127 // pred_region
              // Predicated region
              $region144: #{feature_reconstruction_loss.8} parent=131 // pred_check
                _
              $region145: #{feature_reconstruction_loss.8} parent=131 // pred_check_branch
                %958 = sbr.rel (0) target = $region147
              $region146: #{feature_reconstruction_loss.8} parent=131 // pred_region
                loop: start=0, step=1, limit=1
                $region148: #{feature_reconstruction_loss.8} parent=146 // loop_pre_header
                  _
                $region149: #{feature_reconstruction_loss.8} parent=146 // loop_header
                  %s960 = sphi 0, %s964
                  %p961 = scmp.ge.s32.totalorder %s960, 1
                  %s965 = sphi %s926, %s926
                  %s966 = sphi %s936, %s936
                $region150: #{feature_reconstruction_loss.8} parent=146 // loop_header_branch
                  %963 = sbr.rel (%p961) target = $region154
                $region151: #{feature_reconstruction_loss.8} parent=146 // loop_body
                  %v967 = vld [vmem:[%s965] sm:$0xff]
                  %968 = vst [vmem:[%s966] sm:$0xff] %v967
                  %v969 = vld [vmem:[%s965 + $0x8] sm:$0xff]
                  %970 = vst [vmem:[%s966 + $0x10] sm:$0xff] %v969
                $region152: #{feature_reconstruction_loss.8} parent=146 // loop_footer
                  %s964 = sadd.s32 1, %s960
                $region153: #{feature_reconstruction_loss.8} parent=146 // loop_footer_branch
                  %959 = sbr.rel target = $region149
                $region154: #{feature_reconstruction_loss.8} parent=146 // loop_exit
                  _
              $region147: #{feature_reconstruction_loss.8} parent=131 // pred_fallthru
                _
              // Predicated region
              $region155: #{feature_reconstruction_loss.8} parent=131 // pred_check
                _
              $region156: #{feature_reconstruction_loss.8} parent=131 // pred_check_branch
                %972 = sbr.rel target = $region158
              $region157: #{feature_reconstruction_loss.8} parent=131 // pred_region
                _
              $region158: #{feature_reconstruction_loss.8} parent=131 // pred_fallthru
                _
            $region132: #{feature_reconstruction_loss.8} parent=127 // pred_fallthru
              _
            // Predicated region
            $region133: #{feature_reconstruction_loss.8} parent=127 // pred_check
              _
            $region134: #{feature_reconstruction_loss.8} parent=127 // pred_check_branch
              %942 = sbr.rel target = $region136
            $region135: #{feature_reconstruction_loss.8} parent=127 // pred_region
              %s944 = ssub.s32 256, 1
              loop: start=0, step=1, limit=1
              $region137: #{feature_reconstruction_loss.8} parent=135 // loop_pre_header
                _
              $region138: #{feature_reconstruction_loss.8} parent=135 // loop_header
                %s946 = sphi 0, %s950
                %p947 = scmp.ge.s32.totalorder %s946, 1
                %s951 = sphi %s926, %s926
                %s952 = sphi %s936, %s936
              $region139: #{feature_reconstruction_loss.8} parent=135 // loop_header_branch
                %949 = sbr.rel (%p947) target = $region143
              $region140: #{feature_reconstruction_loss.8} parent=135 // loop_body
                %v953 = vld [vmem:[%s951] sm:%s944]
                %954 = vst [vmem:[%s952] sm:%s944] %v953
                %v955 = vld [vmem:[%s951 + $0x8] sm:%s944]
                %956 = vst [vmem:[%s952 + $0x10] sm:%s944] %v955
              $region141: #{feature_reconstruction_loss.8} parent=135 // loop_footer
                %s950 = sadd.s32 1, %s946
              $region142: #{feature_reconstruction_loss.8} parent=135 // loop_footer_branch
                %945 = sbr.rel target = $region138
              $region143: #{feature_reconstruction_loss.8} parent=135 // loop_exit
                _
            $region136: #{feature_reconstruction_loss.8} parent=127 // pred_fallthru
              _
          $region128: #{feature_reconstruction_loss.8} parent=123 // pred_fallthru
            _
          %973 = vnop
        $region124: #{feature_reconstruction_loss.8} parent=103 // pred_fallthru
          _
        // Predicated region
        $region159: #{feature_reconstruction_loss.8} parent=103 // pred_check
          %p974 = pneg %p157
        $region160: #{feature_reconstruction_loss.8} parent=103 // pred_check_branch
          %976 = sbr.rel (%p974) target = $region162
        $region161: #{feature_reconstruction_loss.8} parent=103 // pred_region
          %s977 = smul.u32 2, %s19
          %s978 = smul.addr %s977, 4
          %s979 = scalar_lea.vmem %s5, %s978
          // Predicated region
          $region163: #{feature_reconstruction_loss.8} parent=161 // pred_check
            _
          $region164: #{feature_reconstruction_loss.8} parent=161 // pred_check_branch
            %981 = sbr.rel (0) target = $region166
          $region165: #{feature_reconstruction_loss.8} parent=161 // pred_region
            // Predicated region
            $region167: #{feature_reconstruction_loss.8} parent=165 // pred_check
              _
            $region168: #{feature_reconstruction_loss.8} parent=165 // pred_check_branch
              %983 = sbr.rel (0) target = $region170
            $region169: #{feature_reconstruction_loss.8} parent=165 // pred_region
              // Predicated region
              $region182: #{feature_reconstruction_loss.8} parent=169 // pred_check
                _
              $region183: #{feature_reconstruction_loss.8} parent=169 // pred_check_branch
                %1001 = sbr.rel (0) target = $region185
              $region184: #{feature_reconstruction_loss.8} parent=169 // pred_region
                loop: start=0, step=1, limit=1
                $region186: #{feature_reconstruction_loss.8} parent=184 // loop_pre_header
                  _
                $region187: #{feature_reconstruction_loss.8} parent=184 // loop_header
                  %s1003 = sphi 0, %s1007
                  %p1004 = scmp.ge.s32.totalorder %s1003, 1
                  %s1008 = sphi %s930, %s930
                  %s1009 = sphi %s979, %s979
                $region188: #{feature_reconstruction_loss.8} parent=184 // loop_header_branch
                  %1006 = sbr.rel (%p1004) target = $region192
                $region189: #{feature_reconstruction_loss.8} parent=184 // loop_body
                  %v1010 = vld [vmem:[%s1008] sm:$0xff]
                  %1011 = vst [vmem:[%s1009] sm:$0xff] %v1010
                  %v1012 = vld [vmem:[%s1008 + $0x8] sm:$0xff]
                  %1013 = vst [vmem:[%s1009 + $0x10] sm:$0xff] %v1012
                $region190: #{feature_reconstruction_loss.8} parent=184 // loop_footer
                  %s1007 = sadd.s32 1, %s1003
                $region191: #{feature_reconstruction_loss.8} parent=184 // loop_footer_branch
                  %1002 = sbr.rel target = $region187
                $region192: #{feature_reconstruction_loss.8} parent=184 // loop_exit
                  _
              $region185: #{feature_reconstruction_loss.8} parent=169 // pred_fallthru
                _
              // Predicated region
              $region193: #{feature_reconstruction_loss.8} parent=169 // pred_check
                _
              $region194: #{feature_reconstruction_loss.8} parent=169 // pred_check_branch
                %1015 = sbr.rel target = $region196
              $region195: #{feature_reconstruction_loss.8} parent=169 // pred_region
                _
              $region196: #{feature_reconstruction_loss.8} parent=169 // pred_fallthru
                _
            $region170: #{feature_reconstruction_loss.8} parent=165 // pred_fallthru
              _
            // Predicated region
            $region171: #{feature_reconstruction_loss.8} parent=165 // pred_check
              _
            $region172: #{feature_reconstruction_loss.8} parent=165 // pred_check_branch
              %985 = sbr.rel target = $region174
            $region173: #{feature_reconstruction_loss.8} parent=165 // pred_region
              %s987 = ssub.s32 256, 1
              loop: start=0, step=1, limit=1
              $region175: #{feature_reconstruction_loss.8} parent=173 // loop_pre_header
                _
              $region176: #{feature_reconstruction_loss.8} parent=173 // loop_header
                %s989 = sphi 0, %s993
                %p990 = scmp.ge.s32.totalorder %s989, 1
                %s994 = sphi %s930, %s930
                %s995 = sphi %s979, %s979
              $region177: #{feature_reconstruction_loss.8} parent=173 // loop_header_branch
                %992 = sbr.rel (%p990) target = $region181
              $region178: #{feature_reconstruction_loss.8} parent=173 // loop_body
                %v996 = vld [vmem:[%s994] sm:%s987]
                %997 = vst [vmem:[%s995] sm:%s987] %v996
                %v998 = vld [vmem:[%s994 + $0x8] sm:%s987]
                %999 = vst [vmem:[%s995 + $0x10] sm:%s987] %v998
              $region179: #{feature_reconstruction_loss.8} parent=173 // loop_footer
                %s993 = sadd.s32 1, %s989
              $region180: #{feature_reconstruction_loss.8} parent=173 // loop_footer_branch
                %988 = sbr.rel target = $region176
              $region181: #{feature_reconstruction_loss.8} parent=173 // loop_exit
                _
            $region174: #{feature_reconstruction_loss.8} parent=165 // pred_fallthru
              _
          $region166: #{feature_reconstruction_loss.8} parent=161 // pred_fallthru
            _
          %1016 = vnop
        $region162: #{feature_reconstruction_loss.8} parent=103 // pred_fallthru
          _
        // Predicated region
        $region197: #{feature_reconstruction_loss.8} parent=103 // pred_check
          %p1017 = pneg %p178
        $region198: #{feature_reconstruction_loss.8} parent=103 // pred_check_branch
          %1019 = sbr.rel (%p1017) target = $region200
        $region199: #{feature_reconstruction_loss.8} parent=103 // pred_region
          %1021 = vsyncadd [#allocation8], 0
          %s1023 = sshll.u32 %s6, 4
          %s1024 = int_to_ptr.hbm [resolvable:$true] %s1023
          %1026 = dma.smem_to_hbm [#allocation7], 16, %s1024, [#allocation8]
        $region200: #{feature_reconstruction_loss.8} parent=103 // pred_fallthru
          _
        // Predicated region
        $region201: #{feature_reconstruction_loss.8} parent=103 // pred_check
          %p1027 = pneg %p178
        $region202: #{feature_reconstruction_loss.8} parent=103 // pred_check_branch
          %1029 = sbr.rel (%p1027) target = $region204
        $region203: #{feature_reconstruction_loss.8} parent=103 // pred_region
          %1031 = dma.done [#allocation8], 16
        $region204: #{feature_reconstruction_loss.8} parent=103 // pred_fallthru
          _
        %1032 = sfence
      $region104: #{feature_reconstruction_loss.8} parent=5 // pred_fallthru
        _
      %p1033 = scmp.le.s32.totalorder 2, %s14
      // Predicated region
      $region205: #{feature_reconstruction_loss.8} parent=5 // pred_check
        %p1034 = pneg %p1033
      $region206: #{feature_reconstruction_loss.8} parent=5 // pred_check_branch
        %1036 = sbr.rel (%p1034) target = $region208
      $region207: #{feature_reconstruction_loss.8} parent=5 // pred_region
        %s1037 = ssub.s32 %s14, 2
        // Predicated region
        $region209: #{feature_reconstruction_loss.8} parent=207 // pred_check
          %p1038 = pneg %p137
        $region210: #{feature_reconstruction_loss.8} parent=207 // pred_check_branch
          %1040 = sbr.rel (%p1038) target = $region212
        $region211: #{feature_reconstruction_loss.8} parent=207 // pred_region
          %s1041 = sand.u32 %s122, 1
          %s1042 = sand.u32 %s122, 1
          %s1043 = smul.addr %s1042, 16
          %s1044 = scalar_lea.vmem [#allocation5], %s1043
        $region212: #{feature_reconstruction_loss.8} parent=207 // pred_fallthru
          _
        // Predicated region
        $region213: #{feature_reconstruction_loss.8} parent=207 // pred_check
          %p1045 = pneg %p163
        $region214: #{feature_reconstruction_loss.8} parent=207 // pred_check_branch
          %1047 = sbr.rel (%p1045) target = $region216
        $region215: #{feature_reconstruction_loss.8} parent=207 // pred_region
          %s1048 = sand.u32 %s148, 1
          %s1049 = sand.u32 %s148, 1
          %s1050 = smul.addr %s1049, 16
          %s1051 = scalar_lea.vmem [#allocation6], %s1050
        $region216: #{feature_reconstruction_loss.8} parent=207 // pred_fallthru
          _
      $region208: #{feature_reconstruction_loss.8} parent=5 // pred_fallthru
        _
    $region6: #{feature_reconstruction_loss.8} parent=1 // loop_footer
      %s18 = sadd.s32 1, %s14
    $region7: #{feature_reconstruction_loss.8} parent=1 // loop_footer_branch
      %13 = sbr.rel target = $region3
    $region8: #{feature_reconstruction_loss.8} parent=1 // loop_exit
      _
    %1052 = vsyncpa [#allocation8], 1
    %s1053 = scalar_lea.sflag [#allocation8], 1
    %1054 = vsyncpa %s1053, 1

// kernel: feature_reconstruction_loss.9
$region0: #{feature_reconstruction_loss.9}
  #allocation0 [shape = 'u32[]', space=smem, size = 0x4, offset = 0x4, fixed_abs, tag = 'smem constant byte address 0x4 - core index']
  #allocation1 [shape = 'u32[72,128]{1,0:T(1,128)}', space=vmem, size = 0x9000, scoped, tag = 'internal scratch']
  #allocation2 [shape = 'f32[1,256]{1,0:T(1,128)}', space=vmem, size = 0x400, scoped, tag = 'scratch operand']
  %s0 = inlined_call_operand.vmem [shape: bf16[144,512], index: 0, kind: input, shape index: {}]
  %s1 = inlined_call_operand.vmem [shape: bf16[144,512], index: 1, kind: input, shape index: {}]
  %s2 = inlined_call_operand.vmem [shape: bf16[32,144], index: 2, kind: input, shape index: {}]
  %s3 = inlined_call_operand.vmem [shape: f32[32,1], index: 3, kind: input, shape index: {}]
  %s4 = inlined_call_operand.hbm [shape: f32[1,1], index: 4, kind: output, shape index: {}]
  %s5 = sld [smem:[#allocation0]]
  $region133: #{feature_reconstruction_loss.9} parent=0
    _
  %s7 = ssub.s32 1, %s5
  %s8 = scalar_select 0, %s7, %s5
  $region1: #{feature_reconstruction_loss.9} parent=0
    #allocation3 [shape = 'u8[147456]{0}', space=vmem, size = 0x24000, scoped, tag = 'input window, operand 0']
    #allocation4 [shape = 'u8[147456]{0}', space=vmem, size = 0x24000, scoped, tag = 'input window, operand 1']
    #allocation5 [shape = 'u8[512]{0}', space=smem, size = 0x200, scoped, tag = 'output window, operand 0, single buffered']
    #allocation6 [shape = 's32[2]{0}', space=sflag, size = 0x8, scoped, tag = 'scoped memory for feature_reconstruction_loss.9']
    %9 = vsyncpa [#allocation6], 0
    loop: start=0, step=1, limit=4
    $region2: #{feature_reconstruction_loss.9} parent=1 // loop_pre_header
      _
    $region3: #{feature_reconstruction_loss.9} parent=1 // loop_header
      %s11 = sphi 0, %s15
      %p12 = scmp.ge.s32.totalorder %s11, 4
      %s21 = sphi 0, %s23
      %s24 = sphi 0, %s21
      %s25 = sphi 0, %s24
      %s41 = sphi 0, %s25
      %s47 = sphi 0, %s49
      %s50 = sphi 0, %s47
      %s51 = sphi 0, %s50
      %s67 = sphi 0, %s51
      %s71 = sphi 0, %s71
      %s73 = sphi 0, %s71
      %s74 = sphi 0, %s73
      %s88 = sphi 0, %s74
      %s92 = sphi 0, %s92
      %s94 = sphi 0, %s92
      %s95 = sphi 0, %s94
      %s109 = sphi 0, %s95
      %s113 = sphi 0, %s113
      %s115 = sphi 0, %s113
      %s116 = sphi 0, %s115
      %s130 = sphi 0, %s116
    $region4: #{feature_reconstruction_loss.9} parent=1 // loop_header_branch
      %14 = sbr.rel (%p12) target = $region8
    $region5: #{feature_reconstruction_loss.9} parent=1 // loop_body
      %s16 = ssub.s32 %s11, 1
      %s17 = ssub.s32 %s11, 2
      %s18 = sadd.s32 %s11, 1
      %s19 = ssub.s32 %s11, %s18
      %p20 = scmp.eq.s32.totalorder %s19, 0
      %s22 = sadd.s32 %s21, 1
      %s23 = scalar_select %p20, %s21, %s22
      %p26 = pneg %p20
      %p27 = scmp.eq.s32.totalorder %s11, 1
      %p28 = por %p26, %p27
      %p29 = scmp.ne.s32.totalorder %s21, %s24
      %p30 = scmp.eq.s32.totalorder %s11, 0
      %p31 = por %p29, %p30
      %p32 = scmp.ne.s32.totalorder %s21, %s24
      %p33 = scmp.eq.s32.totalorder %s16, 1
      %p34 = por %p32, %p33
      %p35 = scmp.ne.s32.totalorder %s24, %s25
      %p36 = scmp.eq.s32.totalorder %s16, 0
      %p37 = por %p35, %p36
      %p38 = scmp.ne.s32.totalorder %s24, %s25
      %p39 = scmp.eq.s32.totalorder %s17, 1
      %p40 = por %p38, %p39
      %p42 = scmp.ne.s32.totalorder %s25, %s41
      %p43 = scmp.eq.s32.totalorder %s17, 0
      %p44 = por %p42, %p43
      %s45 = ssub.s32 %s11, %s18
      %p46 = scmp.eq.s32.totalorder %s45, 0
      %s48 = sadd.s32 %s47, 1
      %s49 = scalar_select %p46, %s47, %s48
      %p52 = pneg %p46
      %p53 = scmp.eq.s32.totalorder %s11, 1
      %p54 = por %p52, %p53
      %p55 = scmp.ne.s32.totalorder %s47, %s50
      %p56 = scmp.eq.s32.totalorder %s11, 0
      %p57 = por %p55, %p56
      %p58 = scmp.ne.s32.totalorder %s47, %s50
      %p59 = scmp.eq.s32.totalorder %s16, 1
      %p60 = por %p58, %p59
      %p61 = scmp.ne.s32.totalorder %s50, %s51
      %p62 = scmp.eq.s32.totalorder %s16, 0
      %p63 = por %p61, %p62
      %p64 = scmp.ne.s32.totalorder %s50, %s51
      %p65 = scmp.eq.s32.totalorder %s17, 1
      %p66 = por %p64, %p65
      %p68 = scmp.ne.s32.totalorder %s51, %s67
      %p69 = scmp.eq.s32.totalorder %s17, 0
      %p70 = por %p68, %p69
      %s72 = sadd.s32 %s71, 1
      %p75 = scmp.eq.s32.totalorder %s11, 1
      %p76 = scmp.ne.s32.totalorder %s71, %s73
      %p77 = scmp.eq.s32.totalorder %s11, 0
      %p78 = por %p76, %p77
      %p79 = scmp.ne.s32.totalorder %s71, %s73
      %p80 = scmp.eq.s32.totalorder %s16, 1
      %p81 = por %p79, %p80
      %p82 = scmp.ne.s32.totalorder %s73, %s74
      %p83 = scmp.eq.s32.totalorder %s16, 0
      %p84 = por %p82, %p83
      %p85 = scmp.ne.s32.totalorder %s73, %s74
      %p86 = scmp.eq.s32.totalorder %s17, 1
      %p87 = por %p85, %p86
      %p89 = scmp.ne.s32.totalorder %s74, %s88
      %p90 = scmp.eq.s32.totalorder %s17, 0
      %p91 = por %p89, %p90
      %s93 = sadd.s32 %s92, 1
      %p96 = scmp.eq.s32.totalorder %s11, 1
      %p97 = scmp.ne.s32.totalorder %s92, %s94
      %p98 = scmp.eq.s32.totalorder %s11, 0
      %p99 = por %p97, %p98
      %p100 = scmp.ne.s32.totalorder %s92, %s94
      %p101 = scmp.eq.s32.totalorder %s16, 1
      %p102 = por %p100, %p101
      %p103 = scmp.ne.s32.totalorder %s94, %s95
      %p104 = scmp.eq.s32.totalorder %s16, 0
      %p105 = por %p103, %p104
      %p106 = scmp.ne.s32.totalorder %s94, %s95
      %p107 = scmp.eq.s32.totalorder %s17, 1
      %p108 = por %p106, %p107
      %p110 = scmp.ne.s32.totalorder %s95, %s109
      %p111 = scmp.eq.s32.totalorder %s17, 0
      %p112 = por %p110, %p111
      %s114 = sadd.s32 %s113, 1
      %p117 = scmp.eq.s32.totalorder %s11, 1
      %p118 = scmp.ne.s32.totalorder %s113, %s115
      %p119 = scmp.eq.s32.totalorder %s11, 0
      %p120 = por %p118, %p119
      %p121 = scmp.ne.s32.totalorder %s113, %s115
      %p122 = scmp.eq.s32.totalorder %s16, 1
      %p123 = por %p121, %p122
      %p124 = scmp.ne.s32.totalorder %s115, %s116
      %p125 = scmp.eq.s32.totalorder %s16, 0
      %p126 = por %p124, %p125
      %p127 = scmp.ne.s32.totalorder %s115, %s116
      %p128 = scmp.eq.s32.totalorder %s17, 1
      %p129 = por %p127, %p128
      %p131 = scmp.ne.s32.totalorder %s116, %s130
      %p132 = scmp.eq.s32.totalorder %s17, 0
      %p133 = por %p131, %p132
      %p134 = scmp.le.s32.totalorder 1, %s11
      %p135 = scmp.lt.s32.totalorder %s11, 3
      %p136 = pnand %p134, %p135
      %p137 = pneg %p136
      // Predicated region
      $region9: #{feature_reconstruction_loss.9} parent=5 // pred_check
        _
      $region10: #{feature_reconstruction_loss.9} parent=5 // pred_check_branch
        %139 = sbr.rel (%p136) target = $region12
      $region11: #{feature_reconstruction_loss.9} parent=5 // pred_region
        %s140 = ssub.s32 %s11, 1
        // Predicated region
        $region13: #{feature_reconstruction_loss.9} parent=11 // pred_check
          %p141 = pneg %p84
        $region14: #{feature_reconstruction_loss.9} parent=11 // pred_check_branch
          %143 = sbr.rel (%p141) target = $region16
        $region15: #{feature_reconstruction_loss.9} parent=11 // pred_region
          _
        $region16: #{feature_reconstruction_loss.9} parent=11 // pred_fallthru
          _
        // Predicated region
        $region17: #{feature_reconstruction_loss.9} parent=11 // pred_check
          %p144 = pneg %p105
        $region18: #{feature_reconstruction_loss.9} parent=11 // pred_check_branch
          %146 = sbr.rel (%p144) target = $region20
        $region19: #{feature_reconstruction_loss.9} parent=11 // pred_region
          _
        $region20: #{feature_reconstruction_loss.9} parent=11 // pred_fallthru
          _
      $region12: #{feature_reconstruction_loss.9} parent=5 // pred_fallthru
        _
      %p147 = scmp.lt.s32.totalorder %s11, 2
      // Predicated region
      $region21: #{feature_reconstruction_loss.9} parent=5 // pred_check
        %p148 = pneg %p147
      $region22: #{feature_reconstruction_loss.9} parent=5 // pred_check_branch
        %150 = sbr.rel (%p148) target = $region24
      $region23: #{feature_reconstruction_loss.9} parent=5 // pred_region
        // Predicated region
        $region25: #{feature_reconstruction_loss.9} parent=23 // pred_check
          %p151 = pneg %p31
        $region26: #{feature_reconstruction_loss.9} parent=23 // pred_check_branch
          %153 = sbr.rel (%p151) target = $region28
        $region27: #{feature_reconstruction_loss.9} parent=23 // pred_region
          %s154 = sand.u32 %s21, 1
          %s155 = sand.u32 %s21, 1
          %s156 = smul.addr %s155, 144
          %s157 = scalar_lea.vmem [#allocation3], %s156
          %s158 = smul.u32 2, %s11
          %s159 = smul.addr %s158, 4
          %s160 = scalar_lea.vmem %s0, %s159
          // Predicated region
          $region29: #{feature_reconstruction_loss.9} parent=27 // pred_check
            _
          $region30: #{feature_reconstruction_loss.9} parent=27 // pred_check_branch
            %162 = sbr.rel (0) target = $region32
          $region31: #{feature_reconstruction_loss.9} parent=27 // pred_region
            // Predicated region
            $region33: #{feature_reconstruction_loss.9} parent=31 // pred_check
              _
            $region34: #{feature_reconstruction_loss.9} parent=31 // pred_check_branch
              %164 = sbr.rel (0) target = $region36
            $region35: #{feature_reconstruction_loss.9} parent=31 // pred_region
              // Predicated region
              $region48: #{feature_reconstruction_loss.9} parent=35 // pred_check
                _
              $region49: #{feature_reconstruction_loss.9} parent=35 // pred_check_branch
                %214 = sbr.rel (0) target = $region51
              $region50: #{feature_reconstruction_loss.9} parent=35 // pred_region
                loop: start=0, step=1, limit=1
                $region52: #{feature_reconstruction_loss.9} parent=50 // loop_pre_header
                  _
                $region53: #{feature_reconstruction_loss.9} parent=50 // loop_header
                  %s216 = sphi 0, %s220
                  %p217 = scmp.ge.s32.totalorder %s216, 1
                  %s221 = sphi %s160, %s160
                  %s222 = sphi %s157, %s157
                $region54: #{feature_reconstruction_loss.9} parent=50 // loop_header_branch
                  %219 = sbr.rel (%p217) target = $region58
                $region55: #{feature_reconstruction_loss.9} parent=50 // loop_body
                  %v223 = vld [vmem:[%s221] sm:$0xff]
                  %224 = vst [vmem:[%s222] sm:$0xff] %v223
                  %v225 = vld [vmem:[%s221 + $0x10] sm:$0xff]
                  %226 = vst [vmem:[%s222 + $0x8] sm:$0xff] %v225
                  %v227 = vld [vmem:[%s221 + $0x20] sm:$0xff]
                  %228 = vst [vmem:[%s222 + $0x10] sm:$0xff] %v227
                  %v229 = vld [vmem:[%s221 + $0x30] sm:$0xff]
                  %230 = vst [vmem:[%s222 + $0x18] sm:$0xff] %v229
                  %v231 = vld [vmem:[%s221 + $0x40] sm:$0xff]
                  %232 = vst [vmem:[%s222 + $0x20] sm:$0xff] %v231
                  %v233 = vld [vmem:[%s221 + $0x50] sm:$0xff]
                  %234 = vst [vmem:[%s222 + $0x28] sm:$0xff] %v233
                  %v235 = vld [vmem:[%s221 + $0x60] sm:$0xff]
                  %236 = vst [vmem:[%s222 + $0x30] sm:$0xff] %v235
                  %v237 = vld [vmem:[%s221 + $0x70] sm:$0xff]
                  %238 = vst [vmem:[%s222 + $0x38] sm:$0xff] %v237
                  %v239 = vld [vmem:[%s221 + $0x80] sm:$0xff]
                  %240 = vst [vmem:[%s222 + $0x40] sm:$0xff] %v239
                  %v241 = vld [vmem:[%s221 + $0x90] sm:$0xff]
                  %242 = vst [vmem:[%s222 + $0x48] sm:$0xff] %v241
                  %v243 = vld [vmem:[%s221 + $0xa0] sm:$0xff]
                  %244 = vst [vmem:[%s222 + $0x50] sm:$0xff] %v243
                  %v245 = vld [vmem:[%s221 + $0xb0] sm:$0xff]
                  %246 = vst [vmem:[%s222 + $0x58] sm:$0xff] %v245
                  %v247 = vld [vmem:[%s221 + $0xc0] sm:$0xff]
                  %248 = vst [vmem:[%s222 + $0x60] sm:$0xff] %v247
                  %v249 = vld [vmem:[%s221 + $0xd0] sm:$0xff]
                  %250 = vst [vmem:[%s222 + $0x68] sm:$0xff] %v249
                  %v251 = vld [vmem:[%s221 + $0xe0] sm:$0xff]
                  %252 = vst [vmem:[%s222 + $0x70] sm:$0xff] %v251
                  %v253 = vld [vmem:[%s221 + $0xf0] sm:$0xff]
                  %254 = vst [vmem:[%s222 + $0x78] sm:$0xff] %v253
                  %v255 = vld [vmem:[%s221 + $0x100] sm:$0xff]
                  %256 = vst [vmem:[%s222 + $0x80] sm:$0xff] %v255
                  %v257 = vld [vmem:[%s221 + $0x110] sm:$0xff]
                  %258 = vst [vmem:[%s222 + $0x88] sm:$0xff] %v257
                $region56: #{feature_reconstruction_loss.9} parent=50 // loop_footer
                  %s220 = sadd.s32 1, %s216
                $region57: #{feature_reconstruction_loss.9} parent=50 // loop_footer_branch
                  %215 = sbr.rel target = $region53
                $region58: #{feature_reconstruction_loss.9} parent=50 // loop_exit
                  _
              $region51: #{feature_reconstruction_loss.9} parent=35 // pred_fallthru
                _
              // Predicated region
              $region59: #{feature_reconstruction_loss.9} parent=35 // pred_check
                _
              $region60: #{feature_reconstruction_loss.9} parent=35 // pred_check_branch
                %260 = sbr.rel target = $region62
              $region61: #{feature_reconstruction_loss.9} parent=35 // pred_region
                _
              $region62: #{feature_reconstruction_loss.9} parent=35 // pred_fallthru
                _
            $region36: #{feature_reconstruction_loss.9} parent=31 // pred_fallthru
              _
            // Predicated region
            $region37: #{feature_reconstruction_loss.9} parent=31 // pred_check
              _
            $region38: #{feature_reconstruction_loss.9} parent=31 // pred_check_branch
              %166 = sbr.rel target = $region40
            $region39: #{feature_reconstruction_loss.9} parent=31 // pred_region
              %s168 = ssub.s32 256, 1
              loop: start=0, step=1, limit=1
              $region41: #{feature_reconstruction_loss.9} parent=39 // loop_pre_header
                _
              $region42: #{feature_reconstruction_loss.9} parent=39 // loop_header
                %s170 = sphi 0, %s174
                %p171 = scmp.ge.s32.totalorder %s170, 1
                %s175 = sphi %s160, %s160
                %s176 = sphi %s157, %s157
              $region43: #{feature_reconstruction_loss.9} parent=39 // loop_header_branch
                %173 = sbr.rel (%p171) target = $region47
              $region44: #{feature_reconstruction_loss.9} parent=39 // loop_body
                %v177 = vld [vmem:[%s175] sm:%s168]
                %178 = vst [vmem:[%s176] sm:%s168] %v177
                %v179 = vld [vmem:[%s175 + $0x10] sm:%s168]
                %180 = vst [vmem:[%s176 + $0x8] sm:%s168] %v179
                %v181 = vld [vmem:[%s175 + $0x20] sm:%s168]
                %182 = vst [vmem:[%s176 + $0x10] sm:%s168] %v181
                %v183 = vld [vmem:[%s175 + $0x30] sm:%s168]
                %184 = vst [vmem:[%s176 + $0x18] sm:%s168] %v183
                %v185 = vld [vmem:[%s175 + $0x40] sm:%s168]
                %186 = vst [vmem:[%s176 + $0x20] sm:%s168] %v185
                %v187 = vld [vmem:[%s175 + $0x50] sm:%s168]
                %188 = vst [vmem:[%s176 + $0x28] sm:%s168] %v187
                %v189 = vld [vmem:[%s175 + $0x60] sm:%s168]
                %190 = vst [vmem:[%s176 + $0x30] sm:%s168] %v189
                %v191 = vld [vmem:[%s175 + $0x70] sm:%s168]
                %192 = vst [vmem:[%s176 + $0x38] sm:%s168] %v191
                %v193 = vld [vmem:[%s175 + $0x80] sm:%s168]
                %194 = vst [vmem:[%s176 + $0x40] sm:%s168] %v193
                %v195 = vld [vmem:[%s175 + $0x90] sm:%s168]
                %196 = vst [vmem:[%s176 + $0x48] sm:%s168] %v195
                %v197 = vld [vmem:[%s175 + $0xa0] sm:%s168]
                %198 = vst [vmem:[%s176 + $0x50] sm:%s168] %v197
                %v199 = vld [vmem:[%s175 + $0xb0] sm:%s168]
                %200 = vst [vmem:[%s176 + $0x58] sm:%s168] %v199
                %v201 = vld [vmem:[%s175 + $0xc0] sm:%s168]
                %202 = vst [vmem:[%s176 + $0x60] sm:%s168] %v201
                %v203 = vld [vmem:[%s175 + $0xd0] sm:%s168]
                %204 = vst [vmem:[%s176 + $0x68] sm:%s168] %v203
                %v205 = vld [vmem:[%s175 + $0xe0] sm:%s168]
                %206 = vst [vmem:[%s176 + $0x70] sm:%s168] %v205
                %v207 = vld [vmem:[%s175 + $0xf0] sm:%s168]
                %208 = vst [vmem:[%s176 + $0x78] sm:%s168] %v207
                %v209 = vld [vmem:[%s175 + $0x100] sm:%s168]
                %210 = vst [vmem:[%s176 + $0x80] sm:%s168] %v209
                %v211 = vld [vmem:[%s175 + $0x110] sm:%s168]
                %212 = vst [vmem:[%s176 + $0x88] sm:%s168] %v211
              $region45: #{feature_reconstruction_loss.9} parent=39 // loop_footer
                %s174 = sadd.s32 1, %s170
              $region46: #{feature_reconstruction_loss.9} parent=39 // loop_footer_branch
                %169 = sbr.rel target = $region42
              $region47: #{feature_reconstruction_loss.9} parent=39 // loop_exit
                _
            $region40: #{feature_reconstruction_loss.9} parent=31 // pred_fallthru
              _
          $region32: #{feature_reconstruction_loss.9} parent=27 // pred_fallthru
            _
          %261 = vnop
        $region28: #{feature_reconstruction_loss.9} parent=23 // pred_fallthru
          _
        // Predicated region
        $region63: #{feature_reconstruction_loss.9} parent=23 // pred_check
          %p262 = pneg %p57
        $region64: #{feature_reconstruction_loss.9} parent=23 // pred_check_branch
          %264 = sbr.rel (%p262) target = $region66
        $region65: #{feature_reconstruction_loss.9} parent=23 // pred_region
          %s265 = sand.u32 %s47, 1
          %s266 = sand.u32 %s47, 1
          %s267 = smul.addr %s266, 144
          %s268 = scalar_lea.vmem [#allocation4], %s267
          %s269 = smul.u32 2, %s11
          %s270 = smul.addr %s269, 4
          %s271 = scalar_lea.vmem %s1, %s270
          // Predicated region
          $region67: #{feature_reconstruction_loss.9} parent=65 // pred_check
            _
          $region68: #{feature_reconstruction_loss.9} parent=65 // pred_check_branch
            %273 = sbr.rel (0) target = $region70
          $region69: #{feature_reconstruction_loss.9} parent=65 // pred_region
            // Predicated region
            $region71: #{feature_reconstruction_loss.9} parent=69 // pred_check
              _
            $region72: #{feature_reconstruction_loss.9} parent=69 // pred_check_branch
              %275 = sbr.rel (0) target = $region74
            $region73: #{feature_reconstruction_loss.9} parent=69 // pred_region
              // Predicated region
              $region86: #{feature_reconstruction_loss.9} parent=73 // pred_check
                _
              $region87: #{feature_reconstruction_loss.9} parent=73 // pred_check_branch
                %325 = sbr.rel (0) target = $region89
              $region88: #{feature_reconstruction_loss.9} parent=73 // pred_region
                loop: start=0, step=1, limit=1
                $region90: #{feature_reconstruction_loss.9} parent=88 // loop_pre_header
                  _
                $region91: #{feature_reconstruction_loss.9} parent=88 // loop_header
                  %s327 = sphi 0, %s331
                  %p328 = scmp.ge.s32.totalorder %s327, 1
                  %s332 = sphi %s271, %s271
                  %s333 = sphi %s268, %s268
                $region92: #{feature_reconstruction_loss.9} parent=88 // loop_header_branch
                  %330 = sbr.rel (%p328) target = $region96
                $region93: #{feature_reconstruction_loss.9} parent=88 // loop_body
                  %v334 = vld [vmem:[%s332] sm:$0xff]
                  %335 = vst [vmem:[%s333] sm:$0xff] %v334
                  %v336 = vld [vmem:[%s332 + $0x10] sm:$0xff]
                  %337 = vst [vmem:[%s333 + $0x8] sm:$0xff] %v336
                  %v338 = vld [vmem:[%s332 + $0x20] sm:$0xff]
                  %339 = vst [vmem:[%s333 + $0x10] sm:$0xff] %v338
                  %v340 = vld [vmem:[%s332 + $0x30] sm:$0xff]
                  %341 = vst [vmem:[%s333 + $0x18] sm:$0xff] %v340
                  %v342 = vld [vmem:[%s332 + $0x40] sm:$0xff]
                  %343 = vst [vmem:[%s333 + $0x20] sm:$0xff] %v342
                  %v344 = vld [vmem:[%s332 + $0x50] sm:$0xff]
                  %345 = vst [vmem:[%s333 + $0x28] sm:$0xff] %v344
                  %v346 = vld [vmem:[%s332 + $0x60] sm:$0xff]
                  %347 = vst [vmem:[%s333 + $0x30] sm:$0xff] %v346
                  %v348 = vld [vmem:[%s332 + $0x70] sm:$0xff]
                  %349 = vst [vmem:[%s333 + $0x38] sm:$0xff] %v348
                  %v350 = vld [vmem:[%s332 + $0x80] sm:$0xff]
                  %351 = vst [vmem:[%s333 + $0x40] sm:$0xff] %v350
                  %v352 = vld [vmem:[%s332 + $0x90] sm:$0xff]
                  %353 = vst [vmem:[%s333 + $0x48] sm:$0xff] %v352
                  %v354 = vld [vmem:[%s332 + $0xa0] sm:$0xff]
                  %355 = vst [vmem:[%s333 + $0x50] sm:$0xff] %v354
                  %v356 = vld [vmem:[%s332 + $0xb0] sm:$0xff]
                  %357 = vst [vmem:[%s333 + $0x58] sm:$0xff] %v356
                  %v358 = vld [vmem:[%s332 + $0xc0] sm:$0xff]
                  %359 = vst [vmem:[%s333 + $0x60] sm:$0xff] %v358
                  %v360 = vld [vmem:[%s332 + $0xd0] sm:$0xff]
                  %361 = vst [vmem:[%s333 + $0x68] sm:$0xff] %v360
                  %v362 = vld [vmem:[%s332 + $0xe0] sm:$0xff]
                  %363 = vst [vmem:[%s333 + $0x70] sm:$0xff] %v362
                  %v364 = vld [vmem:[%s332 + $0xf0] sm:$0xff]
                  %365 = vst [vmem:[%s333 + $0x78] sm:$0xff] %v364
                  %v366 = vld [vmem:[%s332 + $0x100] sm:$0xff]
                  %367 = vst [vmem:[%s333 + $0x80] sm:$0xff] %v366
                  %v368 = vld [vmem:[%s332 + $0x110] sm:$0xff]
                  %369 = vst [vmem:[%s333 + $0x88] sm:$0xff] %v368
                $region94: #{feature_reconstruction_loss.9} parent=88 // loop_footer
                  %s331 = sadd.s32 1, %s327
                $region95: #{feature_reconstruction_loss.9} parent=88 // loop_footer_branch
                  %326 = sbr.rel target = $region91
                $region96: #{feature_reconstruction_loss.9} parent=88 // loop_exit
                  _
              $region89: #{feature_reconstruction_loss.9} parent=73 // pred_fallthru
                _
              // Predicated region
              $region97: #{feature_reconstruction_loss.9} parent=73 // pred_check
                _
              $region98: #{feature_reconstruction_loss.9} parent=73 // pred_check_branch
                %371 = sbr.rel target = $region100
              $region99: #{feature_reconstruction_loss.9} parent=73 // pred_region
                _
              $region100: #{feature_reconstruction_loss.9} parent=73 // pred_fallthru
                _
            $region74: #{feature_reconstruction_loss.9} parent=69 // pred_fallthru
              _
            // Predicated region
            $region75: #{feature_reconstruction_loss.9} parent=69 // pred_check
              _
            $region76: #{feature_reconstruction_loss.9} parent=69 // pred_check_branch
              %277 = sbr.rel target = $region78
            $region77: #{feature_reconstruction_loss.9} parent=69 // pred_region
              %s279 = ssub.s32 256, 1
              loop: start=0, step=1, limit=1
              $region79: #{feature_reconstruction_loss.9} parent=77 // loop_pre_header
                _
              $region80: #{feature_reconstruction_loss.9} parent=77 // loop_header
                %s281 = sphi 0, %s285
                %p282 = scmp.ge.s32.totalorder %s281, 1
                %s286 = sphi %s271, %s271
                %s287 = sphi %s268, %s268
              $region81: #{feature_reconstruction_loss.9} parent=77 // loop_header_branch
                %284 = sbr.rel (%p282) target = $region85
              $region82: #{feature_reconstruction_loss.9} parent=77 // loop_body
                %v288 = vld [vmem:[%s286] sm:%s279]
                %289 = vst [vmem:[%s287] sm:%s279] %v288
                %v290 = vld [vmem:[%s286 + $0x10] sm:%s279]
                %291 = vst [vmem:[%s287 + $0x8] sm:%s279] %v290
                %v292 = vld [vmem:[%s286 + $0x20] sm:%s279]
                %293 = vst [vmem:[%s287 + $0x10] sm:%s279] %v292
                %v294 = vld [vmem:[%s286 + $0x30] sm:%s279]
                %295 = vst [vmem:[%s287 + $0x18] sm:%s279] %v294
                %v296 = vld [vmem:[%s286 + $0x40] sm:%s279]
                %297 = vst [vmem:[%s287 + $0x20] sm:%s279] %v296
                %v298 = vld [vmem:[%s286 + $0x50] sm:%s279]
                %299 = vst [vmem:[%s287 + $0x28] sm:%s279] %v298
                %v300 = vld [vmem:[%s286 + $0x60] sm:%s279]
                %301 = vst [vmem:[%s287 + $0x30] sm:%s279] %v300
                %v302 = vld [vmem:[%s286 + $0x70] sm:%s279]
                %303 = vst [vmem:[%s287 + $0x38] sm:%s279] %v302
                %v304 = vld [vmem:[%s286 + $0x80] sm:%s279]
                %305 = vst [vmem:[%s287 + $0x40] sm:%s279] %v304
                %v306 = vld [vmem:[%s286 + $0x90] sm:%s279]
                %307 = vst [vmem:[%s287 + $0x48] sm:%s279] %v306
                %v308 = vld [vmem:[%s286 + $0xa0] sm:%s279]
                %309 = vst [vmem:[%s287 + $0x50] sm:%s279] %v308
                %v310 = vld [vmem:[%s286 + $0xb0] sm:%s279]
                %311 = vst [vmem:[%s287 + $0x58] sm:%s279] %v310
                %v312 = vld [vmem:[%s286 + $0xc0] sm:%s279]
                %313 = vst [vmem:[%s287 + $0x60] sm:%s279] %v312
                %v314 = vld [vmem:[%s286 + $0xd0] sm:%s279]
                %315 = vst [vmem:[%s287 + $0x68] sm:%s279] %v314
                %v316 = vld [vmem:[%s286 + $0xe0] sm:%s279]
                %317 = vst [vmem:[%s287 + $0x70] sm:%s279] %v316
                %v318 = vld [vmem:[%s286 + $0xf0] sm:%s279]
                %319 = vst [vmem:[%s287 + $0x78] sm:%s279] %v318
                %v320 = vld [vmem:[%s286 + $0x100] sm:%s279]
                %321 = vst [vmem:[%s287 + $0x80] sm:%s279] %v320
                %v322 = vld [vmem:[%s286 + $0x110] sm:%s279]
                %323 = vst [vmem:[%s287 + $0x88] sm:%s279] %v322
              $region83: #{feature_reconstruction_loss.9} parent=77 // loop_footer
                %s285 = sadd.s32 1, %s281
              $region84: #{feature_reconstruction_loss.9} parent=77 // loop_footer_branch
                %280 = sbr.rel target = $region80
              $region85: #{feature_reconstruction_loss.9} parent=77 // loop_exit
                _
            $region78: #{feature_reconstruction_loss.9} parent=69 // pred_fallthru
              _
          $region70: #{feature_reconstruction_loss.9} parent=65 // pred_fallthru
            _
          %372 = vnop
        $region66: #{feature_reconstruction_loss.9} parent=23 // pred_fallthru
          _
      $region24: #{feature_reconstruction_loss.9} parent=5 // pred_fallthru
        _
      %p373 = scmp.le.s32.totalorder 1, %s11
      %p374 = scmp.lt.s32.totalorder %s11, 3
      %p375 = pnand %p373, %p374
      %p376 = pneg %p375
      // Predicated region
      $region101: #{feature_reconstruction_loss.9} parent=5 // pred_check
        _
      $region102: #{feature_reconstruction_loss.9} parent=5 // pred_check_branch
        %378 = sbr.rel (%p375) target = $region104
      $region103: #{feature_reconstruction_loss.9} parent=5 // pred_region
        %s379 = ssub.s32 %s11, 1
        %s380 = sand.u32 %s24, 1
        %s381 = sand.u32 %s24, 1
        %s382 = smul.addr %s381, 144
        %s383 = scalar_lea.vmem [#allocation3], %s382
        // Predicated region
        $region105: #{feature_reconstruction_loss.9} parent=103 // pred_check
          %p384 = pneg %p37
        $region106: #{feature_reconstruction_loss.9} parent=103 // pred_check_branch
          %386 = sbr.rel (%p384) target = $region108
        $region107: #{feature_reconstruction_loss.9} parent=103 // pred_region
          _
        $region108: #{feature_reconstruction_loss.9} parent=103 // pred_fallthru
          _
        %s387 = sand.u32 %s50, 1
        %s388 = sand.u32 %s50, 1
        %s389 = smul.addr %s388, 144
        %s390 = scalar_lea.vmem [#allocation4], %s389
        // Predicated region
        $region109: #{feature_reconstruction_loss.9} parent=103 // pred_check
          %p391 = pneg %p63
        $region110: #{feature_reconstruction_loss.9} parent=103 // pred_check_branch
          %393 = sbr.rel (%p391) target = $region112
        $region111: #{feature_reconstruction_loss.9} parent=103 // pred_region
          _
        $region112: #{feature_reconstruction_loss.9} parent=103 // pred_fallthru
          _
        %s394 = sand.u32 %s24, 1
        %s395 = sand.u32 %s24, 1
        %s396 = smul.addr %s395, 144
        %s397 = scalar_lea.vmem [#allocation3], %s396
        %p398 = pneg %p37
        %p399 = pneg %p34
        %s400 = sand.u32 %s50, 1
        %s401 = sand.u32 %s50, 1
        %s402 = smul.addr %s401, 144
        %s403 = scalar_lea.vmem [#allocation4], %s402
        %p404 = pneg %p63
        %p405 = pneg %p60
        %p406 = pneg %p84
        %p407 = pneg %p81
        %p408 = pneg %p105
        %p409 = pneg %p102
        %p410 = pneg %p126
        %p411 = pneg %p123
        %s412 = smul.u32 2, %s16
        %s413 = smul.u32 2, %s16
        %p415 = scmp.eq.s32.totalorder %s16, 0
        // Predicated region
        $region113: #{feature_reconstruction_loss.9} parent=103 // pred_check
          %p416 = pneg %p415
        $region114: #{feature_reconstruction_loss.9} parent=103 // pred_check_branch
          %418 = sbr.rel (%p416) target = $region116
        $region115: #{feature_reconstruction_loss.9} parent=103 // pred_region
          %v419 = vlaneseq
          %vm420 = vcmp.ge.s32.totalorder %v419, 0
          %vm421 = vcmp.lt.s32.totalorder %v419, 256
          %vm422 = vmand %vm420, %vm421
          %423 = vst.msk [vmem:[#allocation2] sm:$0x3] %vm422, 0.0
        $region116: #{feature_reconstruction_loss.9} parent=103 // pred_fallthru
          _
        %v424 = vld [vmem:[%s2] sm:$0xff]
        %v425 = vld [vmem:[%s2 + $0x8] sm:$0xff]
        %v426 = vld [vmem:[%s2 + $0x10] sm:$0xff]
        %v427 = vld [vmem:[%s2 + $0x18] sm:$0xff]
        %v428 = vld [vmem:[%s3] sm:$0xff]
        %v429 = vld [vmem:[%s3 + $0x8] sm:$0xff]
        %v430 = vld [vmem:[%s3 + $0x10] sm:$0xff]
        %v431 = vld [vmem:[%s3 + $0x18] sm:$0xff]
        %v432 = vld [vmem:[%s383] sm:$0xff]
        %v433 = vld [vmem:[%s383 + $0x8] sm:$0xff]
        %v434 = vld [vmem:[%s383 + $0x10] sm:$0xff]
        %v435 = vld [vmem:[%s383 + $0x18] sm:$0xff]
        %v436 = vld [vmem:[%s383 + $0x20] sm:$0xff]
        %v437 = vld [vmem:[%s383 + $0x28] sm:$0xff]
        %v438 = vld [vmem:[%s383 + $0x30] sm:$0xff]
        %v439 = vld [vmem:[%s383 + $0x38] sm:$0xff]
        %v440 = vld [vmem:[%s383 + $0x40] sm:$0xff]
        %v441 = vld [vmem:[%s383 + $0x48] sm:$0xff]
        %v442 = vld [vmem:[%s383 + $0x50] sm:$0xff]
        %v443 = vld [vmem:[%s383 + $0x58] sm:$0xff]
        %v444 = vld [vmem:[%s383 + $0x60] sm:$0xff]
        %v445 = vld [vmem:[%s383 + $0x68] sm:$0xff]
        %v446 = vld [vmem:[%s383 + $0x70] sm:$0xff]
        %v447 = vld [vmem:[%s383 + $0x78] sm:$0xff]
        %v448 = vld [vmem:[%s383 + $0x80] sm:$0xff]
        %v449 = vld [vmem:[%s383 + $0x88] sm:$0xff]
        %451 = vset.pattern.permute.xlu0 0
        %452 = vperm.xlu0 %451, %v428
        %v453 = vpop.permute.xlu0 %452
        %456 = vset.pattern.permute.xlu0 0
        %457 = vperm.xlu0 %456, %v429
        %v458 = vpop.permute.xlu0 %457
        %461 = vset.pattern.permute.xlu0 0
        %462 = vperm.xlu0 %461, %v430
        %v463 = vpop.permute.xlu0 %462
        %466 = vset.pattern.permute.xlu0 0
        %467 = vperm.xlu0 %466, %v431
        %v468 = vpop.permute.xlu0 %467
        %v474 = vunpack.c.l.b16 %v424
        %v475 = vunpack.c.h.b16 %v424
        %v476 = vunpack.c.l.b16 %v425
        %v477 = vunpack.c.h.b16 %v425
        %v478 = vunpack.c.l.b16 %v426
        %v479 = vunpack.c.h.b16 %v426
        %v480 = vunpack.c.l.b16 %v427
        %v481 = vunpack.c.h.b16 %v427
        %v482 = vpack.c.b16 %v476, %v474
        %v483 = vpack.c.b16 %v477, %v475
        %v484 = vpack.c.b16 %v480, %v478
        %v485 = vpack.c.b16 %v481, %v479
        %v506 = vunpack.c.l.b16 %v432
        %v507 = vunpack.c.h.b16 %v432
        %v508 = vunpack.c.l.b16 %v433
        %v509 = vunpack.c.h.b16 %v433
        %v510 = vunpack.c.l.b16 %v434
        %v511 = vunpack.c.h.b16 %v434
        %v512 = vunpack.c.l.b16 %v435
        %v513 = vunpack.c.h.b16 %v435
        %v514 = vunpack.c.l.b16 %v436
        %v515 = vunpack.c.h.b16 %v436
        %v516 = vunpack.c.l.b16 %v437
        %v517 = vunpack.c.h.b16 %v437
        %v518 = vunpack.c.l.b16 %v438
        %v519 = vunpack.c.h.b16 %v438
        %v520 = vunpack.c.l.b16 %v439
        %v521 = vunpack.c.h.b16 %v439
        %v522 = vunpack.c.l.b16 %v440
        %v523 = vunpack.c.h.b16 %v440
        %v524 = vunpack.c.l.b16 %v441
        %v525 = vunpack.c.h.b16 %v441
        %v526 = vunpack.c.l.b16 %v442
        %v527 = vunpack.c.h.b16 %v442
        %v528 = vunpack.c.l.b16 %v443
        %v529 = vunpack.c.h.b16 %v443
        %v530 = vunpack.c.l.b16 %v444
        %v531 = vunpack.c.h.b16 %v444
        %v532 = vunpack.c.l.b16 %v445
        %v533 = vunpack.c.h.b16 %v445
        %v534 = vunpack.c.l.b16 %v446
        %v535 = vunpack.c.h.b16 %v446
        %v536 = vunpack.c.l.b16 %v447
        %v537 = vunpack.c.h.b16 %v447
        %v538 = vunpack.c.l.b16 %v448
        %v539 = vunpack.c.h.b16 %v448
        %v540 = vunpack.c.l.b16 %v449
        %v541 = vunpack.c.h.b16 %v449
        %v542 = vpack.c.b16 %v508, %v506
        %v543 = vpack.c.b16 %v509, %v507
        %v544 = vpack.c.b16 %v512, %v510
        %v545 = vpack.c.b16 %v513, %v511
        %v546 = vpack.c.b16 %v516, %v514
        %v547 = vpack.c.b16 %v517, %v515
        %v548 = vpack.c.b16 %v520, %v518
        %v549 = vpack.c.b16 %v521, %v519
        %v550 = vpack.c.b16 %v524, %v522
        %v551 = vpack.c.b16 %v525, %v523
        %v552 = vpack.c.b16 %v528, %v526
        %v553 = vpack.c.b16 %v529, %v527
        %v554 = vpack.c.b16 %v532, %v530
        %v555 = vpack.c.b16 %v533, %v531
        %v556 = vpack.c.b16 %v536, %v534
        %v557 = vpack.c.b16 %v537, %v535
        %v558 = vpack.c.b16 %v540, %v538
        %v559 = vpack.c.b16 %v541, %v539
        %vm578 = vcmask 130048
        %v580 = vsel %vm578, %v483, 0
        %v583 = vsel %vm578, %v485, 0
        %585 = vmatpush.bf16.msra.mxu0 %v556
        %586 = vmatpush.bf16.msra.mxu0 %v554
        %587 = vmatpush.bf16.msra.mxu0 %v552
        %588 = vmatpush.bf16.msra.mxu0 %v550
        %589 = vmatpush.bf16.msra.mxu0 %v548
        %590 = vmatpush.bf16.msra.mxu0 %v546
        %591 = vmatpush.bf16.msra.mxu0 %v544
        %592 = vmatpush.bf16.msra.mxu0 %v542
        %593 = vmatmul.bf16.gmra.mxu0 %v482
        %v594 = vpop.f32.mrf.mxu0
        %v595 = vadd.f32 %v453, %v594
        %v596 = vpop.f32.mrf.mxu0
        %v597 = vadd.f32 %v458, %v596
        %598 = vmatmul.bf16.gmra.mxu0 %v484
        %v599 = vpop.f32.mrf.mxu0
        %v600 = vadd.f32 %v463, %v599
        %v601 = vpop.f32.mrf.mxu0
        %v602 = vadd.f32 %v468, %v601
        %603 = vdwg.mxu0
        %604 = vmatpush.bf16.msra.mxu0 0
        %605 = vmatpush.bf16.msra.mxu0 0
        %606 = vmatpush.bf16.msra.mxu0 0
        %607 = vmatpush.bf16.msra.mxu0 0
        %608 = vmatpush.bf16.msra.mxu0 0
        %609 = vmatpush.bf16.msra.mxu0 0
        %610 = vmatpush.bf16.msra.mxu0 0
        %611 = vmatpush.bf16.msra.mxu0 %v558
        %612 = vmatmul.bf16.gmra.mxu0 %v580
        %v613 = vpop.f32.mrf.mxu0
        %v614 = vadd.f32 %v595, %v613
        %v615 = vpop.f32.mrf.mxu0
        %v616 = vadd.f32 %v597, %v615
        %617 = vmatmul.bf16.gmra.mxu0 %v583
        %v618 = vpop.f32.mrf.mxu0
        %v619 = vadd.f32 %v600, %v618
        %v620 = vpop.f32.mrf.mxu0
        %v621 = vadd.f32 %v602, %v620
        %622 = vdwg.mxu0
        %623 = vmatpush.bf16.msra.mxu0 %v557
        %624 = vmatpush.bf16.msra.mxu0 %v555
        %625 = vmatpush.bf16.msra.mxu0 %v553
        %626 = vmatpush.bf16.msra.mxu0 %v551
        %627 = vmatpush.bf16.msra.mxu0 %v549
        %628 = vmatpush.bf16.msra.mxu0 %v547
        %629 = vmatpush.bf16.msra.mxu0 %v545
        %630 = vmatpush.bf16.msra.mxu0 %v543
        %631 = vmatmul.bf16.gmra.mxu0 %v482
        %v632 = vpop.f32.mrf.mxu0
        %v633 = vadd.f32 %v453, %v632
        %v634 = vpop.f32.mrf.mxu0
        %v635 = vadd.f32 %v458, %v634
        %636 = vmatmul.bf16.gmra.mxu0 %v484
        %v637 = vpop.f32.mrf.mxu0
        %v638 = vadd.f32 %v463, %v637
        %v639 = vpop.f32.mrf.mxu0
        %v640 = vadd.f32 %v468, %v639
        %641 = vdwg.mxu0
        %642 = vmatpush.bf16.msra.mxu0 0
        %643 = vmatpush.bf16.msra.mxu0 0
        %644 = vmatpush.bf16.msra.mxu0 0
        %645 = vmatpush.bf16.msra.mxu0 0
        %646 = vmatpush.bf16.msra.mxu0 0
        %647 = vmatpush.bf16.msra.mxu0 0
        %648 = vmatpush.bf16.msra.mxu0 0
        %649 = vmatpush.bf16.msra.mxu0 %v559
        %650 = vmatmul.bf16.gmra.mxu0 %v580
        %v651 = vpop.f32.mrf.mxu0
        %v652 = vadd.f32 %v633, %v651
        %v653 = vpop.f32.mrf.mxu0
        %v654 = vadd.f32 %v635, %v653
        %655 = vmatmul.bf16.gmra.mxu0 %v583
        %v656 = vpop.f32.mrf.mxu0
        %v657 = vadd.f32 %v638, %v656
        %v658 = vpop.f32.mrf.mxu0
        %v659 = vadd.f32 %v640, %v658
        %660 = vdwg.mxu0
        %v661 = vld [vmem:[%s390] sm:$0xff]
        %v662 = vld [vmem:[%s390 + $0x8] sm:$0xff]
        %v663 = vld [vmem:[%s390 + $0x10] sm:$0xff]
        %v664 = vld [vmem:[%s390 + $0x18] sm:$0xff]
        %v665 = vld [vmem:[%s390 + $0x20] sm:$0xff]
        %v666 = vld [vmem:[%s390 + $0x28] sm:$0xff]
        %v667 = vld [vmem:[%s390 + $0x30] sm:$0xff]
        %v668 = vld [vmem:[%s390 + $0x38] sm:$0xff]
        %v669 = vld [vmem:[%s390 + $0x40] sm:$0xff]
        %v670 = vld [vmem:[%s390 + $0x48] sm:$0xff]
        %v671 = vld [vmem:[%s390 + $0x50] sm:$0xff]
        %v672 = vld [vmem:[%s390 + $0x58] sm:$0xff]
        %v673 = vld [vmem:[%s390 + $0x60] sm:$0xff]
        %v674 = vld [vmem:[%s390 + $0x68] sm:$0xff]
        %v675 = vld [vmem:[%s390 + $0x70] sm:$0xff]
        %v676 = vld [vmem:[%s390 + $0x78] sm:$0xff]
        %v677 = vld [vmem:[%s390 + $0x80] sm:$0xff]
        %v678 = vld [vmem:[%s390 + $0x88] sm:$0xff]
        %v697 = vunpack.c.l.b16 %v661
        %v698 = vunpack.c.h.b16 %v661
        %v699 = vunpack.c.l.b16 %v662
        %v700 = vunpack.c.h.b16 %v662
        %v701 = vunpack.c.l.b16 %v663
        %v702 = vunpack.c.h.b16 %v663
        %v703 = vunpack.c.l.b16 %v664
        %v704 = vunpack.c.h.b16 %v664
        %v705 = vunpack.c.l.b16 %v665
        %v706 = vunpack.c.h.b16 %v665
        %v707 = vunpack.c.l.b16 %v666
        %v708 = vunpack.c.h.b16 %v666
        %v709 = vunpack.c.l.b16 %v667
        %v710 = vunpack.c.h.b16 %v667
        %v711 = vunpack.c.l.b16 %v668
        %v712 = vunpack.c.h.b16 %v668
        %v713 = vunpack.c.l.b16 %v669
        %v714 = vunpack.c.h.b16 %v669
        %v715 = vunpack.c.l.b16 %v670
        %v716 = vunpack.c.h.b16 %v670
        %v717 = vunpack.c.l.b16 %v671
        %v718 = vunpack.c.h.b16 %v671
        %v719 = vunpack.c.l.b16 %v672
        %v720 = vunpack.c.h.b16 %v672
        %v721 = vunpack.c.l.b16 %v673
        %v722 = vunpack.c.h.b16 %v673
        %v723 = vunpack.c.l.b16 %v674
        %v724 = vunpack.c.h.b16 %v674
        %v725 = vunpack.c.l.b16 %v675
        %v726 = vunpack.c.h.b16 %v675
        %v727 = vunpack.c.l.b16 %v676
        %v728 = vunpack.c.h.b16 %v676
        %v729 = vunpack.c.l.b16 %v677
        %v730 = vunpack.c.h.b16 %v677
        %v731 = vunpack.c.l.b16 %v678
        %v732 = vunpack.c.h.b16 %v678
        %v733 = vpack.c.b16 %v699, %v697
        %v734 = vpack.c.b16 %v700, %v698
        %v735 = vpack.c.b16 %v703, %v701
        %v736 = vpack.c.b16 %v704, %v702
        %v737 = vpack.c.b16 %v707, %v705
        %v738 = vpack.c.b16 %v708, %v706
        %v739 = vpack.c.b16 %v711, %v709
        %v740 = vpack.c.b16 %v712, %v710
        %v741 = vpack.c.b16 %v715, %v713
        %v742 = vpack.c.b16 %v716, %v714
        %v743 = vpack.c.b16 %v719, %v717
        %v744 = vpack.c.b16 %v720, %v718
        %v745 = vpack.c.b16 %v723, %v721
        %v746 = vpack.c.b16 %v724, %v722
        %v747 = vpack.c.b16 %v727, %v725
        %v748 = vpack.c.b16 %v728, %v726
        %v749 = vpack.c.b16 %v731, %v729
        %v750 = vpack.c.b16 %v732, %v730
        %769 = vmatpush.bf16.msra.mxu0 %v747
        %770 = vmatpush.bf16.msra.mxu0 %v745
        %771 = vmatpush.bf16.msra.mxu0 %v743
        %772 = vmatpush.bf16.msra.mxu0 %v741
        %773 = vmatpush.bf16.msra.mxu0 %v739
        %774 = vmatpush.bf16.msra.mxu0 %v737
        %775 = vmatpush.bf16.msra.mxu0 %v735
        %776 = vmatpush.bf16.msra.mxu0 %v733
        %777 = vmatmul.bf16.gmra.mxu0 %v482
        %v778 = vpop.f32.mrf.mxu0
        %v779 = vadd.f32 %v453, %v778
        %v780 = vpop.f32.mrf.mxu0
        %v781 = vadd.f32 %v458, %v780
        %782 = vmatmul.bf16.gmra.mxu0 %v484
        %v783 = vpop.f32.mrf.mxu0
        %v784 = vadd.f32 %v463, %v783
        %v785 = vpop.f32.mrf.mxu0
        %v786 = vadd.f32 %v468, %v785
        %787 = vdwg.mxu0
        %788 = vmatpush.bf16.msra.mxu0 0
        %789 = vmatpush.bf16.msra.mxu0 0
        %790 = vmatpush.bf16.msra.mxu0 0
        %791 = vmatpush.bf16.msra.mxu0 0
        %792 = vmatpush.bf16.msra.mxu0 0
        %793 = vmatpush.bf16.msra.mxu0 0
        %794 = vmatpush.bf16.msra.mxu0 0
        %795 = vmatpush.bf16.msra.mxu0 %v749
        %796 = vmatmul.bf16.gmra.mxu0 %v580
        %v797 = vpop.f32.mrf.mxu0
        %v798 = vadd.f32 %v779, %v797
        %v799 = vpop.f32.mrf.mxu0
        %v800 = vadd.f32 %v781, %v799
        %801 = vmatmul.bf16.gmra.mxu0 %v583
        %v802 = vpop.f32.mrf.mxu0
        %v803 = vadd.f32 %v784, %v802
        %v804 = vpop.f32.mrf.mxu0
        %v805 = vadd.f32 %v786, %v804
        %806 = vdwg.mxu0
        %807 = vmatpush.bf16.msra.mxu0 %v748
        %808 = vmatpush.bf16.msra.mxu0 %v746
        %809 = vmatpush.bf16.msra.mxu0 %v744
        %810 = vmatpush.bf16.msra.mxu0 %v742
        %811 = vmatpush.bf16.msra.mxu0 %v740
        %812 = vmatpush.bf16.msra.mxu0 %v738
        %813 = vmatpush.bf16.msra.mxu0 %v736
        %814 = vmatpush.bf16.msra.mxu0 %v734
        %815 = vmatmul.bf16.gmra.mxu0 %v482
        %v816 = vpop.f32.mrf.mxu0
        %v817 = vadd.f32 %v453, %v816
        %v818 = vpop.f32.mrf.mxu0
        %v819 = vadd.f32 %v458, %v818
        %820 = vmatmul.bf16.gmra.mxu0 %v484
        %v821 = vpop.f32.mrf.mxu0
        %v822 = vadd.f32 %v463, %v821
        %v823 = vpop.f32.mrf.mxu0
        %v824 = vadd.f32 %v468, %v823
        %825 = vdwg.mxu0
        %826 = vmatpush.bf16.msra.mxu0 0
        %827 = vmatpush.bf16.msra.mxu0 0
        %828 = vmatpush.bf16.msra.mxu0 0
        %829 = vmatpush.bf16.msra.mxu0 0
        %830 = vmatpush.bf16.msra.mxu0 0
        %831 = vmatpush.bf16.msra.mxu0 0
        %832 = vmatpush.bf16.msra.mxu0 0
        %833 = vmatpush.bf16.msra.mxu0 %v750
        %834 = vmatmul.bf16.gmra.mxu0 %v580
        %v835 = vpop.f32.mrf.mxu0
        %v836 = vadd.f32 %v817, %v835
        %v837 = vpop.f32.mrf.mxu0
        %v838 = vadd.f32 %v819, %v837
        %839 = vmatmul.bf16.gmra.mxu0 %v583
        %v840 = vpop.f32.mrf.mxu0
        %v841 = vadd.f32 %v822, %v840
        %v842 = vpop.f32.mrf.mxu0
        %v843 = vadd.f32 %v824, %v842
        %844 = vdwg.mxu0
        %v845 = vsub.f32 %v614, %v798
        %v846 = vsub.f32 %v652, %v836
        %v847 = vsub.f32 %v616, %v800
        %v848 = vsub.f32 %v654, %v838
        %v849 = vsub.f32 %v619, %v803
        %v850 = vsub.f32 %v657, %v841
        %v851 = vsub.f32 %v621, %v805
        %v852 = vsub.f32 %v659, %v843
        %v853 = vld [vmem:[#allocation2] sm:$0x3]
        %v854 = vmul.f32 %v845, %v845
        %v855 = vmul.f32 %v846, %v846
        %v856 = vmul.f32 %v847, %v847
        %v857 = vmul.f32 %v848, %v848
        %v858 = vmul.f32 %v849, %v849
        %v859 = vmul.f32 %v850, %v850
        %v860 = vmul.f32 %v851, %v851
        %v861 = vmul.f32 %v852, %v852
        %v862 = vadd.f32 %v854, %v856
        %v863 = vadd.f32 %v862, %v858
        %v864 = vadd.f32 %v863, %v860
        %v865 = vrot.slane %v864, 4
        %v866 = vadd.f32 %v864, %v865
        %v867 = vrot.slane %v866, 2
        %v868 = vadd.f32 %v866, %v867
        %v869 = vrot.slane %v868, 1
        %v870 = vadd.f32 %v868, %v869
        %v871 = vadd.f32 %v855, %v857
        %v872 = vadd.f32 %v871, %v859
        %v873 = vadd.f32 %v872, %v861
        %v874 = vrot.slane %v873, 4
        %v875 = vadd.f32 %v873, %v874
        %v876 = vrot.slane %v875, 2
        %v877 = vadd.f32 %v875, %v876
        %v878 = vrot.slane %v877, 1
        %v879 = vadd.f32 %v877, %v878
        %v882 = vrot.slane %v879, 7
        %vm883 = vcmask 1040384
        %v884 = vsel %vm883, %v870, %v882
        %v886 = vadd.f32 %v853, %v884
        %v887 = vlaneseq
        %vm888 = vcmp.ge.s32.totalorder %v887, 0
        %vm889 = vcmp.lt.s32.totalorder %v887, 256
        %vm890 = vmand %vm888, %vm889
        %891 = vst.msk [vmem:[#allocation2] sm:$0x3] %vm890, %v886
        %p892 = scmp.eq.s32.totalorder %s16, 1
        // Predicated region
        $region117: #{feature_reconstruction_loss.9} parent=103 // pred_check
          %p893 = pneg %p892
        $region118: #{feature_reconstruction_loss.9} parent=103 // pred_check_branch
          %895 = sbr.rel (%p893) target = $region120
        $region119: #{feature_reconstruction_loss.9} parent=103 // pred_region
          %v896 = vld [vmem:[#allocation2] sm:$0x3]
          %v898 = vperm.slane %v896, 0
          %v899 = vperm.slane %v896, 1
          %v902 = vsel %vm883, %v898, 0.0
          %v903 = vsel %vm883, %v899, 0.0
          %v904 = vadd.f32 %v902, %v903
          %905 = vadd.xlane.f32.xlu0 %v904
          %v906 = vpop.xlane.xlu0 %905
          %v907 = vrot.slane %v906, 4
          %v908 = vadd.f32 %v906, %v907
          %v909 = vrot.slane %v908, 2
          %v910 = vadd.f32 %v908, %v909
          %v911 = vrot.slane %v910, 1
          %v912 = vadd.f32 %v910, %v911
          %s913 = vtos %v912
          %s914 = scalar_lea.smem [#allocation5], 0
          %915 = sst [smem:[%s914]] %s913
        $region120: #{feature_reconstruction_loss.9} parent=103 // pred_fallthru
          _
        // Predicated region
        $region121: #{feature_reconstruction_loss.9} parent=103 // pred_check
          %p916 = pneg %p123
        $region122: #{feature_reconstruction_loss.9} parent=103 // pred_check_branch
          %918 = sbr.rel (%p916) target = $region124
        $region123: #{feature_reconstruction_loss.9} parent=103 // pred_region
          %920 = vsyncadd [#allocation6], 0
          %s922 = sshll.u32 %s4, 4
          %s923 = int_to_ptr.hbm [resolvable:$true] %s922
          %925 = dma.smem_to_hbm [#allocation5], 16, %s923, [#allocation6]
        $region124: #{feature_reconstruction_loss.9} parent=103 // pred_fallthru
          _
        // Predicated region
        $region125: #{feature_reconstruction_loss.9} parent=103 // pred_check
          %p926 = pneg %p123
        $region126: #{feature_reconstruction_loss.9} parent=103 // pred_check_branch
          %928 = sbr.rel (%p926) target = $region128
        $region127: #{feature_reconstruction_loss.9} parent=103 // pred_region
          %930 = dma.done [#allocation6], 16
        $region128: #{feature_reconstruction_loss.9} parent=103 // pred_fallthru
          _
        %931 = sfence
      $region104: #{feature_reconstruction_loss.9} parent=5 // pred_fallthru
        _
      %p932 = scmp.le.s32.totalorder 2, %s11
      // Predicated region
      $region129: #{feature_reconstruction_loss.9} parent=5 // pred_check
        %p933 = pneg %p932
      $region130: #{feature_reconstruction_loss.9} parent=5 // pred_check_branch
        %935 = sbr.rel (%p933) target = $region132
      $region131: #{feature_reconstruction_loss.9} parent=5 // pred_region
        %s936 = ssub.s32 %s11, 2
      $region132: #{feature_reconstruction_loss.9} parent=5 // pred_fallthru
        _
    $region6: #{feature_reconstruction_loss.9} parent=1 // loop_footer
      %s15 = sadd.s32 1, %s11
    $region7: #{feature_reconstruction_loss.9} parent=1 // loop_footer_branch
      %10 = sbr.rel target = $region3
    $region8: #{feature_reconstruction_loss.9} parent=1 // loop_exit
      _
    %937 = vsyncpa [#allocation6], 1
    %s938 = scalar_lea.sflag [#allocation6], 1
    %939 = vsyncpa %s938, 1

</llo_original>
